<compile_context>
chip_gen: v5e
topology: v5e:2x2
jax: 0.10.0
libtpu: 0.0.40
codegen_flags: <defaults>
</compile_context>

<pallas_src>
import functools
import math

import jax
import jax.numpy as jnp
from jax import lax
from jax.experimental import pallas as pl
from jax.experimental.pallas import tpu as pltpu

F32 = jnp.float32
BF16 = jnp.bfloat16


def _default_vmem_limit():
    """~75% of physical VMEM (96 MiB on v5e/v6e, 48 MiB on v7x)."""
    try:
        cap = pltpu.get_tpu_info().vmem_capacity_bytes
    except Exception:
        cap = 64 * 1024 * 1024
    return min(int(cap * 3 // 4), 100 * 1024 * 1024)


VMEM_LIMIT_BYTES = _default_vmem_limit()


def _mosaic_params(*sem):
    return pltpu.CompilerParams(dimension_semantics=sem,
                                vmem_limit_bytes=VMEM_LIMIT_BYTES)


def _probe_buffered_one():
    """True if pipeline_mode=pl.Buffered(1) compiles+runs on this jax/libtpu."""
    if not hasattr(pl, "Buffered"):
        return False

    def k(x_ref, o_ref):
        o_ref[...] = x_ref[...]

    try:
        f = pl.pallas_call(
            k,
            out_shape=jax.ShapeDtypeStruct((16, 128), F32),
            grid=(2,),
            in_specs=[pl.BlockSpec((8, 128), lambda i: (0, 0),
                                   pipeline_mode=pl.Buffered(1))],
            out_specs=pl.BlockSpec((8, 128), lambda i: (i, 0)),
        )
        jax.block_until_ready(f(jnp.zeros((8, 128), F32)))
        return True
    except Exception:
        return False


_BUFFERED1_OK = _probe_buffered_one()


def _resident(shape):
    """BlockSpec for a grid-invariant operand (weight / bias / LN param):
    constant index_map, single-buffered when supported (halves its VMEM)."""
    ndim = len(shape)
    index_map = lambda *_: (0,) * ndim
    if _BUFFERED1_OK:
        return pl.BlockSpec(shape, index_map, pipeline_mode=pl.Buffered(1))
    return pl.BlockSpec(shape, index_map)


def _choose_tile_m(M, target=512):
    """Largest multiple-of-8 divisor of M that is <= target, or M itself.

    Small slabs (M <= target) stay a single grid step: the ~0.35 us per-step
    overhead dominates tiny tiles and single-TC chips gain nothing from
    splitting them."""
    if M <= target or M % 8 != 0:
        return M
    for cand in range(target, 7, -1):
        if cand % 8 == 0 and M % cand == 0:
            return cand
    return M


def _choose_tile_i(I, target=512):
    """Column tile for the FFN intermediate dim: multiple of 128 <= target."""
    if I <= target or I % 128 != 0:
        return I
    for cand in range(target, 127, -128):
        if I % cand == 0:
            return cand
    return I


# ----------------------------- kernels --------------------------------------

def _linear_split_kernel(x_ref, w_ref, b_ref, *o_refs, splits):
    """y = x @ W + b, then column-split y across the output refs."""
    x = x_ref[...].astype(BF16)
    y = jnp.dot(x, w_ref[...].astype(BF16),
                preferred_element_type=F32) + b_ref[...].astype(F32)
    off = 0
    for o_ref, n in zip(o_refs, splits):
        o_ref[...] = y[:, off:off + n].astype(o_ref.dtype)
        off += n


def _proj_add_ln_kernel(x_ref, res_ref, w_ref, b_ref, g_ref, bln_ref, o_ref,
                        *, eps):
    """LN( x @ W + b + residual ) — fused output projection + add + LayerNorm."""
    y = jnp.dot(x_ref[...].astype(BF16), w_ref[...].astype(BF16),
                preferred_element_type=F32) + b_ref[...].astype(F32)
    h = y + res_ref[...].astype(F32)
    mu = jnp.mean(h, axis=-1, keepdims=True)
    c = h - mu
    var = jnp.mean(c * c, axis=-1, keepdims=True)
    o_ref[...] = (c * lax.rsqrt(var + eps) * g_ref[...].astype(F32)
                  + bln_ref[...].astype(F32)).astype(o_ref.dtype)


def _ffn_res_ln_kernel(x_ref, w1_ref, b1_ref, w2_ref, b2_ref, g_ref, bln_ref,
                       o_ref, acc_ref, *, eps, act):
    """LN( x + W2 @ act(W1 @ x + b1) + b2 ), streamed over I column tiles.

    Grid axis 1 ("arbitrary") walks the intermediate dimension; the (tm, H)
    f32 accumulator lives in VMEM so the (tm, I) activation never has to be
    materialized in full and the weights are never fully resident."""
    j = pl.program_id(1)

    @pl.when(j == 0)
    def _():
        acc_ref[...] = jnp.zeros_like(acc_ref)

    h = jnp.dot(x_ref[...].astype(BF16), w1_ref[...].astype(BF16),
                preferred_element_type=F32) + b1_ref[...].astype(F32)
    if act == "gelu":   # exact (erf) gelu, matches torch.nn.functional.gelu
        h = 0.5 * h * (1.0 + lax.erf(h * (1.0 / math.sqrt(2.0))))
    else:               # relu (adapter activation_fn)
        h = jnp.maximum(h, 0.0)
    acc_ref[...] += jnp.dot(h.astype(BF16), w2_ref[...].astype(BF16),
                            preferred_element_type=F32)

    @pl.when(j == pl.num_programs(1) - 1)
    def _():
        h2 = acc_ref[...] + b2_ref[...].astype(F32) + x_ref[...].astype(F32)
        mu = jnp.mean(h2, axis=-1, keepdims=True)
        c = h2 - mu
        var = jnp.mean(c * c, axis=-1, keepdims=True)
        o_ref[...] = (c * lax.rsqrt(var + eps) * g_ref[...].astype(F32)
                      + bln_ref[...].astype(F32)).astype(o_ref.dtype)


def _mha_kernel(q_ref, kv_ref, mask_ref, o_ref, *, num_heads, head_dim, scale):
    """Per-(batch, q-tile) multi-head attention.

    q_ref: (1, tq, H)  kv_ref: (1, S, 2H) = [K | V]  mask_ref: (1, 1, S) add.
    Heads are column blocks of the fused projections; per-head outputs are
    concatenated and stored with one lane-dense (tq, H) store (no masked
    sub-128-lane partial stores)."""
    H = num_heads * head_dim
    q = q_ref[0].astype(F32) * scale          # pre-scale the smaller (tq,H) tensor
    kv = kv_ref[0]
    mask = mask_ref[0].astype(F32)            # (1, S) -> broadcasts over rows
    outs = []
    # TODO(synk): for production head counts use lax.fori_loop + pl.ds slices
    # and pack head pairs to fill the 256-wide MXU (head_dim=64 contraction
    # leaves 75% of the systolic array dark on v6e/v7x).
    for h in range(num_heads):
        lo = h * head_dim
        qh = q[:, lo:lo + head_dim].astype(BF16)
        kh = kv[:, lo:lo + head_dim].astype(BF16)
        vh = kv[:, H + lo:H + lo + head_dim].astype(BF16)
        s = lax.dot_general(qh, kh, (((1,), (1,)), ((), ())),
                            preferred_element_type=F32)        # (tq, S)
        s = s + mask
        s = s - jnp.max(s, axis=-1, keepdims=True)
        p = jnp.exp(s)
        p = p * pl.reciprocal(jnp.sum(p, axis=-1, keepdims=True), approx=True)
        outs.append(jnp.dot(p.astype(BF16), vh, preferred_element_type=F32))
    ctx = jnp.concatenate(outs, axis=-1)                       # (tq, H)
    o_ref[0] = ctx.astype(o_ref.dtype)                         # single full-width store


# ----------------------------- wrappers -------------------------------------

def fused_linear(x, w, b, out_splits, out_dtype=BF16):
    """x(M,K) @ w(K,N) + b, result split column-wise into len(out_splits) arrays."""
    M, K = x.shape
    N = w.shape[1]
    assert sum(out_splits) == N
    tm = _choose_tile_m(M)
    kern = functools.partial(_linear_split_kernel, splits=tuple(out_splits))
    out_shape = tuple(jax.ShapeDtypeStruct((M, n), out_dtype) for n in out_splits)
    return pl.pallas_call(
        kern,
        out_shape=out_shape,
        grid=(M // tm,),
        in_specs=[pl.BlockSpec((tm, K), lambda i: (i, 0)),
                  _resident((K, N)),            # weight: resident, single-buffered
                  _resident((1, N))],           # bias
        out_specs=tuple(pl.BlockSpec((tm, n), lambda i: (i, 0))
                        for n in out_splits),
        compiler_params=_mosaic_params("parallel"),
    )(x, w, b.reshape(1, N))


def proj_add_ln(x, res, w, b, gamma, beta, eps, out_dtype=BF16):
    M, K = x.shape
    N = w.shape[1]
    tm = _choose_tile_m(M)
    kern = functools.partial(_proj_add_ln_kernel, eps=eps)
    return pl.pallas_call(
        kern,
        out_shape=jax.ShapeDtypeStruct((M, N), out_dtype),
        grid=(M // tm,),
        in_specs=[pl.BlockSpec((tm, K), lambda i: (i, 0)),
                  pl.BlockSpec((tm, N), lambda i: (i, 0)),
                  _resident((K, N)),
                  _resident((1, N)),
                  _resident((1, N)),
                  _resident((1, N))],
        out_specs=pl.BlockSpec((tm, N), lambda i: (i, 0)),
        compiler_params=_mosaic_params("parallel"),
    )(x, res, w, b.reshape(1, N), gamma.reshape(1, N), beta.reshape(1, N))


def ffn_res_ln(x, w1, b1, w2, b2, gamma, beta, eps, act, out_dtype=BF16):
    M, H = x.shape
    I = w1.shape[1]
    tm = _choose_tile_m(M)
    ti = _choose_tile_i(I)
    kern = functools.partial(_ffn_res_ln_kernel, eps=eps, act=act)
    return pl.pallas_call(
        kern,
        out_shape=jax.ShapeDtypeStruct((M, H), out_dtype),
        grid=(M // tm, I // ti),                 # reduction (I) axis last
        in_specs=[pl.BlockSpec((tm, H), lambda i, j: (i, 0)),
                  pl.BlockSpec((H, ti), lambda i, j: (0, j)),
                  pl.BlockSpec((1, ti), lambda i, j: (0, j)),
                  pl.BlockSpec((ti, H), lambda i, j: (j, 0)),
                  _resident((1, H)),
                  _resident((1, H)),
                  _resident((1, H))],
        out_specs=pl.BlockSpec((tm, H), lambda i, j: (i, 0)),
        scratch_shapes=[pltpu.VMEM((tm, H), F32)],
        compiler_params=_mosaic_params("parallel", "arbitrary"),
    )(x, w1, b1.reshape(1, I), w2, b2.reshape(1, H),
      gamma.reshape(1, H), beta.reshape(1, H))


def attention(q, kv, mask, num_heads, scale, out_dtype=BF16):
    """q: (B,T,H)  kv: (B,S,2H) = [K | V] column blocks  mask: (B,1,S) additive."""
    B, T, H = q.shape
    S = kv.shape[1]
    tq = _choose_tile_m(T)
    kern = functools.partial(_mha_kernel, num_heads=num_heads,
                             head_dim=H // num_heads, scale=scale)
    return pl.pallas_call(
        kern,
        out_shape=jax.ShapeDtypeStruct((B, T, H), out_dtype),
        grid=(B, T // tq),
        in_specs=[pl.BlockSpec((1, tq, H), lambda b, t: (b, t, 0)),
                  pl.BlockSpec((1, S, 2 * H), lambda b, t: (b, 0, 0)),
                  pl.BlockSpec((1, 1, S), lambda b, t: (b, 0, 0))],
        out_specs=pl.BlockSpec((1, tq, H), lambda b, t: (b, t, 0)),
        compiler_params=_mosaic_params("parallel", "parallel"),
    )(q, kv, mask)


# ----------------------------- forward pass ----------------------------------

def bert_adapter_decoder_layer(params, x, encoder_out, encoder_padding_mask,
                               self_attn_padding_mask=None, *, num_heads):
    """Inference forward.

    x: (B, T, H); encoder_out: (S, B, E_enc) (fairseq time-major);
    encoder_padding_mask: (B, S) bool, True = pad;
    self_attn_padding_mask: additive mask broadcastable to (B, 1, 1, T).
    The module's x.transpose(0,1)/transpose-back pair is a pure relabeling for
    these per-token / per-batch ops, so activations stay batch-major here."""
    B, T, H = x.shape
    d = H // num_heads
    scale = 1.0 / math.sqrt(d)
    x2 = x.reshape(B * T, H)

    # --- BertSelfAttention: fused QKV projection, one matmul (bf16 out) ---
    q2, kv2 = fused_linear(x2, params["qkv_w"], params["qkv_b"], (H, 2 * H))
    if self_attn_padding_mask is None:
        self_mask = jnp.zeros((B, 1, T), F32)
    else:
        self_mask = self_attn_padding_mask.reshape(B, 1, T).astype(F32)
    ctx = attention(q2.reshape(B, T, H), kv2.reshape(B, T, 2 * H),
                    self_mask, num_heads, scale)

    # --- BertSelfOutput: dense + residual + LayerNorm (eps 1e-12), fused ---
    x_attn = proj_add_ln(ctx.reshape(B * T, H), x2,
                         params["so_w"], params["so_b"],
                         params["so_ln_g"], params["so_ln_b"], eps=1e-12)

    # --- BertIntermediate(gelu) + BertOutput + residual + LN, fused ---
    x_bert = ffn_res_ln(x_attn, params["int_w"], params["int_b"],
                        params["out_w"], params["out_b"],
                        params["out_ln_g"], params["out_ln_b"],
                        eps=1e-12, act="gelu")

    # --- fairseq cross-attention (post-norm) ---
    residual = x_bert
    S, _, E_enc = encoder_out.shape
    # TODO(synk): fold this (S,B,E)->(B,S,E) relayout into the KV-projection
    #             kernel via a time-major-in / batch-major-out BlockSpec.
    enc_b = encoder_out.transpose(1, 0, 2).reshape(B * S, E_enc)
    q_c = fused_linear(x_bert, params["ca_q_w"], params["ca_q_b"], (H,))[0]
    kv_c = fused_linear(enc_b, params["ca_kv_w"], params["ca_kv_b"], (2 * H,))[0]
    # large finite negative (not -inf) so fully-masked rows stay NaN-free
    cross_mask = jnp.where(encoder_padding_mask, -1e30, 0.0) \
                    .astype(F32).reshape(B, 1, S)
    cctx = attention(q_c.reshape(B, T, H), kv_c.reshape(B, S, 2 * H),
                     cross_mask, num_heads, scale)
    x_cross = proj_add_ln(cctx.reshape(B * T, H), residual,
                          params["ca_o_w"], params["ca_o_b"],
                          params["ca_ln_g"], params["ca_ln_b"], eps=1e-5)

    # --- DecoderAdapter: fc1 (no bias) -> relu -> fc2 (no bias) -> +res -> LN ---
    layer_out = ffn_res_ln(x_cross, params["ad_w1"], params["ad_b1_zero"],
                           params["ad_w2"], params["ad_b2_zero"],
                           params["ad_ln_g"], params["ad_ln_b"],
                           eps=1e-5, act="relu", out_dtype=F32)

    # need_weights = (not training) and need_attn = False  -> attn is None
    return layer_out.reshape(B, T, H), None, None


# ----------------------------- params ----------------------------------------

def init_params(key, H, nH, I, E_enc, A):
    ks = iter(jax.random.split(key, 32))

    def xavier(shape):
        limit = math.sqrt(6.0 / (shape[0] + shape[1]))
        # weights stored bf16 (MXU inputs); accumulation stays f32 in-kernel
        return jax.random.uniform(next(ks), shape, F32, -limit, limit).astype(BF16)

    def bias(n):
        return 0.02 * jax.random.normal(next(ks), (n,), F32)

    ones = lambda n: jnp.ones((n,), F32)
    zeros = lambda n: jnp.zeros((n,), F32)

    p = {}
    # BERT self-attention: fused QKV weight (H, 3H) = [Wq | Wk | Wv]
    p["qkv_w"] = jnp.concatenate([xavier((H, H)), xavier((H, H)), xavier((H, H))], axis=1)
    p["qkv_b"] = jnp.concatenate([bias(H), bias(H), bias(H)])
    # BertSelfOutput
    p["so_w"], p["so_b"] = xavier((H, H)), bias(H)
    p["so_ln_g"], p["so_ln_b"] = ones(H), zeros(H)
    # BertIntermediate / BertOutput
    p["int_w"], p["int_b"] = xavier((H, I)), bias(I)
    p["out_w"], p["out_b"] = xavier((I, H)), bias(H)
    p["out_ln_g"], p["out_ln_b"] = ones(H), zeros(H)
    # fairseq cross-attention (kdim = vdim = encoder_embed_dim); fused KV
    p["ca_q_w"], p["ca_q_b"] = xavier((H, H)), bias(H)
    p["ca_kv_w"] = jnp.concatenate([xavier((E_enc, H)), xavier((E_enc, H))], axis=1)
    p["ca_kv_b"] = jnp.concatenate([bias(H), bias(H)])
    p["ca_o_w"], p["ca_o_b"] = xavier((H, H)), bias(H)
    p["ca_ln_g"], p["ca_ln_b"] = ones(H), zeros(H)
    # adapter (bias=False linears -> zero biases reuse the fused FFN kernel)
    p["ad_w1"], p["ad_w2"] = xavier((H, A)), xavier((A, H))
    p["ad_b1_zero"], p["ad_b2_zero"] = zeros(A), zeros(H)
    p["ad_ln_g"], p["ad_ln_b"] = ones(H), zeros(H)
    return p


# ----------------------------- main -------------------------------------------

if __name__ == "__main__":
    B, T, S = 2, 8, 8           # batch, target len, source len
    H, nH, I = 32, 4, 64        # decoder_embed_dim / hidden, heads, intermediate
    E_enc, A = 32, 16           # encoder_embed_dim, decoder_adapter_dimention

    key = jax.random.PRNGKey(0)
    pkey, xkey, ekey = jax.random.split(key, 3)
    params = init_params(pkey, H, nH, I, E_enc, A)

    x = jax.random.normal(xkey, (B, T, H), F32)                   # (B,T,H)
    encoder_out = jax.random.normal(ekey, (S, B, E_enc), F32)     # (S,B,E)
    lens = jnp.array([S, S - 3])
    encoder_padding_mask = jnp.arange(S)[None, :] >= lens[:, None]  # (B,S) bool
    self_attn_padding_mask = jnp.zeros((B, 1, 1, T), F32)           # additive

    fwd = jax.jit(bert_adapter_decoder_layer, static_argnames=("num_heads",))
    out, attn, _ = fwd(params, x, encoder_out, encoder_padding_mask,
                       self_attn_padding_mask, num_heads=nH)
    jax.block_until_ready(out)
    assert out.shape == (B, T, H) and attn is None
    assert bool(jnp.all(jnp.isfinite(out)))
    print("KERNEL_OK")
</pallas_src>

<mosaic_0001>
module attributes {stable_mosaic.version = 11 : i64} {
  func.func @k(%arg0: i32, %arg1: memref<8x128xf32, #tpu.memory_space<vmem>>, %arg2: memref<8x128xf32, #tpu.memory_space<vmem>>) attributes {dimension_semantics = [#tpu.dimension_semantics<arbitrary>], iteration_bounds = array<i64: 2>, scalar_prefetch = 0 : i64, scratch_operands = 0 : i64, tpu.core_type = #tpu.core_type<tc>, window_params = [{pipeline_mode = #tpu.pipeline_mode<synchronous>, transform_indices = @transform_0, window_bounds = array<i64: 8, 128>}, {transform_indices = @transform_1, window_bounds = array<i64: 8, 128>}]} {
    %c0 = arith.constant 0 : index
    %c0_0 = arith.constant 0 : index
    %0 = vector.load %arg1[%c0, %c0_0] : memref<8x128xf32, #tpu.memory_space<vmem>>, vector<8x128xf32>
    %c0_1 = arith.constant 0 : index
    %c0_2 = arith.constant 0 : index
    %1 = vector.load %arg2[%c0_1, %c0_2] : memref<8x128xf32, #tpu.memory_space<vmem>>, vector<8x128xf32>
    tpu.vector_store %arg2[%c0_1, %c0_2], %0 {strides = array<i32>} : memref<8x128xf32, #tpu.memory_space<vmem>>, vector<8x128xf32>,
    return
  }
  func.func @transform_0(%arg0: i32) -> (i32, i32) {
    %c0_i32 = arith.constant 0 : i32
    %c0_i32_0 = arith.constant 0 : i32
    %c0_i32_1 = arith.constant 0 : i32
    return %c0_i32, %c0_i32_0 : i32, i32
  }
  func.func @transform_1(%arg0: i32) -> (i32, i32) {
    %c0_i32 = arith.constant 0 : i32
    %c0_i32_0 = arith.constant 0 : i32
    return %arg0, %c0_i32 : i32, i32
  }
}

module attributes {stable_mosaic.version = 11 : i64} {
  func.func @_linear_split_kernel(%arg0: i32, %arg1: memref<16x32xf32, #tpu.memory_space<vmem>>, %arg2: memref<32x96xbf16, #tpu.memory_space<vmem>>, %arg3: memref<1x96xf32, #tpu.memory_space<vmem>>, %arg4: memref<16x32xbf16, #tpu.memory_space<vmem>>, %arg5: memref<16x64xbf16, #tpu.memory_space<vmem>>) attributes {dimension_semantics = [#tpu.dimension_semantics<parallel>], iteration_bounds = array<i64: 1>, scalar_prefetch = 0 : i64, scratch_operands = 0 : i64, tpu.core_type = #tpu.core_type<tc>, window_params = [{transform_indices = @transform_0, window_bounds = array<i64: 16, 32>}, {pipeline_mode = #tpu.pipeline_mode<synchronous>, transform_indices = @transform_1, window_bounds = array<i64: 32, 96>}, {pipeline_mode = #tpu.pipeline_mode<synchronous>, transform_indices = @transform_2, window_bounds = array<i64: 1, 96>}, {transform_indices = @transform_3, window_bounds = array<i64: 16, 32>}, {transform_indices = @transform_4, window_bounds = array<i64: 16, 64>}]} {
    %c0 = arith.constant 0 : index
    %c0_0 = arith.constant 0 : index
    %0 = vector.load %arg1[%c0, %c0_0] : memref<16x32xf32, #tpu.memory_space<vmem>>, vector<16x32xf32>
    %1 = arith.truncf %0 : vector<16x32xf32> to vector<16x32xbf16>
    %c0_1 = arith.constant 0 : index
    %c0_2 = arith.constant 0 : index
    %2 = vector.load %arg2[%c0_1, %c0_2] : memref<32x96xbf16, #tpu.memory_space<vmem>>, vector<32x96xbf16>
    %cst = arith.constant dense<0.000000e+00> : vector<16x96xf32>
    %3 = tpu.matmul %1, %2, %cst {dimension_numbers = #tpu.dot_dimension_numbers<[1], [0], [0], [1], [0, 0, 1, 1], [], []>} : vector<16x32xbf16>, vector<32x96xbf16>, vector<16x96xf32> -> vector<16x96xf32>
    %c0_3 = arith.constant 0 : index
    %c0_4 = arith.constant 0 : index
    %4 = vector.load %arg3[%c0_3, %c0_4] : memref<1x96xf32, #tpu.memory_space<vmem>>, vector<1x96xf32>
    %5 = vector.broadcast %4 : vector<1x96xf32> to vector<16x96xf32>
    %6 = arith.addf %3, %5 : vector<16x96xf32>
    %7 = vector.extract_strided_slice %6 {offsets = [0, 0], sizes = [16, 32], strides = [1, 1]} : vector<16x96xf32> to vector<16x32xf32>
    %8 = arith.truncf %7 : vector<16x32xf32> to vector<16x32xbf16>
    %c0_5 = arith.constant 0 : index
    %c0_6 = arith.constant 0 : index
    %9 = vector.load %arg4[%c0_5, %c0_6] : memref<16x32xbf16, #tpu.memory_space<vmem>>, vector<16x32xbf16>
    tpu.vector_store %arg4[%c0_5, %c0_6], %8 {strides = array<i32>} : memref<16x32xbf16, #tpu.memory_space<vmem>>, vector<16x32xbf16>,
    %10 = vector.extract_strided_slice %6 {offsets = [0, 32], sizes = [16, 64], strides = [1, 1]} : vector<16x96xf32> to vector<16x64xf32>
    %11 = arith.truncf %10 : vector<16x64xf32> to vector<16x64xbf16>
    %c0_7 = arith.constant 0 : index
    %c0_8 = arith.constant 0 : index
    %12 = vector.load %arg5[%c0_7, %c0_8] : memref<16x64xbf16, #tpu.memory_space<vmem>>, vector<16x64xbf16>
    tpu.vector_store %arg5[%c0_7, %c0_8], %11 {strides = array<i32>} : memref<16x64xbf16, #tpu.memory_space<vmem>>, vector<16x64xbf16>,
    return
  }
  func.func @transform_0(%arg0: i32) -> (i32, i32) {
    %c0_i32 = arith.constant 0 : i32
    %c0_i32_0 = arith.constant 0 : i32
    return %arg0, %c0_i32 : i32, i32
  }
  func.func @transform_1(%arg0: i32) -> (i32, i32) {
    %c0_i32 = arith.constant 0 : i32
    %c0_i32_0 = arith.constant 0 : i32
    %c0_i32_1 = arith.constant 0 : i32
    return %c0_i32, %c0_i32_0 : i32, i32
  }
  func.func @transform_2(%arg0: i32) -> (i32, i32) {
    %c0_i32 = arith.constant 0 : i32
    %c0_i32_0 = arith.constant 0 : i32
    %c0_i32_1 = arith.constant 0 : i32
    return %c0_i32, %c0_i32_0 : i32, i32
  }
  func.func @transform_3(%arg0: i32) -> (i32, i32) {
    %c0_i32 = arith.constant 0 : i32
    %c0_i32_0 = arith.constant 0 : i32
    return %arg0, %c0_i32 : i32, i32
  }
  func.func @transform_4(%arg0: i32) -> (i32, i32) {
    %c0_i32 = arith.constant 0 : i32
    %c0_i32_0 = arith.constant 0 : i32
    return %arg0, %c0_i32 : i32, i32
  }
}

module attributes {stable_mosaic.version = 11 : i64} {
  func.func @_proj_add_ln_kernel(%arg0: i32, %arg1: memref<16x32xbf16, #tpu.memory_space<vmem>>, %arg2: memref<16x32xf32, #tpu.memory_space<vmem>>, %arg3: memref<32x32xbf16, #tpu.memory_space<vmem>>, %arg4: memref<1x32xf32, #tpu.memory_space<vmem>>, %arg5: memref<1x32xf32, #tpu.memory_space<vmem>>, %arg6: memref<1x32xf32, #tpu.memory_space<vmem>>, %arg7: memref<16x32xbf16, #tpu.memory_space<vmem>>) attributes {dimension_semantics = [#tpu.dimension_semantics<parallel>], iteration_bounds = array<i64: 1>, scalar_prefetch = 0 : i64, scratch_operands = 0 : i64, tpu.core_type = #tpu.core_type<tc>, window_params = [{transform_indices = @transform_0, window_bounds = array<i64: 16, 32>}, {transform_indices = @transform_1, window_bounds = array<i64: 16, 32>}, {pipeline_mode = #tpu.pipeline_mode<synchronous>, transform_indices = @transform_2, window_bounds = array<i64: 32, 32>}, {pipeline_mode = #tpu.pipeline_mode<synchronous>, transform_indices = @transform_3, window_bounds = array<i64: 1, 32>}, {pipeline_mode = #tpu.pipeline_mode<synchronous>, transform_indices = @transform_4, window_bounds = array<i64: 1, 32>}, {pipeline_mode = #tpu.pipeline_mode<synchronous>, transform_indices = @transform_5, window_bounds = array<i64: 1, 32>}, {transform_indices = @transform_6, window_bounds = array<i64: 16, 32>}]} {
    %c0 = arith.constant 0 : index
    %c0_0 = arith.constant 0 : index
    %0 = vector.load %arg1[%c0, %c0_0] : memref<16x32xbf16, #tpu.memory_space<vmem>>, vector<16x32xbf16>
    %c0_1 = arith.constant 0 : index
    %c0_2 = arith.constant 0 : index
    %1 = vector.load %arg3[%c0_1, %c0_2] : memref<32x32xbf16, #tpu.memory_space<vmem>>, vector<32x32xbf16>
    %cst = arith.constant dense<0.000000e+00> : vector<16x32xf32>
    %2 = tpu.matmul %0, %1, %cst {dimension_numbers = #tpu.dot_dimension_numbers<[1], [0], [0], [1], [0, 0, 1, 1], [], []>} : vector<16x32xbf16>, vector<32x32xbf16>, vector<16x32xf32> -> vector<16x32xf32>
    %c0_3 = arith.constant 0 : index
    %c0_4 = arith.constant 0 : index
    %3 = vector.load %arg4[%c0_3, %c0_4] : memref<1x32xf32, #tpu.memory_space<vmem>>, vector<1x32xf32>
    %4 = vector.broadcast %3 : vector<1x32xf32> to vector<16x32xf32>
    %5 = arith.addf %2, %4 : vector<16x32xf32>
    %c0_5 = arith.constant 0 : index
    %c0_6 = arith.constant 0 : index
    %6 = vector.load %arg2[%c0_5, %c0_6] : memref<16x32xf32, #tpu.memory_space<vmem>>, vector<16x32xf32>
    %7 = arith.addf %5, %6 : vector<16x32xf32>
    %cst_7 = arith.constant dense<0.000000e+00> : vector<16xf32>
    %8 = vector.multi_reduction <add>, %7, %cst_7 [1] : vector<16x32xf32> to vector<16xf32>
    %9 = vector.shape_cast %8 : vector<16xf32> to vector<16x1xf32>
    %cst_8 = arith.constant 3.200000e+01 : f32
    %10 = vector.broadcast %cst_8 : f32 to vector<16x1xf32>
    %11 = arith.divf %9, %10 : vector<16x1xf32>
    %12 = vector.broadcast %11 : vector<16x1xf32> to vector<16x32xf32>
    %13 = arith.subf %7, %12 : vector<16x32xf32>
    %14 = arith.mulf %13, %13 : vector<16x32xf32>
    %cst_9 = arith.constant dense<0.000000e+00> : vector<16xf32>
    %15 = vector.multi_reduction <add>, %14, %cst_9 [1] : vector<16x32xf32> to vector<16xf32>
    %16 = vector.shape_cast %15 : vector<16xf32> to vector<16x1xf32>
    %cst_10 = arith.constant 3.200000e+01 : f32
    %17 = vector.broadcast %cst_10 : f32 to vector<16x1xf32>
    %18 = arith.divf %16, %17 : vector<16x1xf32>
    %cst_11 = arith.constant 9.99999996E-13 : f32
    %19 = vector.broadcast %cst_11 : f32 to vector<16x1xf32>
    %20 = arith.addf %18, %19 : vector<16x1xf32>
    %21 = math.rsqrt %20 : vector<16x1xf32>
    %22 = vector.broadcast %21 : vector<16x1xf32> to vector<16x32xf32>
    %23 = arith.mulf %13, %22 : vector<16x32xf32>
    %c0_12 = arith.constant 0 : index
    %c0_13 = arith.constant 0 : index
    %24 = vector.load %arg5[%c0_12, %c0_13] : memref<1x32xf32, #tpu.memory_space<vmem>>, vector<1x32xf32>
    %25 = vector.broadcast %24 : vector<1x32xf32> to vector<16x32xf32>
    %26 = arith.mulf %23, %25 : vector<16x32xf32>
    %c0_14 = arith.constant 0 : index
    %c0_15 = arith.constant 0 : index
    %27 = vector.load %arg6[%c0_14, %c0_15] : memref<1x32xf32, #tpu.memory_space<vmem>>, vector<1x32xf32>
    %28 = vector.broadcast %27 : vector<1x32xf32> to vector<16x32xf32>
    %29 = arith.addf %26, %28 : vector<16x32xf32>
    %30 = arith.truncf %29 : vector<16x32xf32> to vector<16x32xbf16>
    %c0_16 = arith.constant 0 : index
    %c0_17 = arith.constant 0 : index
    %31 = vector.load %arg7[%c0_16, %c0_17] : memref<16x32xbf16, #tpu.memory_space<vmem>>, vector<16x32xbf16>
    tpu.vector_store %arg7[%c0_16, %c0_17], %30 {strides = array<i32>} : memref<16x32xbf16, #tpu.memory_space<vmem>>, vector<16x32xbf16>,
    return
  }
  func.func @transform_0(%arg0: i32) -> (i32, i32) {
    %c0_i32 = arith.constant 0 : i32
    %c0_i32_0 = arith.constant 0 : i32
    return %arg0, %c0_i32 : i32, i32
  }
  func.func @transform_1(%arg0: i32) -> (i32, i32) {
    %c0_i32 = arith.constant 0 : i32
    %c0_i32_0 = arith.constant 0 : i32
    return %arg0, %c0_i32 : i32, i32
  }
  func.func @transform_2(%arg0: i32) -> (i32, i32) {
    %c0_i32 = arith.constant 0 : i32
    %c0_i32_0 = arith.constant 0 : i32
    %c0_i32_1 = arith.constant 0 : i32
    return %c0_i32, %c0_i32_0 : i32, i32
  }
  func.func @transform_3(%arg0: i32) -> (i32, i32) {
    %c0_i32 = arith.constant 0 : i32
    %c0_i32_0 = arith.constant 0 : i32
    %c0_i32_1 = arith.constant 0 : i32
    return %c0_i32, %c0_i32_0 : i32, i32
  }
  func.func @transform_4(%arg0: i32) -> (i32, i32) {
    %c0_i32 = arith.constant 0 : i32
    %c0_i32_0 = arith.constant 0 : i32
    %c0_i32_1 = arith.constant 0 : i32
    return %c0_i32, %c0_i32_0 : i32, i32
  }
  func.func @transform_5(%arg0: i32) -> (i32, i32) {
    %c0_i32 = arith.constant 0 : i32
    %c0_i32_0 = arith.constant 0 : i32
    %c0_i32_1 = arith.constant 0 : i32
    return %c0_i32, %c0_i32_0 : i32, i32
  }
  func.func @transform_6(%arg0: i32) -> (i32, i32) {
    %c0_i32 = arith.constant 0 : i32
    %c0_i32_0 = arith.constant 0 : i32
    return %arg0, %c0_i32 : i32, i32
  }
}

module attributes {stable_mosaic.version = 11 : i64} {
  func.func @_mha_kernel(%arg0: i32, %arg1: i32, %arg2: memref<1x8x32xbf16, #tpu.memory_space<vmem>>, %arg3: memref<1x8x64xbf16, #tpu.memory_space<vmem>>, %arg4: memref<1x1x8xf32, #tpu.memory_space<vmem>>, %arg5: memref<1x8x32xbf16, #tpu.memory_space<vmem>>) attributes {dimension_semantics = [#tpu.dimension_semantics<parallel>, #tpu.dimension_semantics<parallel>], iteration_bounds = array<i64: 2, 1>, scalar_prefetch = 0 : i64, scratch_operands = 0 : i64, tpu.core_type = #tpu.core_type<tc>, window_params = [{transform_indices = @transform_0, window_bounds = array<i64: 1, 8, 32>}, {transform_indices = @transform_1, window_bounds = array<i64: 1, 8, 64>}, {transform_indices = @transform_2, window_bounds = array<i64: 1, 1, 8>}, {transform_indices = @transform_3, window_bounds = array<i64: 1, 8, 32>}]} {
    %c0 = arith.constant 0 : index
    %c0_0 = arith.constant 0 : index
    %c0_1 = arith.constant 0 : index
    %0 = vector.load %arg2[%c0, %c0_0, %c0_1] : memref<1x8x32xbf16, #tpu.memory_space<vmem>>, vector<1x8x32xbf16>
    %1 = vector.shape_cast %0 : vector<1x8x32xbf16> to vector<8x32xbf16>
    %2 = arith.extf %1 : vector<8x32xbf16> to vector<8x32xf32>
    %cst = arith.constant 0.353553385 : f32
    %3 = vector.broadcast %cst : f32 to vector<8x32xf32>
    %4 = arith.mulf %2, %3 : vector<8x32xf32>
    %c0_2 = arith.constant 0 : index
    %c0_3 = arith.constant 0 : index
    %c0_4 = arith.constant 0 : index
    %5 = vector.load %arg3[%c0_2, %c0_3, %c0_4] : memref<1x8x64xbf16, #tpu.memory_space<vmem>>, vector<1x8x64xbf16>
    %6 = vector.shape_cast %5 : vector<1x8x64xbf16> to vector<8x64xbf16>
    %c0_5 = arith.constant 0 : index
    %c0_6 = arith.constant 0 : index
    %c0_7 = arith.constant 0 : index
    %7 = vector.load %arg4[%c0_5, %c0_6, %c0_7] : memref<1x1x8xf32, #tpu.memory_space<vmem>>, vector<1x1x8xf32>
    %8 = vector.shape_cast %7 : vector<1x1x8xf32> to vector<1x8xf32>
    %9 = vector.extract_strided_slice %4 {offsets = [0, 0], sizes = [8, 8], strides = [1, 1]} : vector<8x32xf32> to vector<8x8xf32>
    %10 = arith.truncf %9 : vector<8x8xf32> to vector<8x8xbf16>
    %11 = vector.extract_strided_slice %6 {offsets = [0, 0], sizes = [8, 8], strides = [1, 1]} : vector<8x64xbf16> to vector<8x8xbf16>
    %12 = vector.extract_strided_slice %6 {offsets = [0, 32], sizes = [8, 8], strides = [1, 1]} : vector<8x64xbf16> to vector<8x8xbf16>
    %cst_8 = arith.constant dense<0.000000e+00> : vector<8x8xf32>
    %13 = tpu.matmul %10, %11, %cst_8 {dimension_numbers = #tpu.dot_dimension_numbers<[1], [1], [0], [0], [0, 0, 1, 0], [], []>} : vector<8x8xbf16>, vector<8x8xbf16>, vector<8x8xf32> -> vector<8x8xf32>
    %14 = vector.broadcast %8 : vector<1x8xf32> to vector<8x8xf32>
    %15 = arith.addf %13, %14 : vector<8x8xf32>
    %cst_9 = arith.constant dense<0xFF800000> : vector<8xf32>
    %16 = vector.multi_reduction <maximumf>, %15, %cst_9 [1] : vector<8x8xf32> to vector<8xf32>
    %17 = vector.shape_cast %16 : vector<8xf32> to vector<8x1xf32>
    %18 = vector.broadcast %17 : vector<8x1xf32> to vector<8x8xf32>
    %19 = arith.subf %15, %18 : vector<8x8xf32>
    %20 = math.exp %19 : vector<8x8xf32>
    %cst_10 = arith.constant dense<0.000000e+00> : vector<8xf32>
    %21 = vector.multi_reduction <add>, %20, %cst_10 [1] : vector<8x8xf32> to vector<8xf32>
    %22 = vector.shape_cast %21 : vector<8xf32> to vector<8x1xf32>
    %23 = tpu.reciprocal %22 {approx = true} : vector<8x1xf32> -> vector<8x1xf32>
    %24 = vector.broadcast %23 : vector<8x1xf32> to vector<8x8xf32>
    %25 = arith.mulf %20, %24 : vector<8x8xf32>
    %26 = arith.truncf %25 : vector<8x8xf32> to vector<8x8xbf16>
    %cst_11 = arith.constant dense<0.000000e+00> : vector<8x8xf32>
    %27 = tpu.matmul %26, %12, %cst_11 {dimension_numbers = #tpu.dot_dimension_numbers<[1], [0], [0], [1], [0, 0, 1, 1], [], []>} : vector<8x8xbf16>, vector<8x8xbf16>, vector<8x8xf32> -> vector<8x8xf32>
    %28 = vector.extract_strided_slice %4 {offsets = [0, 8], sizes = [8, 8], strides = [1, 1]} : vector<8x32xf32> to vector<8x8xf32>
    %29 = arith.truncf %28 : vector<8x8xf32> to vector<8x8xbf16>
    %30 = vector.extract_strided_slice %6 {offsets = [0, 8], sizes = [8, 8], strides = [1, 1]} : vector<8x64xbf16> to vector<8x8xbf16>
    %31 = vector.extract_strided_slice %6 {offsets = [0, 40], sizes = [8, 8], strides = [1, 1]} : vector<8x64xbf16> to vector<8x8xbf16>
    %cst_12 = arith.constant dense<0.000000e+00> : vector<8x8xf32>
    %32 = tpu.matmul %29, %30, %cst_12 {dimension_numbers = #tpu.dot_dimension_numbers<[1], [1], [0], [0], [0, 0, 1, 0], [], []>} : vector<8x8xbf16>, vector<8x8xbf16>, vector<8x8xf32> -> vector<8x8xf32>
    %33 = vector.broadcast %8 : vector<1x8xf32> to vector<8x8xf32>
    %34 = arith.addf %32, %33 : vector<8x8xf32>
    %cst_13 = arith.constant dense<0xFF800000> : vector<8xf32>
    %35 = vector.multi_reduction <maximumf>, %34, %cst_13 [1] : vector<8x8xf32> to vector<8xf32>
    %36 = vector.shape_cast %35 : vector<8xf32> to vector<8x1xf32>
    %37 = vector.broadcast %36 : vector<8x1xf32> to vector<8x8xf32>
    %38 = arith.subf %34, %37 : vector<8x8xf32>
    %39 = math.exp %38 : vector<8x8xf32>
    %cst_14 = arith.constant dense<0.000000e+00> : vector<8xf32>
    %40 = vector.multi_reduction <add>, %39, %cst_14 [1] : vector<8x8xf32> to vector<8xf32>
    %41 = vector.shape_cast %40 : vector<8xf32> to vector<8x1xf32>
    %42 = tpu.reciprocal %41 {approx = true} : vector<8x1xf32> -> vector<8x1xf32>
    %43 = vector.broadcast %42 : vector<8x1xf32> to vector<8x8xf32>
    %44 = arith.mulf %39, %43 : vector<8x8xf32>
    %45 = arith.truncf %44 : vector<8x8xf32> to vector<8x8xbf16>
    %cst_15 = arith.constant dense<0.000000e+00> : vector<8x8xf32>
    %46 = tpu.matmul %45, %31, %cst_15 {dimension_numbers = #tpu.dot_dimension_numbers<[1], [0], [0], [1], [0, 0, 1, 1], [], []>} : vector<8x8xbf16>, vector<8x8xbf16>, vector<8x8xf32> -> vector<8x8xf32>
    %47 = vector.extract_strided_slice %4 {offsets = [0, 16], sizes = [8, 8], strides = [1, 1]} : vector<8x32xf32> to vector<8x8xf32>
    %48 = arith.truncf %47 : vector<8x8xf32> to vector<8x8xbf16>
    %49 = vector.extract_strided_slice %6 {offsets = [0, 16], sizes = [8, 8], strides = [1, 1]} : vector<8x64xbf16> to vector<8x8xbf16>
    %50 = vector.extract_strided_slice %6 {offsets = [0, 48], sizes = [8, 8], strides = [1, 1]} : vector<8x64xbf16> to vector<8x8xbf16>
    %cst_16 = arith.constant dense<0.000000e+00> : vector<8x8xf32>
    %51 = tpu.matmul %48, %49, %cst_16 {dimension_numbers = #tpu.dot_dimension_numbers<[1], [1], [0], [0], [0, 0, 1, 0], [], []>} : vector<8x8xbf16>, vector<8x8xbf16>, vector<8x8xf32> -> vector<8x8xf32>
    %52 = vector.broadcast %8 : vector<1x8xf32> to vector<8x8xf32>
    %53 = arith.addf %51, %52 : vector<8x8xf32>
    %cst_17 = arith.constant dense<0xFF800000> : vector<8xf32>
    %54 = vector.multi_reduction <maximumf>, %53, %cst_17 [1] : vector<8x8xf32> to vector<8xf32>
    %55 = vector.shape_cast %54 : vector<8xf32> to vector<8x1xf32>
    %56 = vector.broadcast %55 : vector<8x1xf32> to vector<8x8xf32>
    %57 = arith.subf %53, %56 : vector<8x8xf32>
    %58 = math.exp %57 : vector<8x8xf32>
    %cst_18 = arith.constant dense<0.000000e+00> : vector<8xf32>
    %59 = vector.multi_reduction <add>, %58, %cst_18 [1] : vector<8x8xf32> to vector<8xf32>
    %60 = vector.shape_cast %59 : vector<8xf32> to vector<8x1xf32>
    %61 = tpu.reciprocal %60 {approx = true} : vector<8x1xf32> -> vector<8x1xf32>
    %62 = vector.broadcast %61 : vector<8x1xf32> to vector<8x8xf32>
    %63 = arith.mulf %58, %62 : vector<8x8xf32>
    %64 = arith.truncf %63 : vector<8x8xf32> to vector<8x8xbf16>
    %cst_19 = arith.constant dense<0.000000e+00> : vector<8x8xf32>
    %65 = tpu.matmul %64, %50, %cst_19 {dimension_numbers = #tpu.dot_dimension_numbers<[1], [0], [0], [1], [0, 0, 1, 1], [], []>} : vector<8x8xbf16>, vector<8x8xbf16>, vector<8x8xf32> -> vector<8x8xf32>
    %66 = vector.extract_strided_slice %4 {offsets = [0, 24], sizes = [8, 8], strides = [1, 1]} : vector<8x32xf32> to vector<8x8xf32>
    %67 = arith.truncf %66 : vector<8x8xf32> to vector<8x8xbf16>
    %68 = vector.extract_strided_slice %6 {offsets = [0, 24], sizes = [8, 8], strides = [1, 1]} : vector<8x64xbf16> to vector<8x8xbf16>
    %69 = vector.extract_strided_slice %6 {offsets = [0, 56], sizes = [8, 8], strides = [1, 1]} : vector<8x64xbf16> to vector<8x8xbf16>
    %cst_20 = arith.constant dense<0.000000e+00> : vector<8x8xf32>
    %70 = tpu.matmul %67, %68, %cst_20 {dimension_numbers = #tpu.dot_dimension_numbers<[1], [1], [0], [0], [0, 0, 1, 0], [], []>} : vector<8x8xbf16>, vector<8x8xbf16>, vector<8x8xf32> -> vector<8x8xf32>
    %71 = vector.broadcast %8 : vector<1x8xf32> to vector<8x8xf32>
    %72 = arith.addf %70, %71 : vector<8x8xf32>
    %cst_21 = arith.constant dense<0xFF800000> : vector<8xf32>
    %73 = vector.multi_reduction <maximumf>, %72, %cst_21 [1] : vector<8x8xf32> to vector<8xf32>
    %74 = vector.shape_cast %73 : vector<8xf32> to vector<8x1xf32>
    %75 = vector.broadcast %74 : vector<8x1xf32> to vector<8x8xf32>
    %76 = arith.subf %72, %75 : vector<8x8xf32>
    %77 = math.exp %76 : vector<8x8xf32>
    %cst_22 = arith.constant dense<0.000000e+00> : vector<8xf32>
    %78 = vector.multi_reduction <add>, %77, %cst_22 [1] : vector<8x8xf32> to vector<8xf32>
    %79 = vector.shape_cast %78 : vector<8xf32> to vector<8x1xf32>
    %80 = tpu.reciprocal %79 {approx = true} : vector<8x1xf32> -> vector<8x1xf32>
    %81 = vector.broadcast %80 : vector<8x1xf32> to vector<8x8xf32>
    %82 = arith.mulf %77, %81 : vector<8x8xf32>
    %83 = arith.truncf %82 : vector<8x8xf32> to vector<8x8xbf16>
    %cst_23 = arith.constant dense<0.000000e+00> : vector<8x8xf32>
    %84 = tpu.matmul %83, %69, %cst_23 {dimension_numbers = #tpu.dot_dimension_numbers<[1], [0], [0], [1], [0, 0, 1, 1], [], []>} : vector<8x8xbf16>, vector<8x8xbf16>, vector<8x8xf32> -> vector<8x8xf32>
    %85 = tpu.concatenate %27, %46, %65, %84 in 1 : vector<8x8xf32>, vector<8x8xf32>, vector<8x8xf32>, vector<8x8xf32> -> vector<8x32xf32>
    %86 = arith.truncf %85 : vector<8x32xf32> to vector<8x32xbf16>
    %c0_24 = arith.constant 0 : index
    %c0_25 = arith.constant 0 : index
    %c0_26 = arith.constant 0 : index
    %87 = vector.load %arg5[%c0_24, %c0_25, %c0_26] : memref<1x8x32xbf16, #tpu.memory_space<vmem>>, vector<1x8x32xbf16>
    %88 = vector.shape_cast %87 : vector<1x8x32xbf16> to vector<8x32xbf16>
    %89 = vector.shape_cast %86 : vector<8x32xbf16> to vector<1x8x32xbf16>
    tpu.vector_store %arg5[%c0_24, %c0_25, %c0_26], %89 {strides = array<i32>} : memref<1x8x32xbf16, #tpu.memory_space<vmem>>, vector<1x8x32xbf16>,
    return
  }
  func.func @transform_0(%arg0: i32, %arg1: i32) -> (i32, i32, i32) {
    %c0_i32 = arith.constant 0 : i32
    %c0_i32_0 = arith.constant 0 : i32
    return %arg0, %arg1, %c0_i32 : i32, i32, i32
  }
  func.func @transform_1(%arg0: i32, %arg1: i32) -> (i32, i32, i32) {
    %c0_i32 = arith.constant 0 : i32
    %c0_i32_0 = arith.constant 0 : i32
    %c0_i32_1 = arith.constant 0 : i32
    return %arg0, %c0_i32, %c0_i32_0 : i32, i32, i32
  }
  func.func @transform_2(%arg0: i32, %arg1: i32) -> (i32, i32, i32) {
    %c0_i32 = arith.constant 0 : i32
    %c0_i32_0 = arith.constant 0 : i32
    %c0_i32_1 = arith.constant 0 : i32
    return %arg0, %c0_i32, %c0_i32_0 : i32, i32, i32
  }
  func.func @transform_3(%arg0: i32, %arg1: i32) -> (i32, i32, i32) {
    %c0_i32 = arith.constant 0 : i32
    %c0_i32_0 = arith.constant 0 : i32
    return %arg0, %arg1, %c0_i32 : i32, i32, i32
  }
}

module attributes {stable_mosaic.version = 11 : i64} {
  func.func @_ffn_res_ln_kernel(%arg0: i32, %arg1: i32, %arg2: memref<16x32xbf16, #tpu.memory_space<vmem>>, %arg3: memref<32x64xbf16, #tpu.memory_space<vmem>>, %arg4: memref<1x64xf32, #tpu.memory_space<vmem>>, %arg5: memref<64x32xbf16, #tpu.memory_space<vmem>>, %arg6: memref<1x32xf32, #tpu.memory_space<vmem>>, %arg7: memref<1x32xf32, #tpu.memory_space<vmem>>, %arg8: memref<1x32xf32, #tpu.memory_space<vmem>>, %arg9: memref<16x32xbf16, #tpu.memory_space<vmem>>, %arg10: memref<16x32xf32, #tpu.memory_space<vmem>>) attributes {dimension_semantics = [#tpu.dimension_semantics<parallel>, #tpu.dimension_semantics<arbitrary>], iteration_bounds = array<i64: 1, 1>, scalar_prefetch = 0 : i64, scratch_operands = 1 : i64, tpu.core_type = #tpu.core_type<tc>, window_params = [{transform_indices = @transform_0, window_bounds = array<i64: 16, 32>}, {transform_indices = @transform_1, window_bounds = array<i64: 32, 64>}, {transform_indices = @transform_2, window_bounds = array<i64: 1, 64>}, {transform_indices = @transform_3, window_bounds = array<i64: 64, 32>}, {pipeline_mode = #tpu.pipeline_mode<synchronous>, transform_indices = @transform_4, window_bounds = array<i64: 1, 32>}, {pipeline_mode = #tpu.pipeline_mode<synchronous>, transform_indices = @transform_5, window_bounds = array<i64: 1, 32>}, {pipeline_mode = #tpu.pipeline_mode<synchronous>, transform_indices = @transform_6, window_bounds = array<i64: 1, 32>}, {transform_indices = @transform_7, window_bounds = array<i64: 16, 32>}]} {
    %c0_i32 = arith.constant 0 : i32
    %0 = arith.cmpi eq, %arg1, %c0_i32 : i32
    %1 = arith.extui %0 : i1 to i32
    %c0_i32_0 = arith.constant 0 : i32
    %2 = arith.cmpi ne, %1, %c0_i32_0 : i32
    scf.if %2 {
      %cst_18 = arith.constant 0.000000e+00 : f32
      %26 = vector.broadcast %cst_18 : f32 to vector<16x32xf32>
      %c0_19 = arith.constant 0 : index
      %c0_20 = arith.constant 0 : index
      %27 = vector.load %arg10[%c0_19, %c0_20] : memref<16x32xf32, #tpu.memory_space<vmem>>, vector<16x32xf32>
      tpu.vector_store %arg10[%c0_19, %c0_20], %26 {strides = array<i32>} : memref<16x32xf32, #tpu.memory_space<vmem>>, vector<16x32xf32>,
    } else {
    }
    %c0 = arith.constant 0 : index
    %c0_1 = arith.constant 0 : index
    %3 = vector.load %arg2[%c0, %c0_1] : memref<16x32xbf16, #tpu.memory_space<vmem>>, vector<16x32xbf16>
    %c0_2 = arith.constant 0 : index
    %c0_3 = arith.constant 0 : index
    %4 = vector.load %arg3[%c0_2, %c0_3] : memref<32x64xbf16, #tpu.memory_space<vmem>>, vector<32x64xbf16>
    %cst = arith.constant dense<0.000000e+00> : vector<16x64xf32>
    %5 = tpu.matmul %3, %4, %cst {dimension_numbers = #tpu.dot_dimension_numbers<[1], [0], [0], [1], [0, 0, 1, 1], [], []>} : vector<16x32xbf16>, vector<32x64xbf16>, vector<16x64xf32> -> vector<16x64xf32>
    %c0_4 = arith.constant 0 : index
    %c0_5 = arith.constant 0 : index
    %6 = vector.load %arg4[%c0_4, %c0_5] : memref<1x64xf32, #tpu.memory_space<vmem>>, vector<1x64xf32>
    %7 = vector.broadcast %6 : vector<1x64xf32> to vector<16x64xf32>
    %8 = arith.addf %5, %7 : vector<16x64xf32>
    %cst_6 = arith.constant 5.000000e-01 : f32
    %9 = vector.broadcast %cst_6 : f32 to vector<16x64xf32>
    %10 = arith.mulf %9, %8 : vector<16x64xf32>
    %cst_7 = arith.constant 0.707106769 : f32
    %11 = vector.broadcast %cst_7 : f32 to vector<16x64xf32>
    %12 = arith.mulf %8, %11 : vector<16x64xf32>
    %13 = math.erf %12 : vector<16x64xf32>
    %cst_8 = arith.constant 1.000000e+00 : f32
    %14 = vector.broadcast %cst_8 : f32 to vector<16x64xf32>
    %15 = arith.addf %14, %13 : vector<16x64xf32>
    %16 = arith.mulf %10, %15 : vector<16x64xf32>
    %c0_9 = arith.constant 0 : index
    %c0_10 = arith.constant 0 : index
    %17 = vector.load %arg10[%c0_9, %c0_10] : memref<16x32xf32, #tpu.memory_space<vmem>>, vector<16x32xf32>
    %18 = arith.truncf %16 : vector<16x64xf32> to vector<16x64xbf16>
    %c0_11 = arith.constant 0 : index
    %c0_12 = arith.constant 0 : index
    %19 = vector.load %arg5[%c0_11, %c0_12] : memref<64x32xbf16, #tpu.memory_space<vmem>>, vector<64x32xbf16>
    %cst_13 = arith.constant dense<0.000000e+00> : vector<16x32xf32>
    %20 = tpu.matmul %18, %19, %cst_13 {dimension_numbers = #tpu.dot_dimension_numbers<[1], [0], [0], [1], [0, 0, 1, 1], [], []>} : vector<16x64xbf16>, vector<64x32xbf16>, vector<16x32xf32> -> vector<16x32xf32>
    %21 = arith.addf %17, %20 : vector<16x32xf32>
    %c0_14 = arith.constant 0 : index
    %c0_15 = arith.constant 0 : index
    %22 = vector.load %arg10[%c0_14, %c0_15] : memref<16x32xf32, #tpu.memory_space<vmem>>, vector<16x32xf32>
    tpu.vector_store %arg10[%c0_14, %c0_15], %21 {strides = array<i32>} : memref<16x32xf32, #tpu.memory_space<vmem>>, vector<16x32xf32>,
    %c0_i32_16 = arith.constant 0 : i32
    %23 = arith.cmpi eq, %arg1, %c0_i32_16 : i32
    %24 = arith.extui %23 : i1 to i32
    %c0_i32_17 = arith.constant 0 : i32
    %25 = arith.cmpi ne, %24, %c0_i32_17 : i32
    scf.if %25 {
      %c0_18 = arith.constant 0 : index
      %c0_19 = arith.constant 0 : index
      %26 = vector.load %arg10[%c0_18, %c0_19] : memref<16x32xf32, #tpu.memory_space<vmem>>, vector<16x32xf32>
      %c0_20 = arith.constant 0 : index
      %c0_21 = arith.constant 0 : index
      %27 = vector.load %arg6[%c0_20, %c0_21] : memref<1x32xf32, #tpu.memory_space<vmem>>, vector<1x32xf32>
      %28 = vector.broadcast %27 : vector<1x32xf32> to vector<16x32xf32>
      %29 = arith.addf %26, %28 : vector<16x32xf32>
      %c0_22 = arith.constant 0 : index
      %c0_23 = arith.constant 0 : index
      %30 = vector.load %arg2[%c0_22, %c0_23] : memref<16x32xbf16, #tpu.memory_space<vmem>>, vector<16x32xbf16>
      %31 = arith.extf %30 : vector<16x32xbf16> to vector<16x32xf32>
      %32 = arith.addf %29, %31 : vector<16x32xf32>
      %cst_24 = arith.constant dense<0.000000e+00> : vector<16xf32>
      %33 = vector.multi_reduction <add>, %32, %cst_24 [1] : vector<16x32xf32> to vector<16xf32>
      %34 = vector.shape_cast %33 : vector<16xf32> to vector<16x1xf32>
      %cst_25 = arith.constant 3.200000e+01 : f32
      %35 = vector.broadcast %cst_25 : f32 to vector<16x1xf32>
      %36 = arith.divf %34, %35 : vector<16x1xf32>
      %37 = vector.broadcast %36 : vector<16x1xf32> to vector<16x32xf32>
      %38 = arith.subf %32, %37 : vector<16x32xf32>
      %39 = arith.mulf %38, %38 : vector<16x32xf32>
      %cst_26 = arith.constant dense<0.000000e+00> : vector<16xf32>
      %40 = vector.multi_reduction <add>, %39, %cst_26 [1] : vector<16x32xf32> to vector<16xf32>
      %41 = vector.shape_cast %40 : vector<16xf32> to vector<16x1xf32>
      %cst_27 = arith.constant 3.200000e+01 : f32
      %42 = vector.broadcast %cst_27 : f32 to vector<16x1xf32>
      %43 = arith.divf %41, %42 : vector<16x1xf32>
      %cst_28 = arith.constant 9.99999996E-13 : f32
      %44 = vector.broadcast %cst_28 : f32 to vector<16x1xf32>
      %45 = arith.addf %43, %44 : vector<16x1xf32>
      %46 = math.rsqrt %45 : vector<16x1xf32>
      %47 = vector.broadcast %46 : vector<16x1xf32> to vector<16x32xf32>
      %48 = arith.mulf %38, %47 : vector<16x32xf32>
      %c0_29 = arith.constant 0 : index
      %c0_30 = arith.constant 0 : index
      %49 = vector.load %arg7[%c0_29, %c0_30] : memref<1x32xf32, #tpu.memory_space<vmem>>, vector<1x32xf32>
      %50 = vector.broadcast %49 : vector<1x32xf32> to vector<16x32xf32>
      %51 = arith.mulf %48, %50 : vector<16x32xf32>
      %c0_31 = arith.constant 0 : index
      %c0_32 = arith.constant 0 : index
      %52 = vector.load %arg8[%c0_31, %c0_32] : memref<1x32xf32, #tpu.memory_space<vmem>>, vector<1x32xf32>
      %53 = vector.broadcast %52 : vector<1x32xf32> to vector<16x32xf32>
      %54 = arith.addf %51, %53 : vector<16x32xf32>
      %55 = arith.truncf %54 : vector<16x32xf32> to vector<16x32xbf16>
      %c0_33 = arith.constant 0 : index
      %c0_34 = arith.constant 0 : index
      %56 = vector.load %arg9[%c0_33, %c0_34] : memref<16x32xbf16, #tpu.memory_space<vmem>>, vector<16x32xbf16>
      tpu.vector_store %arg9[%c0_33, %c0_34], %55 {strides = array<i32>} : memref<16x32xbf16, #tpu.memory_space<vmem>>, vector<16x32xbf16>,
    } else {
    }
    return
  }
  func.func @transform_0(%arg0: i32, %arg1: i32) -> (i32, i32) {
    %c0_i32 = arith.constant 0 : i32
    %c0_i32_0 = arith.constant 0 : i32
    return %arg0, %c0_i32 : i32, i32
  }
  func.func @transform_1(%arg0: i32, %arg1: i32) -> (i32, i32) {
    %c0_i32 = arith.constant 0 : i32
    %c0_i32_0 = arith.constant 0 : i32
    return %c0_i32, %arg1 : i32, i32
  }
  func.func @transform_2(%arg0: i32, %arg1: i32) -> (i32, i32) {
    %c0_i32 = arith.constant 0 : i32
    %c0_i32_0 = arith.constant 0 : i32
    return %c0_i32, %arg1 : i32, i32
  }
  func.func @transform_3(%arg0: i32, %arg1: i32) -> (i32, i32) {
    %c0_i32 = arith.constant 0 : i32
    %c0_i32_0 = arith.constant 0 : i32
    return %arg1, %c0_i32 : i32, i32
  }
  func.func @transform_4(%arg0: i32, %arg1: i32) -> (i32, i32) {
    %c0_i32 = arith.constant 0 : i32
    %c0_i32_0 = arith.constant 0 : i32
    %c0_i32_1 = arith.constant 0 : i32
    return %c0_i32, %c0_i32_0 : i32, i32
  }
  func.func @transform_5(%arg0: i32, %arg1: i32) -> (i32, i32) {
    %c0_i32 = arith.constant 0 : i32
    %c0_i32_0 = arith.constant 0 : i32
    %c0_i32_1 = arith.constant 0 : i32
    return %c0_i32, %c0_i32_0 : i32, i32
  }
  func.func @transform_6(%arg0: i32, %arg1: i32) -> (i32, i32) {
    %c0_i32 = arith.constant 0 : i32
    %c0_i32_0 = arith.constant 0 : i32
    %c0_i32_1 = arith.constant 0 : i32
    return %c0_i32, %c0_i32_0 : i32, i32
  }
  func.func @transform_7(%arg0: i32, %arg1: i32) -> (i32, i32) {
    %c0_i32 = arith.constant 0 : i32
    %c0_i32_0 = arith.constant 0 : i32
    return %arg0, %c0_i32 : i32, i32
  }
}

module attributes {stable_mosaic.version = 11 : i64} {
  func.func @_linear_split_kernel(%arg0: i32, %arg1: memref<16x32xbf16, #tpu.memory_space<vmem>>, %arg2: memref<32x32xbf16, #tpu.memory_space<vmem>>, %arg3: memref<1x32xf32, #tpu.memory_space<vmem>>, %arg4: memref<16x32xbf16, #tpu.memory_space<vmem>>) attributes {dimension_semantics = [#tpu.dimension_semantics<parallel>], iteration_bounds = array<i64: 1>, scalar_prefetch = 0 : i64, scratch_operands = 0 : i64, tpu.core_type = #tpu.core_type<tc>, window_params = [{transform_indices = @transform_0, window_bounds = array<i64: 16, 32>}, {pipeline_mode = #tpu.pipeline_mode<synchronous>, transform_indices = @transform_1, window_bounds = array<i64: 32, 32>}, {pipeline_mode = #tpu.pipeline_mode<synchronous>, transform_indices = @transform_2, window_bounds = array<i64: 1, 32>}, {transform_indices = @transform_3, window_bounds = array<i64: 16, 32>}]} {
    %c0 = arith.constant 0 : index
    %c0_0 = arith.constant 0 : index
    %0 = vector.load %arg1[%c0, %c0_0] : memref<16x32xbf16, #tpu.memory_space<vmem>>, vector<16x32xbf16>
    %c0_1 = arith.constant 0 : index
    %c0_2 = arith.constant 0 : index
    %1 = vector.load %arg2[%c0_1, %c0_2] : memref<32x32xbf16, #tpu.memory_space<vmem>>, vector<32x32xbf16>
    %cst = arith.constant dense<0.000000e+00> : vector<16x32xf32>
    %2 = tpu.matmul %0, %1, %cst {dimension_numbers = #tpu.dot_dimension_numbers<[1], [0], [0], [1], [0, 0, 1, 1], [], []>} : vector<16x32xbf16>, vector<32x32xbf16>, vector<16x32xf32> -> vector<16x32xf32>
    %c0_3 = arith.constant 0 : index
    %c0_4 = arith.constant 0 : index
    %3 = vector.load %arg3[%c0_3, %c0_4] : memref<1x32xf32, #tpu.memory_space<vmem>>, vector<1x32xf32>
    %4 = vector.broadcast %3 : vector<1x32xf32> to vector<16x32xf32>
    %5 = arith.addf %2, %4 : vector<16x32xf32>
    %6 = arith.truncf %5 : vector<16x32xf32> to vector<16x32xbf16>
    %c0_5 = arith.constant 0 : index
    %c0_6 = arith.constant 0 : index
    %7 = vector.load %arg4[%c0_5, %c0_6] : memref<16x32xbf16, #tpu.memory_space<vmem>>, vector<16x32xbf16>
    tpu.vector_store %arg4[%c0_5, %c0_6], %6 {strides = array<i32>} : memref<16x32xbf16, #tpu.memory_space<vmem>>, vector<16x32xbf16>,
    return
  }
  func.func @transform_0(%arg0: i32) -> (i32, i32) {
    %c0_i32 = arith.constant 0 : i32
    %c0_i32_0 = arith.constant 0 : i32
    return %arg0, %c0_i32 : i32, i32
  }
  func.func @transform_1(%arg0: i32) -> (i32, i32) {
    %c0_i32 = arith.constant 0 : i32
    %c0_i32_0 = arith.constant 0 : i32
    %c0_i32_1 = arith.constant 0 : i32
    return %c0_i32, %c0_i32_0 : i32, i32
  }
  func.func @transform_2(%arg0: i32) -> (i32, i32) {
    %c0_i32 = arith.constant 0 : i32
    %c0_i32_0 = arith.constant 0 : i32
    %c0_i32_1 = arith.constant 0 : i32
    return %c0_i32, %c0_i32_0 : i32, i32
  }
  func.func @transform_3(%arg0: i32) -> (i32, i32) {
    %c0_i32 = arith.constant 0 : i32
    %c0_i32_0 = arith.constant 0 : i32
    return %arg0, %c0_i32 : i32, i32
  }
}

module attributes {stable_mosaic.version = 11 : i64} {
  func.func @_linear_split_kernel(%arg0: i32, %arg1: memref<16x32xf32, #tpu.memory_space<vmem>>, %arg2: memref<32x64xbf16, #tpu.memory_space<vmem>>, %arg3: memref<1x64xf32, #tpu.memory_space<vmem>>, %arg4: memref<16x64xbf16, #tpu.memory_space<vmem>>) attributes {dimension_semantics = [#tpu.dimension_semantics<parallel>], iteration_bounds = array<i64: 1>, scalar_prefetch = 0 : i64, scratch_operands = 0 : i64, tpu.core_type = #tpu.core_type<tc>, window_params = [{transform_indices = @transform_0, window_bounds = array<i64: 16, 32>}, {pipeline_mode = #tpu.pipeline_mode<synchronous>, transform_indices = @transform_1, window_bounds = array<i64: 32, 64>}, {pipeline_mode = #tpu.pipeline_mode<synchronous>, transform_indices = @transform_2, window_bounds = array<i64: 1, 64>}, {transform_indices = @transform_3, window_bounds = array<i64: 16, 64>}]} {
    %c0 = arith.constant 0 : index
    %c0_0 = arith.constant 0 : index
    %0 = vector.load %arg1[%c0, %c0_0] : memref<16x32xf32, #tpu.memory_space<vmem>>, vector<16x32xf32>
    %1 = arith.truncf %0 : vector<16x32xf32> to vector<16x32xbf16>
    %c0_1 = arith.constant 0 : index
    %c0_2 = arith.constant 0 : index
    %2 = vector.load %arg2[%c0_1, %c0_2] : memref<32x64xbf16, #tpu.memory_space<vmem>>, vector<32x64xbf16>
    %cst = arith.constant dense<0.000000e+00> : vector<16x64xf32>
    %3 = tpu.matmul %1, %2, %cst {dimension_numbers = #tpu.dot_dimension_numbers<[1], [0], [0], [1], [0, 0, 1, 1], [], []>} : vector<16x32xbf16>, vector<32x64xbf16>, vector<16x64xf32> -> vector<16x64xf32>
    %c0_3 = arith.constant 0 : index
    %c0_4 = arith.constant 0 : index
    %4 = vector.load %arg3[%c0_3, %c0_4] : memref<1x64xf32, #tpu.memory_space<vmem>>, vector<1x64xf32>
    %5 = vector.broadcast %4 : vector<1x64xf32> to vector<16x64xf32>
    %6 = arith.addf %3, %5 : vector<16x64xf32>
    %7 = arith.truncf %6 : vector<16x64xf32> to vector<16x64xbf16>
    %c0_5 = arith.constant 0 : index
    %c0_6 = arith.constant 0 : index
    %8 = vector.load %arg4[%c0_5, %c0_6] : memref<16x64xbf16, #tpu.memory_space<vmem>>, vector<16x64xbf16>
    tpu.vector_store %arg4[%c0_5, %c0_6], %7 {strides = array<i32>} : memref<16x64xbf16, #tpu.memory_space<vmem>>, vector<16x64xbf16>,
    return
  }
  func.func @transform_0(%arg0: i32) -> (i32, i32) {
    %c0_i32 = arith.constant 0 : i32
    %c0_i32_0 = arith.constant 0 : i32
    return %arg0, %c0_i32 : i32, i32
  }
  func.func @transform_1(%arg0: i32) -> (i32, i32) {
    %c0_i32 = arith.constant 0 : i32
    %c0_i32_0 = arith.constant 0 : i32
    %c0_i32_1 = arith.constant 0 : i32
    return %c0_i32, %c0_i32_0 : i32, i32
  }
  func.func @transform_2(%arg0: i32) -> (i32, i32) {
    %c0_i32 = arith.constant 0 : i32
    %c0_i32_0 = arith.constant 0 : i32
    %c0_i32_1 = arith.constant 0 : i32
    return %c0_i32, %c0_i32_0 : i32, i32
  }
  func.func @transform_3(%arg0: i32) -> (i32, i32) {
    %c0_i32 = arith.constant 0 : i32
    %c0_i32_0 = arith.constant 0 : i32
    return %arg0, %c0_i32 : i32, i32
  }
}

module attributes {stable_mosaic.version = 11 : i64} {
  func.func @_proj_add_ln_kernel(%arg0: i32, %arg1: memref<16x32xbf16, #tpu.memory_space<vmem>>, %arg2: memref<16x32xbf16, #tpu.memory_space<vmem>>, %arg3: memref<32x32xbf16, #tpu.memory_space<vmem>>, %arg4: memref<1x32xf32, #tpu.memory_space<vmem>>, %arg5: memref<1x32xf32, #tpu.memory_space<vmem>>, %arg6: memref<1x32xf32, #tpu.memory_space<vmem>>, %arg7: memref<16x32xbf16, #tpu.memory_space<vmem>>) attributes {dimension_semantics = [#tpu.dimension_semantics<parallel>], iteration_bounds = array<i64: 1>, scalar_prefetch = 0 : i64, scratch_operands = 0 : i64, tpu.core_type = #tpu.core_type<tc>, window_params = [{transform_indices = @transform_0, window_bounds = array<i64: 16, 32>}, {transform_indices = @transform_1, window_bounds = array<i64: 16, 32>}, {pipeline_mode = #tpu.pipeline_mode<synchronous>, transform_indices = @transform_2, window_bounds = array<i64: 32, 32>}, {pipeline_mode = #tpu.pipeline_mode<synchronous>, transform_indices = @transform_3, window_bounds = array<i64: 1, 32>}, {pipeline_mode = #tpu.pipeline_mode<synchronous>, transform_indices = @transform_4, window_bounds = array<i64: 1, 32>}, {pipeline_mode = #tpu.pipeline_mode<synchronous>, transform_indices = @transform_5, window_bounds = array<i64: 1, 32>}, {transform_indices = @transform_6, window_bounds = array<i64: 16, 32>}]} {
    %c0 = arith.constant 0 : index
    %c0_0 = arith.constant 0 : index
    %0 = vector.load %arg1[%c0, %c0_0] : memref<16x32xbf16, #tpu.memory_space<vmem>>, vector<16x32xbf16>
    %c0_1 = arith.constant 0 : index
    %c0_2 = arith.constant 0 : index
    %1 = vector.load %arg3[%c0_1, %c0_2] : memref<32x32xbf16, #tpu.memory_space<vmem>>, vector<32x32xbf16>
    %cst = arith.constant dense<0.000000e+00> : vector<16x32xf32>
    %2 = tpu.matmul %0, %1, %cst {dimension_numbers = #tpu.dot_dimension_numbers<[1], [0], [0], [1], [0, 0, 1, 1], [], []>} : vector<16x32xbf16>, vector<32x32xbf16>, vector<16x32xf32> -> vector<16x32xf32>
    %c0_3 = arith.constant 0 : index
    %c0_4 = arith.constant 0 : index
    %3 = vector.load %arg4[%c0_3, %c0_4] : memref<1x32xf32, #tpu.memory_space<vmem>>, vector<1x32xf32>
    %4 = vector.broadcast %3 : vector<1x32xf32> to vector<16x32xf32>
    %5 = arith.addf %2, %4 : vector<16x32xf32>
    %c0_5 = arith.constant 0 : index
    %c0_6 = arith.constant 0 : index
    %6 = vector.load %arg2[%c0_5, %c0_6] : memref<16x32xbf16, #tpu.memory_space<vmem>>, vector<16x32xbf16>
    %7 = arith.extf %6 : vector<16x32xbf16> to vector<16x32xf32>
    %8 = arith.addf %5, %7 : vector<16x32xf32>
    %cst_7 = arith.constant dense<0.000000e+00> : vector<16xf32>
    %9 = vector.multi_reduction <add>, %8, %cst_7 [1] : vector<16x32xf32> to vector<16xf32>
    %10 = vector.shape_cast %9 : vector<16xf32> to vector<16x1xf32>
    %cst_8 = arith.constant 3.200000e+01 : f32
    %11 = vector.broadcast %cst_8 : f32 to vector<16x1xf32>
    %12 = arith.divf %10, %11 : vector<16x1xf32>
    %13 = vector.broadcast %12 : vector<16x1xf32> to vector<16x32xf32>
    %14 = arith.subf %8, %13 : vector<16x32xf32>
    %15 = arith.mulf %14, %14 : vector<16x32xf32>
    %cst_9 = arith.constant dense<0.000000e+00> : vector<16xf32>
    %16 = vector.multi_reduction <add>, %15, %cst_9 [1] : vector<16x32xf32> to vector<16xf32>
    %17 = vector.shape_cast %16 : vector<16xf32> to vector<16x1xf32>
    %cst_10 = arith.constant 3.200000e+01 : f32
    %18 = vector.broadcast %cst_10 : f32 to vector<16x1xf32>
    %19 = arith.divf %17, %18 : vector<16x1xf32>
    %cst_11 = arith.constant 9.99999974E-6 : f32
    %20 = vector.broadcast %cst_11 : f32 to vector<16x1xf32>
    %21 = arith.addf %19, %20 : vector<16x1xf32>
    %22 = math.rsqrt %21 : vector<16x1xf32>
    %23 = vector.broadcast %22 : vector<16x1xf32> to vector<16x32xf32>
    %24 = arith.mulf %14, %23 : vector<16x32xf32>
    %c0_12 = arith.constant 0 : index
    %c0_13 = arith.constant 0 : index
    %25 = vector.load %arg5[%c0_12, %c0_13] : memref<1x32xf32, #tpu.memory_space<vmem>>, vector<1x32xf32>
    %26 = vector.broadcast %25 : vector<1x32xf32> to vector<16x32xf32>
    %27 = arith.mulf %24, %26 : vector<16x32xf32>
    %c0_14 = arith.constant 0 : index
    %c0_15 = arith.constant 0 : index
    %28 = vector.load %arg6[%c0_14, %c0_15] : memref<1x32xf32, #tpu.memory_space<vmem>>, vector<1x32xf32>
    %29 = vector.broadcast %28 : vector<1x32xf32> to vector<16x32xf32>
    %30 = arith.addf %27, %29 : vector<16x32xf32>
    %31 = arith.truncf %30 : vector<16x32xf32> to vector<16x32xbf16>
    %c0_16 = arith.constant 0 : index
    %c0_17 = arith.constant 0 : index
    %32 = vector.load %arg7[%c0_16, %c0_17] : memref<16x32xbf16, #tpu.memory_space<vmem>>, vector<16x32xbf16>
    tpu.vector_store %arg7[%c0_16, %c0_17], %31 {strides = array<i32>} : memref<16x32xbf16, #tpu.memory_space<vmem>>, vector<16x32xbf16>,
    return
  }
  func.func @transform_0(%arg0: i32) -> (i32, i32) {
    %c0_i32 = arith.constant 0 : i32
    %c0_i32_0 = arith.constant 0 : i32
    return %arg0, %c0_i32 : i32, i32
  }
  func.func @transform_1(%arg0: i32) -> (i32, i32) {
    %c0_i32 = arith.constant 0 : i32
    %c0_i32_0 = arith.constant 0 : i32
    return %arg0, %c0_i32 : i32, i32
  }
  func.func @transform_2(%arg0: i32) -> (i32, i32) {
    %c0_i32 = arith.constant 0 : i32
    %c0_i32_0 = arith.constant 0 : i32
    %c0_i32_1 = arith.constant 0 : i32
    return %c0_i32, %c0_i32_0 : i32, i32
  }
  func.func @transform_3(%arg0: i32) -> (i32, i32) {
    %c0_i32 = arith.constant 0 : i32
    %c0_i32_0 = arith.constant 0 : i32
    %c0_i32_1 = arith.constant 0 : i32
    return %c0_i32, %c0_i32_0 : i32, i32
  }
  func.func @transform_4(%arg0: i32) -> (i32, i32) {
    %c0_i32 = arith.constant 0 : i32
    %c0_i32_0 = arith.constant 0 : i32
    %c0_i32_1 = arith.constant 0 : i32
    return %c0_i32, %c0_i32_0 : i32, i32
  }
  func.func @transform_5(%arg0: i32) -> (i32, i32) {
    %c0_i32 = arith.constant 0 : i32
    %c0_i32_0 = arith.constant 0 : i32
    %c0_i32_1 = arith.constant 0 : i32
    return %c0_i32, %c0_i32_0 : i32, i32
  }
  func.func @transform_6(%arg0: i32) -> (i32, i32) {
    %c0_i32 = arith.constant 0 : i32
    %c0_i32_0 = arith.constant 0 : i32
    return %arg0, %c0_i32 : i32, i32
  }
}

module attributes {stable_mosaic.version = 11 : i64} {
  func.func @_ffn_res_ln_kernel(%arg0: i32, %arg1: i32, %arg2: memref<16x32xbf16, #tpu.memory_space<vmem>>, %arg3: memref<32x16xbf16, #tpu.memory_space<vmem>>, %arg4: memref<1x16xf32, #tpu.memory_space<vmem>>, %arg5: memref<16x32xbf16, #tpu.memory_space<vmem>>, %arg6: memref<1x32xf32, #tpu.memory_space<vmem>>, %arg7: memref<1x32xf32, #tpu.memory_space<vmem>>, %arg8: memref<1x32xf32, #tpu.memory_space<vmem>>, %arg9: memref<16x32xf32, #tpu.memory_space<vmem>>, %arg10: memref<16x32xf32, #tpu.memory_space<vmem>>) attributes {dimension_semantics = [#tpu.dimension_semantics<parallel>, #tpu.dimension_semantics<arbitrary>], iteration_bounds = array<i64: 1, 1>, scalar_prefetch = 0 : i64, scratch_operands = 1 : i64, tpu.core_type = #tpu.core_type<tc>, window_params = [{transform_indices = @transform_0, window_bounds = array<i64: 16, 32>}, {transform_indices = @transform_1, window_bounds = array<i64: 32, 16>}, {transform_indices = @transform_2, window_bounds = array<i64: 1, 16>}, {transform_indices = @transform_3, window_bounds = array<i64: 16, 32>}, {pipeline_mode = #tpu.pipeline_mode<synchronous>, transform_indices = @transform_4, window_bounds = array<i64: 1, 32>}, {pipeline_mode = #tpu.pipeline_mode<synchronous>, transform_indices = @transform_5, window_bounds = array<i64: 1, 32>}, {pipeline_mode = #tpu.pipeline_mode<synchronous>, transform_indices = @transform_6, window_bounds = array<i64: 1, 32>}, {transform_indices = @transform_7, window_bounds = array<i64: 16, 32>}]} {
    %c0_i32 = arith.constant 0 : i32
    %0 = arith.cmpi eq, %arg1, %c0_i32 : i32
    %1 = arith.extui %0 : i1 to i32
    %c0_i32_0 = arith.constant 0 : i32
    %2 = arith.cmpi ne, %1, %c0_i32_0 : i32
    scf.if %2 {
      %cst_16 = arith.constant 0.000000e+00 : f32
      %20 = vector.broadcast %cst_16 : f32 to vector<16x32xf32>
      %c0_17 = arith.constant 0 : index
      %c0_18 = arith.constant 0 : index
      %21 = vector.load %arg10[%c0_17, %c0_18] : memref<16x32xf32, #tpu.memory_space<vmem>>, vector<16x32xf32>
      tpu.vector_store %arg10[%c0_17, %c0_18], %20 {strides = array<i32>} : memref<16x32xf32, #tpu.memory_space<vmem>>, vector<16x32xf32>,
    } else {
    }
    %c0 = arith.constant 0 : index
    %c0_1 = arith.constant 0 : index
    %3 = vector.load %arg2[%c0, %c0_1] : memref<16x32xbf16, #tpu.memory_space<vmem>>, vector<16x32xbf16>
    %c0_2 = arith.constant 0 : index
    %c0_3 = arith.constant 0 : index
    %4 = vector.load %arg3[%c0_2, %c0_3] : memref<32x16xbf16, #tpu.memory_space<vmem>>, vector<32x16xbf16>
    %cst = arith.constant dense<0.000000e+00> : vector<16x16xf32>
    %5 = tpu.matmul %3, %4, %cst {dimension_numbers = #tpu.dot_dimension_numbers<[1], [0], [0], [1], [0, 0, 1, 1], [], []>} : vector<16x32xbf16>, vector<32x16xbf16>, vector<16x16xf32> -> vector<16x16xf32>
    %c0_4 = arith.constant 0 : index
    %c0_5 = arith.constant 0 : index
    %6 = vector.load %arg4[%c0_4, %c0_5] : memref<1x16xf32, #tpu.memory_space<vmem>>, vector<1x16xf32>
    %7 = vector.broadcast %6 : vector<1x16xf32> to vector<16x16xf32>
    %8 = arith.addf %5, %7 : vector<16x16xf32>
    %cst_6 = arith.constant 0.000000e+00 : f32
    %9 = vector.broadcast %cst_6 : f32 to vector<16x16xf32>
    %10 = arith.maximumf %8, %9 : vector<16x16xf32>
    %c0_7 = arith.constant 0 : index
    %c0_8 = arith.constant 0 : index
    %11 = vector.load %arg10[%c0_7, %c0_8] : memref<16x32xf32, #tpu.memory_space<vmem>>, vector<16x32xf32>
    %12 = arith.truncf %10 : vector<16x16xf32> to vector<16x16xbf16>
    %c0_9 = arith.constant 0 : index
    %c0_10 = arith.constant 0 : index
    %13 = vector.load %arg5[%c0_9, %c0_10] : memref<16x32xbf16, #tpu.memory_space<vmem>>, vector<16x32xbf16>
    %cst_11 = arith.constant dense<0.000000e+00> : vector<16x32xf32>
    %14 = tpu.matmul %12, %13, %cst_11 {dimension_numbers = #tpu.dot_dimension_numbers<[1], [0], [0], [1], [0, 0, 1, 1], [], []>} : vector<16x16xbf16>, vector<16x32xbf16>, vector<16x32xf32> -> vector<16x32xf32>
    %15 = arith.addf %11, %14 : vector<16x32xf32>
    %c0_12 = arith.constant 0 : index
    %c0_13 = arith.constant 0 : index
    %16 = vector.load %arg10[%c0_12, %c0_13] : memref<16x32xf32, #tpu.memory_space<vmem>>, vector<16x32xf32>
    tpu.vector_store %arg10[%c0_12, %c0_13], %15 {strides = array<i32>} : memref<16x32xf32, #tpu.memory_space<vmem>>, vector<16x32xf32>,
    %c0_i32_14 = arith.constant 0 : i32
    %17 = arith.cmpi eq, %arg1, %c0_i32_14 : i32
    %18 = arith.extui %17 : i1 to i32
    %c0_i32_15 = arith.constant 0 : i32
    %19 = arith.cmpi ne, %18, %c0_i32_15 : i32
    scf.if %19 {
      %c0_16 = arith.constant 0 : index
      %c0_17 = arith.constant 0 : index
      %20 = vector.load %arg10[%c0_16, %c0_17] : memref<16x32xf32, #tpu.memory_space<vmem>>, vector<16x32xf32>
      %c0_18 = arith.constant 0 : index
      %c0_19 = arith.constant 0 : index
      %21 = vector.load %arg6[%c0_18, %c0_19] : memref<1x32xf32, #tpu.memory_space<vmem>>, vector<1x32xf32>
      %22 = vector.broadcast %21 : vector<1x32xf32> to vector<16x32xf32>
      %23 = arith.addf %20, %22 : vector<16x32xf32>
      %c0_20 = arith.constant 0 : index
      %c0_21 = arith.constant 0 : index
      %24 = vector.load %arg2[%c0_20, %c0_21] : memref<16x32xbf16, #tpu.memory_space<vmem>>, vector<16x32xbf16>
      %25 = arith.extf %24 : vector<16x32xbf16> to vector<16x32xf32>
      %26 = arith.addf %23, %25 : vector<16x32xf32>
      %cst_22 = arith.constant dense<0.000000e+00> : vector<16xf32>
      %27 = vector.multi_reduction <add>, %26, %cst_22 [1] : vector<16x32xf32> to vector<16xf32>
      %28 = vector.shape_cast %27 : vector<16xf32> to vector<16x1xf32>
      %cst_23 = arith.constant 3.200000e+01 : f32
      %29 = vector.broadcast %cst_23 : f32 to vector<16x1xf32>
      %30 = arith.divf %28, %29 : vector<16x1xf32>
      %31 = vector.broadcast %30 : vector<16x1xf32> to vector<16x32xf32>
      %32 = arith.subf %26, %31 : vector<16x32xf32>
      %33 = arith.mulf %32, %32 : vector<16x32xf32>
      %cst_24 = arith.constant dense<0.000000e+00> : vector<16xf32>
      %34 = vector.multi_reduction <add>, %33, %cst_24 [1] : vector<16x32xf32> to vector<16xf32>
      %35 = vector.shape_cast %34 : vector<16xf32> to vector<16x1xf32>
      %cst_25 = arith.constant 3.200000e+01 : f32
      %36 = vector.broadcast %cst_25 : f32 to vector<16x1xf32>
      %37 = arith.divf %35, %36 : vector<16x1xf32>
      %cst_26 = arith.constant 9.99999974E-6 : f32
      %38 = vector.broadcast %cst_26 : f32 to vector<16x1xf32>
      %39 = arith.addf %37, %38 : vector<16x1xf32>
      %40 = math.rsqrt %39 : vector<16x1xf32>
      %41 = vector.broadcast %40 : vector<16x1xf32> to vector<16x32xf32>
      %42 = arith.mulf %32, %41 : vector<16x32xf32>
      %c0_27 = arith.constant 0 : index
      %c0_28 = arith.constant 0 : index
      %43 = vector.load %arg7[%c0_27, %c0_28] : memref<1x32xf32, #tpu.memory_space<vmem>>, vector<1x32xf32>
      %44 = vector.broadcast %43 : vector<1x32xf32> to vector<16x32xf32>
      %45 = arith.mulf %42, %44 : vector<16x32xf32>
      %c0_29 = arith.constant 0 : index
      %c0_30 = arith.constant 0 : index
      %46 = vector.load %arg8[%c0_29, %c0_30] : memref<1x32xf32, #tpu.memory_space<vmem>>, vector<1x32xf32>
      %47 = vector.broadcast %46 : vector<1x32xf32> to vector<16x32xf32>
      %48 = arith.addf %45, %47 : vector<16x32xf32>
      %c0_31 = arith.constant 0 : index
      %c0_32 = arith.constant 0 : index
      %49 = vector.load %arg9[%c0_31, %c0_32] : memref<16x32xf32, #tpu.memory_space<vmem>>, vector<16x32xf32>
      tpu.vector_store %arg9[%c0_31, %c0_32], %48 {strides = array<i32>} : memref<16x32xf32, #tpu.memory_space<vmem>>, vector<16x32xf32>,
    } else {
    }
    return
  }
  func.func @transform_0(%arg0: i32, %arg1: i32) -> (i32, i32) {
    %c0_i32 = arith.constant 0 : i32
    %c0_i32_0 = arith.constant 0 : i32
    return %arg0, %c0_i32 : i32, i32
  }
  func.func @transform_1(%arg0: i32, %arg1: i32) -> (i32, i32) {
    %c0_i32 = arith.constant 0 : i32
    %c0_i32_0 = arith.constant 0 : i32
    return %c0_i32, %arg1 : i32, i32
  }
  func.func @transform_2(%arg0: i32, %arg1: i32) -> (i32, i32) {
    %c0_i32 = arith.constant 0 : i32
    %c0_i32_0 = arith.constant 0 : i32
    return %c0_i32, %arg1 : i32, i32
  }
  func.func @transform_3(%arg0: i32, %arg1: i32) -> (i32, i32) {
    %c0_i32 = arith.constant 0 : i32
    %c0_i32_0 = arith.constant 0 : i32
    return %arg1, %c0_i32 : i32, i32
  }
  func.func @transform_4(%arg0: i32, %arg1: i32) -> (i32, i32) {
    %c0_i32 = arith.constant 0 : i32
    %c0_i32_0 = arith.constant 0 : i32
    %c0_i32_1 = arith.constant 0 : i32
    return %c0_i32, %c0_i32_0 : i32, i32
  }
  func.func @transform_5(%arg0: i32, %arg1: i32) -> (i32, i32) {
    %c0_i32 = arith.constant 0 : i32
    %c0_i32_0 = arith.constant 0 : i32
    %c0_i32_1 = arith.constant 0 : i32
    return %c0_i32, %c0_i32_0 : i32, i32
  }
  func.func @transform_6(%arg0: i32, %arg1: i32) -> (i32, i32) {
    %c0_i32 = arith.constant 0 : i32
    %c0_i32_0 = arith.constant 0 : i32
    %c0_i32_1 = arith.constant 0 : i32
    return %c0_i32, %c0_i32_0 : i32, i32
  }
  func.func @transform_7(%arg0: i32, %arg1: i32) -> (i32, i32) {
    %c0_i32 = arith.constant 0 : i32
    %c0_i32_0 = arith.constant 0 : i32
    return %arg0, %c0_i32 : i32, i32
  }
}

</mosaic_0001>

<llo_original>
// kernel: tpu_custom_call.1
$region0: #{tpu_custom_call.1}
  #allocation0 [shape = 'u32[]', space=smem, size = 0x4, offset = 0x4, fixed_abs, tag = 'smem constant byte address 0x4 - core index']
  #allocation1 [shape = 'u32[72,128]{1,0:T(1,128)}', space=vmem, size = 0x9000, scoped, tag = 'internal scratch']
  %s0 = inlined_call_operand.hbm [shape: f32[8,128], index: 0, kind: input, shape index: {}]
  %s1 = inlined_call_operand.hbm [shape: f32[16,128], index: 1, kind: output, shape index: {}]
  %s2 = sld [smem:[#allocation0]]
  $region41: #{tpu_custom_call.1} parent=0
    _
  %s4 = ssub.s32 1, %s2
  %s5 = scalar_select 0, %s4, %s2
  $region1: #{tpu_custom_call.1} parent=0
    #allocation2 [shape = 'u8[4096]{0}', space=vmem, size = 0x1000, scoped, tag = 'input window, operand 0, single buffered']
    #allocation3 [shape = 's32[2]{0}', space=sflag, size = 0x8, scoped, tag = 'scoped memory for tpu_custom_call.1']
    #allocation4 [shape = 's32[2]{0}', space=sflag, size = 0x8, scoped, tag = 'scoped memory for tpu_custom_call.1']
    #allocation5 [shape = 'u8[8192]{0}', space=vmem, size = 0x2000, scoped, tag = 'output window, operand 0']
    %6 = vsyncpa [#allocation3], 0
    %7 = vsyncpa [#allocation4], 0
    %s8 = scalar_lea.sflag [#allocation4], 1
    %9 = vsyncpa %s8, 0
    loop: start=0, step=1, limit=4
    $region2: #{tpu_custom_call.1} parent=1 // loop_pre_header
      _
    $region3: #{tpu_custom_call.1} parent=1 // loop_header
      %s11 = sphi 0, %s15
      %p12 = scmp.ge.s32.totalorder %s11, 4
      %s19 = sphi 0, %s19
      %s21 = sphi 0, %s19
      %s22 = sphi 0, %s21
      %s36 = sphi 0, %s22
      %s42 = sphi 0, %s44
      %s45 = sphi 0, %s42
      %s46 = sphi 0, %s45
      %s62 = sphi 0, %s46
    $region4: #{tpu_custom_call.1} parent=1 // loop_header_branch
      %14 = sbr.rel (%p12) target = $region8
    $region5: #{tpu_custom_call.1} parent=1 // loop_body
      %s16 = ssub.s32 %s11, 1
      %s17 = ssub.s32 %s11, 2
      %s18 = sadd.s32 %s11, 1
      %s20 = sadd.s32 %s19, 1
      %p23 = scmp.eq.s32.totalorder %s11, 1
      %p24 = scmp.ne.s32.totalorder %s19, %s21
      %p25 = scmp.eq.s32.totalorder %s11, 0
      %p26 = por %p24, %p25
      %p27 = scmp.ne.s32.totalorder %s19, %s21
      %p28 = scmp.eq.s32.totalorder %s16, 1
      %p29 = por %p27, %p28
      %p30 = scmp.ne.s32.totalorder %s21, %s22
      %p31 = scmp.eq.s32.totalorder %s16, 0
      %p32 = por %p30, %p31
      %p33 = scmp.ne.s32.totalorder %s21, %s22
      %p34 = scmp.eq.s32.totalorder %s17, 1
      %p35 = por %p33, %p34
      %p37 = scmp.ne.s32.totalorder %s22, %s36
      %p38 = scmp.eq.s32.totalorder %s17, 0
      %p39 = por %p37, %p38
      %s40 = ssub.s32 %s11, %s18
      %p41 = scmp.eq.s32.totalorder %s40, 0
      %s43 = sadd.s32 %s42, 1
      %s44 = scalar_select %p41, %s42, %s43
      %p47 = pneg %p41
      %p48 = scmp.eq.s32.totalorder %s11, 1
      %p49 = por %p47, %p48
      %p50 = scmp.ne.s32.totalorder %s42, %s45
      %p51 = scmp.eq.s32.totalorder %s11, 0
      %p52 = por %p50, %p51
      %p53 = scmp.ne.s32.totalorder %s42, %s45
      %p54 = scmp.eq.s32.totalorder %s16, 1
      %p55 = por %p53, %p54
      %p56 = scmp.ne.s32.totalorder %s45, %s46
      %p57 = scmp.eq.s32.totalorder %s16, 0
      %p58 = por %p56, %p57
      %p59 = scmp.ne.s32.totalorder %s45, %s46
      %p60 = scmp.eq.s32.totalorder %s17, 1
      %p61 = por %p59, %p60
      %p63 = scmp.ne.s32.totalorder %s46, %s62
      %p64 = scmp.eq.s32.totalorder %s17, 0
      %p65 = por %p63, %p64
      %p66 = scmp.le.s32.totalorder 1, %s11
      %p67 = scmp.lt.s32.totalorder %s11, 3
      %p68 = pnand %p66, %p67
      %p69 = pneg %p68
      // Predicated region
      $region9: #{tpu_custom_call.1} parent=5 // pred_check
        _
      $region10: #{tpu_custom_call.1} parent=5 // pred_check_branch
        %71 = sbr.rel (%p68) target = $region12
      $region11: #{tpu_custom_call.1} parent=5 // pred_region
        %s72 = ssub.s32 %s11, 1
        // Predicated region
        $region13: #{tpu_custom_call.1} parent=11 // pred_check
          %p73 = pneg %p32
        $region14: #{tpu_custom_call.1} parent=11 // pred_check_branch
          %75 = sbr.rel (%p73) target = $region16
        $region15: #{tpu_custom_call.1} parent=11 // pred_region
          %77 = vsyncadd [#allocation3], 0
          %s79 = sshll.u32 %s0, 4
          %s80 = int_to_ptr.hbm [resolvable:$true] %s79
          %s81 = sshll.u32 [#allocation2], 4
          %s82 = int_to_ptr.vmem [resolvable:$true] %s81
          %84 = dma.hbm_to_vmem [thread:$0]  %s80, 128, %s82, [#allocation3]
        $region16: #{tpu_custom_call.1} parent=11 // pred_fallthru
          _
      $region12: #{tpu_custom_call.1} parent=5 // pred_fallthru
        _
      %p85 = scmp.lt.s32.totalorder %s11, 2
      // Predicated region
      $region17: #{tpu_custom_call.1} parent=5 // pred_check
        %p86 = pneg %p85
      $region18: #{tpu_custom_call.1} parent=5 // pred_check_branch
        %88 = sbr.rel (%p86) target = $region20
      $region19: #{tpu_custom_call.1} parent=5 // pred_region
        _
      $region20: #{tpu_custom_call.1} parent=5 // pred_fallthru
        _
      %p89 = scmp.le.s32.totalorder 1, %s11
      %p90 = scmp.lt.s32.totalorder %s11, 3
      %p91 = pnand %p89, %p90
      %p92 = pneg %p91
      // Predicated region
      $region21: #{tpu_custom_call.1} parent=5 // pred_check
        _
      $region22: #{tpu_custom_call.1} parent=5 // pred_check_branch
        %94 = sbr.rel (%p91) target = $region24
      $region23: #{tpu_custom_call.1} parent=5 // pred_region
        %s95 = ssub.s32 %s11, 1
        // Predicated region
        $region25: #{tpu_custom_call.1} parent=23 // pred_check
          %p96 = pneg %p32
        $region26: #{tpu_custom_call.1} parent=23 // pred_check_branch
          %98 = sbr.rel (%p96) target = $region28
        $region27: #{tpu_custom_call.1} parent=23 // pred_region
          %100 = dma.done [#allocation3], 128
        $region28: #{tpu_custom_call.1} parent=23 // pred_fallthru
          _
        %p101 = pneg %p32
        %p102 = pneg %p29
        %p103 = pneg %p58
        %p104 = pneg %p55
        %s105 = sand.u32 %s45, 1
        %s106 = scalar_lea.sflag [#allocation4], %s105
        %s107 = sand.u32 %s45, 1
        %s108 = smul.addr %s107, 8
        %s109 = scalar_lea.vmem [#allocation5], %s108
        %v110 = vld [vmem:[#allocation2] sm:$0xff]
        %111 = vst [vmem:[%s109] sm:$0xff] %v110
        %s112 = sand.u32 %s45, 1
        %s113 = scalar_lea.sflag [#allocation4], %s112
        %s114 = sand.u32 %s45, 1
        %s115 = smul.addr %s114, 8
        %s116 = scalar_lea.vmem [#allocation5], %s115
        // Predicated region
        $region29: #{tpu_custom_call.1} parent=23 // pred_check
          %p117 = pneg %p55
        $region30: #{tpu_custom_call.1} parent=23 // pred_check_branch
          %119 = sbr.rel (%p117) target = $region32
        $region31: #{tpu_custom_call.1} parent=23 // pred_region
          %121 = vsyncadd %s113, 0
          %s122 = smul.addr %s16, 8
          %s123 = scalar_lea.hbm %s1, %s122
          %s125 = sshll.u32 %s116, 4
          %s126 = int_to_ptr.vmem [resolvable:$true] %s125
          %s127 = sshll.u32 %s123, 4
          %s128 = int_to_ptr.hbm [resolvable:$true] %s127
          %130 = dma.vmem_to_hbm [thread:$0]  %s126, 128, %s128, %s113
        $region32: #{tpu_custom_call.1} parent=23 // pred_fallthru
          _
      $region24: #{tpu_custom_call.1} parent=5 // pred_fallthru
        _
      %p131 = scmp.le.s32.totalorder 2, %s11
      // Predicated region
      $region33: #{tpu_custom_call.1} parent=5 // pred_check
        %p132 = pneg %p131
      $region34: #{tpu_custom_call.1} parent=5 // pred_check_branch
        %134 = sbr.rel (%p132) target = $region36
      $region35: #{tpu_custom_call.1} parent=5 // pred_region
        %s135 = ssub.s32 %s11, 2
        // Predicated region
        $region37: #{tpu_custom_call.1} parent=35 // pred_check
          %p136 = pneg %p61
        $region38: #{tpu_custom_call.1} parent=35 // pred_check_branch
          %138 = sbr.rel (%p136) target = $region40
        $region39: #{tpu_custom_call.1} parent=35 // pred_region
          %s139 = sand.u32 %s46, 1
          %s140 = scalar_lea.sflag [#allocation4], %s139
          %s141 = sand.u32 %s46, 1
          %s142 = smul.addr %s141, 8
          %s143 = scalar_lea.vmem [#allocation5], %s142
          %145 = dma.done %s140, 128
        $region40: #{tpu_custom_call.1} parent=35 // pred_fallthru
          _
      $region36: #{tpu_custom_call.1} parent=5 // pred_fallthru
        _
    $region6: #{tpu_custom_call.1} parent=1 // loop_footer
      %s15 = sadd.s32 1, %s11
    $region7: #{tpu_custom_call.1} parent=1 // loop_footer_branch
      %10 = sbr.rel target = $region3
    $region8: #{tpu_custom_call.1} parent=1 // loop_exit
      _
    %146 = vsyncpa [#allocation3], 1
    %s147 = scalar_lea.sflag [#allocation3], 1
    %148 = vsyncpa %s147, 1
    %149 = vsyncpa [#allocation4], 1
    %s150 = scalar_lea.sflag [#allocation4], 1
    %151 = vsyncpa %s150, 1

// kernel: bert_adapter_decoder_layer.9
$region0: #{bert_adapter_decoder_layer.9}
  #allocation0 [shape = 'u32[]', space=smem, size = 0x4, offset = 0x4, fixed_abs, tag = 'smem constant byte address 0x4 - core index']
  #allocation1 [shape = 'u32[72,128]{1,0:T(1,128)}', space=vmem, size = 0x9000, scoped, tag = 'internal scratch']
  %s0 = inlined_call_operand.hbm [shape: f32[16,32], index: 0, kind: input, shape index: {}]
  %s1 = inlined_call_operand.vmem [shape: bf16[32,96], index: 1, kind: input, shape index: {}]
  %s2 = inlined_call_operand.vmem [shape: f32[1,96], index: 2, kind: input, shape index: {}]
  %s3 = inlined_call_operand.vmem [shape: bf16[16,32], index: 3, kind: output, shape index: {0}]
  %s4 = inlined_call_operand.vmem [shape: bf16[16,64], index: 4, kind: output, shape index: {1}]
  %5 = xla_tuple %s3, %s4
  %s6 = sld [smem:[#allocation0]]
  $region34: #{bert_adapter_decoder_layer.9} parent=0
    _
  %s8 = ssub.s32 1, %s6
  %s9 = scalar_select 0, %s8, %s6
  $region1: #{bert_adapter_decoder_layer.9} parent=0
    #allocation2 [shape = 'u8[8192]{0}', space=vmem, size = 0x2000, scoped, tag = 'input window, operand 0, single buffered']
    #allocation3 [shape = 's32[1]{0}', space=sflag, size = 0x4, scoped, tag = 'scoped memory for bert_adapter_decoder_layer.9']
    %10 = vsyncpa [#allocation3], 0
    // Predicated region
    $region2: #{bert_adapter_decoder_layer.9} parent=1 // pred_check
      _
    $region3: #{bert_adapter_decoder_layer.9} parent=1 // pred_check_branch
      %12 = sbr.rel (0) target = $region5
    $region4: #{bert_adapter_decoder_layer.9} parent=1 // pred_region
      %14 = vsyncadd [#allocation3], 0
      %s15 = sshll.u32 %s0, 4
      %s16 = int_to_ptr.hbm [resolvable:$true] %s15
      %s17 = sshll.u32 [#allocation2], 4
      %s18 = int_to_ptr.vmem [resolvable:$true] %s17
      %23 = dma.hbm_to_vmem [thread:$0]  %s16, 256, %s18, [#allocation3], 128, 128, 8
    $region5: #{bert_adapter_decoder_layer.9} parent=1 // pred_fallthru
      _
    // Predicated region
    $region6: #{bert_adapter_decoder_layer.9} parent=1 // pred_check
      _
    $region7: #{bert_adapter_decoder_layer.9} parent=1 // pred_check_branch
      %25 = sbr.rel (0) target = $region9
    $region8: #{bert_adapter_decoder_layer.9} parent=1 // pred_region
      _
    $region9: #{bert_adapter_decoder_layer.9} parent=1 // pred_fallthru
      _
    // Predicated region
    $region10: #{bert_adapter_decoder_layer.9} parent=1 // pred_check
      _
    $region11: #{bert_adapter_decoder_layer.9} parent=1 // pred_check_branch
      %27 = sbr.rel (0) target = $region13
    $region12: #{bert_adapter_decoder_layer.9} parent=1 // pred_region
      _
    $region13: #{bert_adapter_decoder_layer.9} parent=1 // pred_fallthru
      _
    // Predicated region
    $region14: #{bert_adapter_decoder_layer.9} parent=1 // pred_check
      _
    $region15: #{bert_adapter_decoder_layer.9} parent=1 // pred_check_branch
      %29 = sbr.rel (0) target = $region17
    $region16: #{bert_adapter_decoder_layer.9} parent=1 // pred_region
      %31 = dma.done [#allocation3], 256
    $region17: #{bert_adapter_decoder_layer.9} parent=1 // pred_fallthru
      _
    %v33 = vld [vmem:[#allocation2] sm:$0xff]
    %v34 = vld [vmem:[#allocation2 + $0x8] sm:$0xff]
    %v35 = vpack.c.bf16 %v34, %v33
    %v36 = vld [vmem:[%s1] sm:$0xf]
    %v37 = vld [vmem:[%s1 + $0x4] sm:$0xf]
    %v38 = vld [vmem:[%s1 + $0x8] sm:$0xf]
    %v39 = vld [vmem:[%s1 + $0xc] sm:$0xf]
    %v40 = vld [vmem:[%s2] sm:$0x1]
    %v42 = vperm.slane %v40, 0
    %v48 = vunpack.c.l.b16 %v36
    %v49 = vunpack.c.l.b16 %v37
    %v50 = vunpack.c.l.b16 %v38
    %v51 = vunpack.c.l.b16 %v39
    %v52 = vpack.c.b16 %v49, %v48
    %v53 = vpack.c.b16 %v51, %v50
    %vm56 = vcmask 261120
    %v58 = vsel %vm56, %v35, 0
    %60 = vmatpush.bf16.msra.mxu0 0
    %61 = vmatpush.bf16.msra.mxu0 0
    %62 = vmatpush.bf16.msra.mxu0 0
    %63 = vmatpush.bf16.msra.mxu0 0
    %64 = vmatpush.bf16.msra.mxu0 0
    %65 = vmatpush.bf16.msra.mxu0 0
    %66 = vmatpush.bf16.msra.mxu0 %v53
    %67 = vmatpush.bf16.msra.mxu0 %v52
    %68 = vmatmul.bf16.gmra.mxu0 %v58
    %v69 = vpop.f32.mrf.mxu0
    %v70 = vadd.f32 %v42, %v69
    %v71 = vpop.f32.mrf.mxu0
    %v72 = vadd.f32 %v42, %v71
    %73 = vdwg.mxu0
    %v74 = vpack.c.bf16 %v70, %v70
    %v75 = vpack.c.bf16 %v72, %v72
    %vm76 = vcmask 257024
    %77 = vst.msk [vmem:[%s3] sm:$0xf] %vm76, %v74
    %78 = vst.msk [vmem:[%s3 + $0x4] sm:$0xf] %vm76, %v75
    %81 = vrot.lane.b32.xlu0 %v74, 96
    %v82 = vpop.permute.xlu0 %81
    %83 = vrot.lane.b32.xlu0 %v75, 96
    %v84 = vpop.permute.xlu0 %83
    %vm87 = vcmask 519168
    %88 = vst.msk [vmem:[%s4] sm:$0xf] %vm87, %v82
    %89 = vst.msk [vmem:[%s4 + $0x4] sm:$0xf] %vm87, %v84
    // Predicated region
    $region18: #{bert_adapter_decoder_layer.9} parent=1 // pred_check
      _
    $region19: #{bert_adapter_decoder_layer.9} parent=1 // pred_check_branch
      %91 = sbr.rel (0) target = $region21
    $region20: #{bert_adapter_decoder_layer.9} parent=1 // pred_region
      _
    $region21: #{bert_adapter_decoder_layer.9} parent=1 // pred_fallthru
      _
    // Predicated region
    $region22: #{bert_adapter_decoder_layer.9} parent=1 // pred_check
      _
    $region23: #{bert_adapter_decoder_layer.9} parent=1 // pred_check_branch
      %93 = sbr.rel (0) target = $region25
    $region24: #{bert_adapter_decoder_layer.9} parent=1 // pred_region
      _
    $region25: #{bert_adapter_decoder_layer.9} parent=1 // pred_fallthru
      _
    // Predicated region
    $region26: #{bert_adapter_decoder_layer.9} parent=1 // pred_check
      _
    $region27: #{bert_adapter_decoder_layer.9} parent=1 // pred_check_branch
      %95 = sbr.rel (0) target = $region29
    $region28: #{bert_adapter_decoder_layer.9} parent=1 // pred_region
      _
    $region29: #{bert_adapter_decoder_layer.9} parent=1 // pred_fallthru
      _
    // Predicated region
    $region30: #{bert_adapter_decoder_layer.9} parent=1 // pred_check
      _
    $region31: #{bert_adapter_decoder_layer.9} parent=1 // pred_check_branch
      %97 = sbr.rel (0) target = $region33
    $region32: #{bert_adapter_decoder_layer.9} parent=1 // pred_region
      _
    $region33: #{bert_adapter_decoder_layer.9} parent=1 // pred_fallthru
      _
    %98 = vsyncpa [#allocation3], 1

// kernel: bert_adapter_decoder_layer.11
$region0: #{bert_adapter_decoder_layer.11}
  #allocation0 [shape = 'u32[]', space=smem, size = 0x4, offset = 0x4, fixed_abs, tag = 'smem constant byte address 0x4 - core index']
  #allocation1 [shape = 'u32[72,128]{1,0:T(1,128)}', space=vmem, size = 0x9000, scoped, tag = 'internal scratch']
  %s0 = inlined_call_operand.vmem [shape: bf16[16,32], index: 0, kind: input, shape index: {}]
  %s1 = inlined_call_operand.hbm [shape: f32[16,32], index: 1, kind: input, shape index: {}]
  %s2 = inlined_call_operand.hbm [shape: bf16[32,32], index: 2, kind: input, shape index: {}]
  %s3 = inlined_call_operand.vmem [shape: f32[1,32], index: 3, kind: input, shape index: {}]
  %s4 = inlined_call_operand.vmem [shape: f32[1,32], index: 4, kind: input, shape index: {}]
  %s5 = inlined_call_operand.vmem [shape: f32[1,32], index: 5, kind: input, shape index: {}]
  %s6 = inlined_call_operand.vmem [shape: bf16[16,32], index: 6, kind: output, shape index: {}]
  %s7 = sld [smem:[#allocation0]]
  $region42: #{bert_adapter_decoder_layer.11} parent=0
    _
  %s9 = ssub.s32 1, %s7
  %s10 = scalar_select 0, %s9, %s7
  $region1: #{bert_adapter_decoder_layer.11} parent=0
    #allocation2 [shape = 'u8[8192]{0}', space=vmem, size = 0x2000, scoped, tag = 'input window, operand 1, single buffered']
    #allocation3 [shape = 's32[1]{0}', space=sflag, size = 0x4, scoped, tag = 'scoped memory for bert_adapter_decoder_layer.11']
    #allocation4 [shape = 'u8[8192]{0}', space=vmem, size = 0x2000, scoped, tag = 'input window, operand 2, single buffered']
    #allocation5 [shape = 's32[1]{0}', space=sflag, size = 0x4, scoped, tag = 'scoped memory for bert_adapter_decoder_layer.11']
    %11 = vsyncpa [#allocation3], 0
    %12 = vsyncpa [#allocation5], 0
    // Predicated region
    $region2: #{bert_adapter_decoder_layer.11} parent=1 // pred_check
      _
    $region3: #{bert_adapter_decoder_layer.11} parent=1 // pred_check_branch
      %14 = sbr.rel (0) target = $region5
    $region4: #{bert_adapter_decoder_layer.11} parent=1 // pred_region
      _
    $region5: #{bert_adapter_decoder_layer.11} parent=1 // pred_fallthru
      _
    // Predicated region
    $region6: #{bert_adapter_decoder_layer.11} parent=1 // pred_check
      _
    $region7: #{bert_adapter_decoder_layer.11} parent=1 // pred_check_branch
      %16 = sbr.rel (0) target = $region9
    $region8: #{bert_adapter_decoder_layer.11} parent=1 // pred_region
      %18 = vsyncadd [#allocation3], 0
      %s19 = sshll.u32 %s1, 4
      %s20 = int_to_ptr.hbm [resolvable:$true] %s19
      %s21 = sshll.u32 [#allocation2], 4
      %s22 = int_to_ptr.vmem [resolvable:$true] %s21
      %27 = dma.hbm_to_vmem [thread:$0]  %s20, 256, %s22, [#allocation3], 128, 128, 8
    $region9: #{bert_adapter_decoder_layer.11} parent=1 // pred_fallthru
      _
    // Predicated region
    $region10: #{bert_adapter_decoder_layer.11} parent=1 // pred_check
      _
    $region11: #{bert_adapter_decoder_layer.11} parent=1 // pred_check_branch
      %29 = sbr.rel (0) target = $region13
    $region12: #{bert_adapter_decoder_layer.11} parent=1 // pred_region
      %31 = vsyncadd [#allocation5], 0
      %s32 = sshll.u32 %s2, 4
      %s33 = int_to_ptr.hbm [resolvable:$true] %s32
      %s34 = sshll.u32 [#allocation4], 4
      %s35 = int_to_ptr.vmem [resolvable:$true] %s34
      %40 = dma.hbm_to_vmem [thread:$0]  %s33, 256, %s35, [#allocation5], 64, 64, 4
    $region13: #{bert_adapter_decoder_layer.11} parent=1 // pred_fallthru
      _
    // Predicated region
    $region14: #{bert_adapter_decoder_layer.11} parent=1 // pred_check
      _
    $region15: #{bert_adapter_decoder_layer.11} parent=1 // pred_check_branch
      %42 = sbr.rel (0) target = $region17
    $region16: #{bert_adapter_decoder_layer.11} parent=1 // pred_region
      _
    $region17: #{bert_adapter_decoder_layer.11} parent=1 // pred_fallthru
      _
    // Predicated region
    $region18: #{bert_adapter_decoder_layer.11} parent=1 // pred_check
      _
    $region19: #{bert_adapter_decoder_layer.11} parent=1 // pred_check_branch
      %44 = sbr.rel (0) target = $region21
    $region20: #{bert_adapter_decoder_layer.11} parent=1 // pred_region
      _
    $region21: #{bert_adapter_decoder_layer.11} parent=1 // pred_fallthru
      _
    // Predicated region
    $region22: #{bert_adapter_decoder_layer.11} parent=1 // pred_check
      _
    $region23: #{bert_adapter_decoder_layer.11} parent=1 // pred_check_branch
      %46 = sbr.rel (0) target = $region25
    $region24: #{bert_adapter_decoder_layer.11} parent=1 // pred_region
      _
    $region25: #{bert_adapter_decoder_layer.11} parent=1 // pred_fallthru
      _
    // Predicated region
    $region26: #{bert_adapter_decoder_layer.11} parent=1 // pred_check
      _
    $region27: #{bert_adapter_decoder_layer.11} parent=1 // pred_check_branch
      %48 = sbr.rel (0) target = $region29
    $region28: #{bert_adapter_decoder_layer.11} parent=1 // pred_region
      %50 = dma.done [#allocation3], 256
    $region29: #{bert_adapter_decoder_layer.11} parent=1 // pred_fallthru
      _
    // Predicated region
    $region30: #{bert_adapter_decoder_layer.11} parent=1 // pred_check
      _
    $region31: #{bert_adapter_decoder_layer.11} parent=1 // pred_check_branch
      %52 = sbr.rel (0) target = $region33
    $region32: #{bert_adapter_decoder_layer.11} parent=1 // pred_region
      %54 = dma.done [#allocation5], 256
    $region33: #{bert_adapter_decoder_layer.11} parent=1 // pred_fallthru
      _
    %v56 = vld [vmem:[%s0] sm:$0xf]
    %v57 = vld [vmem:[%s0 + $0x4] sm:$0xf]
    %v58 = vld [vmem:[#allocation4] sm:$0xf]
    %v59 = vld [vmem:[#allocation4 + $0x4] sm:$0xf]
    %v60 = vld [vmem:[#allocation4 + $0x8] sm:$0xf]
    %v61 = vld [vmem:[#allocation4 + $0xc] sm:$0xf]
    %v62 = vld [vmem:[%s3] sm:$0x1]
    %v64 = vperm.slane %v62, 0
    %v68 = vunpack.c.l.b16 %v56
    %v69 = vunpack.c.l.b16 %v57
    %v70 = vpack.c.b16 %v69, %v68
    %v75 = vunpack.c.l.b16 %v58
    %v76 = vunpack.c.l.b16 %v59
    %v77 = vunpack.c.l.b16 %v60
    %v78 = vunpack.c.l.b16 %v61
    %v79 = vpack.c.b16 %v76, %v75
    %v80 = vpack.c.b16 %v78, %v77
    %vm83 = vcmask 261120
    %v85 = vsel %vm83, %v70, 0
    %87 = vmatpush.bf16.msra.mxu0 0
    %88 = vmatpush.bf16.msra.mxu0 0
    %89 = vmatpush.bf16.msra.mxu0 0
    %90 = vmatpush.bf16.msra.mxu0 0
    %91 = vmatpush.bf16.msra.mxu0 0
    %92 = vmatpush.bf16.msra.mxu0 0
    %93 = vmatpush.bf16.msra.mxu0 %v80
    %94 = vmatpush.bf16.msra.mxu0 %v79
    %95 = vmatmul.bf16.gmra.mxu0 %v85
    %v96 = vpop.f32.mrf.mxu0
    %v97 = vadd.f32 %v64, %v96
    %v98 = vpop.f32.mrf.mxu0
    %v99 = vadd.f32 %v64, %v98
    %100 = vdwg.mxu0
    %v101 = vld [vmem:[#allocation2] sm:$0xff]
    %v102 = vld [vmem:[#allocation2 + $0x8] sm:$0xff]
    %v103 = vadd.f32 %v97, %v101
    %v104 = vadd.f32 %v99, %v102
    %v105 = vsel %vm83, %v103, 0.0
    %106 = vadd.xlane.f32.xlu0 %v105
    %v107 = vpop.xlane.xlu0 %106
    %v108 = vsel %vm83, %v104, 0.0
    %109 = vadd.xlane.f32.xlu0 %v108
    %v110 = vpop.xlane.xlu0 %109
    %v111 = vrcp.pop 32.0
    %v112 = vmul.f32 32.0, %v111
    %v113 = vsub.f32 1.0, %v112
    %v114 = vmul.f32 %v111, %v113
    %v115 = vadd.f32 %v111, %v114
    %vm116 = vweird.f32 %v111
    %v117 = vsel %vm116, %v111, %v115
    %v118 = vmul.f32 %v107, %v117
    %v119 = vmul.f32 %v110, %v117
    %v120 = vsub.f32 %v103, %v118
    %v121 = vsub.f32 %v104, %v119
    %v122 = vmul.f32 %v120, %v120
    %v123 = vmul.f32 %v121, %v121
    %v124 = vsel %vm83, %v122, 0.0
    %125 = vadd.xlane.f32.xlu0 %v124
    %v126 = vpop.xlane.xlu0 %125
    %v127 = vsel %vm83, %v123, 0.0
    %128 = vadd.xlane.f32.xlu0 %v127
    %v129 = vpop.xlane.xlu0 %128
    %v130 = vmul.f32 %v126, %v117
    %v131 = vmul.f32 %v129, %v117
    %v132 = vadd.f32 %v130, 1e-12
    %v133 = vadd.f32 %v131, 1e-12
    %v134 = vrsqrt.pop %v132
    %v135 = vmul.f32 %v134, %v132
    %v136 = vmul.f32 %v135, %v134
    %v137 = vmul.f32 0.5, %v136
    %v138 = vsub.f32 1.5, %v137
    %v139 = vmul.f32 %v134, %v138
    %vm140 = vweird.f32 %v132
    %vm141 = vweird.f32 %v134
    %vm142 = vmor %vm140, %vm141
    %v143 = vsel %vm142, %v134, %v139
    %v144 = vrsqrt.pop %v133
    %v145 = vmul.f32 %v144, %v133
    %v146 = vmul.f32 %v145, %v144
    %v147 = vmul.f32 0.5, %v146
    %v148 = vsub.f32 1.5, %v147
    %v149 = vmul.f32 %v144, %v148
    %vm150 = vweird.f32 %v133
    %vm151 = vweird.f32 %v144
    %vm152 = vmor %vm150, %vm151
    %v153 = vsel %vm152, %v144, %v149
    %v154 = vmul.f32 %v120, %v143
    %v155 = vmul.f32 %v121, %v153
    %v156 = vld [vmem:[%s4] sm:$0x1]
    %v158 = vperm.slane %v156, 0
    %v160 = vmul.f32 %v154, %v158
    %v161 = vmul.f32 %v155, %v158
    %v162 = vld [vmem:[%s5] sm:$0x1]
    %v164 = vperm.slane %v162, 0
    %v166 = vadd.f32 %v160, %v164
    %v167 = vadd.f32 %v161, %v164
    %v168 = vpack.c.bf16 %v166, %v166
    %v169 = vpack.c.bf16 %v167, %v167
    %vm170 = vcmask 257024
    %171 = vst.msk [vmem:[%s6] sm:$0xf] %vm170, %v168
    %172 = vst.msk [vmem:[%s6 + $0x4] sm:$0xf] %vm170, %v169
    // Predicated region
    $region34: #{bert_adapter_decoder_layer.11} parent=1 // pred_check
      _
    $region35: #{bert_adapter_decoder_layer.11} parent=1 // pred_check_branch
      %174 = sbr.rel (0) target = $region37
    $region36: #{bert_adapter_decoder_layer.11} parent=1 // pred_region
      _
    $region37: #{bert_adapter_decoder_layer.11} parent=1 // pred_fallthru
      _
    // Predicated region
    $region38: #{bert_adapter_decoder_layer.11} parent=1 // pred_check
      _
    $region39: #{bert_adapter_decoder_layer.11} parent=1 // pred_check_branch
      %176 = sbr.rel (0) target = $region41
    $region40: #{bert_adapter_decoder_layer.11} parent=1 // pred_region
      _
    $region41: #{bert_adapter_decoder_layer.11} parent=1 // pred_fallthru
      _
    %177 = vsyncpa [#allocation3], 1
    %178 = vsyncpa [#allocation5], 1

// kernel: bert_adapter_decoder_layer.10
$region0: #{bert_adapter_decoder_layer.10}
  #allocation0 [shape = 'u32[]', space=smem, size = 0x4, offset = 0x4, fixed_abs, tag = 'smem constant byte address 0x4 - core index']
  #allocation1 [shape = 'u32[72,128]{1,0:T(1,128)}', space=vmem, size = 0x9000, scoped, tag = 'internal scratch']
  %s0 = inlined_call_operand.vmem [shape: bf16[2,8,32], index: 0, kind: input, shape index: {}]
  %s1 = inlined_call_operand.vmem [shape: bf16[2,8,64], index: 1, kind: input, shape index: {}]
  %s2 = inlined_call_operand.vmem [shape: f32[2,1,8], index: 2, kind: input, shape index: {}]
  %s3 = inlined_call_operand.vmem [shape: bf16[2,8,32], index: 3, kind: output, shape index: {}]
  %s4 = sld [smem:[#allocation0]]
  $region45: #{bert_adapter_decoder_layer.10} parent=0
    _
  %s6 = ssub.s32 1, %s4
  %s7 = scalar_select 0, %s6, %s4
  loop: start=0, step=1, limit=4
  $region2: #{bert_adapter_decoder_layer.10} parent=0 // loop_pre_header
    _
  $region3: #{bert_adapter_decoder_layer.10} parent=0 // loop_header
    %s9 = sphi 0, %s13
    %p10 = scmp.ge.s32.totalorder %s9, 4
    %s16 = sphi 0, %s28
    %s17 = sphi 0, %s24
    %s18 = sphi 0, %s16
    %s19 = sphi 0, %s17
    %s20 = sphi 0, %s18
    %s21 = sphi 0, %s19
    %s33 = sphi 0, %s35
    %s36 = sphi 0, %s33
    %s37 = sphi 0, %s36
    %s53 = sphi 0, %s37
    %s59 = sphi 0, %s61
    %s62 = sphi 0, %s59
    %s63 = sphi 0, %s62
    %s79 = sphi 0, %s63
    %s85 = sphi 0, %s87
    %s88 = sphi 0, %s85
    %s89 = sphi 0, %s88
    %s105 = sphi 0, %s89
    %s113 = sphi 0, %s115
    %s116 = sphi 0, %s113
    %s117 = sphi 0, %s116
    %s133 = sphi 0, %s117
  $region4: #{bert_adapter_decoder_layer.10} parent=0 // loop_header_branch
    %12 = sbr.rel (%p10) target = $region8
  $region5: #{bert_adapter_decoder_layer.10} parent=0 // loop_body
    %s14 = ssub.s32 %s9, 1
    %s15 = ssub.s32 %s9, 2
    %s22 = sadd.s32 1, %s17
    %p23 = scmp.ge.s32.totalorder %s22, 1
    %s24 = scalar_select %p23, 0, %s22
    %s25 = sadd.s32 1, %s16
    %s26 = scalar_select %p23, %s25, %s16
    %p27 = scmp.ge.s32.totalorder %s26, 2
    %s28 = scalar_select %p27, 0, %s26
    %s29 = ssub.s32 %s16, %s28
    %s30 = ssub.s32 %s17, %s24
    %s31 = sor.u32 %s29, %s30
    %p32 = scmp.eq.s32.totalorder %s31, 0
    %s34 = sadd.s32 %s33, 1
    %s35 = scalar_select %p32, %s33, %s34
    %p38 = pneg %p32
    %p39 = scmp.eq.s32.totalorder %s9, 1
    %p40 = por %p38, %p39
    %p41 = scmp.ne.s32.totalorder %s33, %s36
    %p42 = scmp.eq.s32.totalorder %s9, 0
    %p43 = por %p41, %p42
    %p44 = scmp.ne.s32.totalorder %s33, %s36
    %p45 = scmp.eq.s32.totalorder %s14, 1
    %p46 = por %p44, %p45
    %p47 = scmp.ne.s32.totalorder %s36, %s37
    %p48 = scmp.eq.s32.totalorder %s14, 0
    %p49 = por %p47, %p48
    %p50 = scmp.ne.s32.totalorder %s36, %s37
    %p51 = scmp.eq.s32.totalorder %s15, 1
    %p52 = por %p50, %p51
    %p54 = scmp.ne.s32.totalorder %s37, %s53
    %p55 = scmp.eq.s32.totalorder %s15, 0
    %p56 = por %p54, %p55
    %s57 = ssub.s32 %s16, %s28
    %p58 = scmp.eq.s32.totalorder %s57, 0
    %s60 = sadd.s32 %s59, 1
    %s61 = scalar_select %p58, %s59, %s60
    %p64 = pneg %p58
    %p65 = scmp.eq.s32.totalorder %s9, 1
    %p66 = por %p64, %p65
    %p67 = scmp.ne.s32.totalorder %s59, %s62
    %p68 = scmp.eq.s32.totalorder %s9, 0
    %p69 = por %p67, %p68
    %p70 = scmp.ne.s32.totalorder %s59, %s62
    %p71 = scmp.eq.s32.totalorder %s14, 1
    %p72 = por %p70, %p71
    %p73 = scmp.ne.s32.totalorder %s62, %s63
    %p74 = scmp.eq.s32.totalorder %s14, 0
    %p75 = por %p73, %p74
    %p76 = scmp.ne.s32.totalorder %s62, %s63
    %p77 = scmp.eq.s32.totalorder %s15, 1
    %p78 = por %p76, %p77
    %p80 = scmp.ne.s32.totalorder %s63, %s79
    %p81 = scmp.eq.s32.totalorder %s15, 0
    %p82 = por %p80, %p81
    %s83 = ssub.s32 %s16, %s28
    %p84 = scmp.eq.s32.totalorder %s83, 0
    %s86 = sadd.s32 %s85, 1
    %s87 = scalar_select %p84, %s85, %s86
    %p90 = pneg %p84
    %p91 = scmp.eq.s32.totalorder %s9, 1
    %p92 = por %p90, %p91
    %p93 = scmp.ne.s32.totalorder %s85, %s88
    %p94 = scmp.eq.s32.totalorder %s9, 0
    %p95 = por %p93, %p94
    %p96 = scmp.ne.s32.totalorder %s85, %s88
    %p97 = scmp.eq.s32.totalorder %s14, 1
    %p98 = por %p96, %p97
    %p99 = scmp.ne.s32.totalorder %s88, %s89
    %p100 = scmp.eq.s32.totalorder %s14, 0
    %p101 = por %p99, %p100
    %p102 = scmp.ne.s32.totalorder %s88, %s89
    %p103 = scmp.eq.s32.totalorder %s15, 1
    %p104 = por %p102, %p103
    %p106 = scmp.ne.s32.totalorder %s89, %s105
    %p107 = scmp.eq.s32.totalorder %s15, 0
    %p108 = por %p106, %p107
    %s109 = ssub.s32 %s16, %s28
    %s110 = ssub.s32 %s17, %s24
    %s111 = sor.u32 %s109, %s110
    %p112 = scmp.eq.s32.totalorder %s111, 0
    %s114 = sadd.s32 %s113, 1
    %s115 = scalar_select %p112, %s113, %s114
    %p118 = pneg %p112
    %p119 = scmp.eq.s32.totalorder %s9, 1
    %p120 = por %p118, %p119
    %p121 = scmp.ne.s32.totalorder %s113, %s116
    %p122 = scmp.eq.s32.totalorder %s9, 0
    %p123 = por %p121, %p122
    %p124 = scmp.ne.s32.totalorder %s113, %s116
    %p125 = scmp.eq.s32.totalorder %s14, 1
    %p126 = por %p124, %p125
    %p127 = scmp.ne.s32.totalorder %s116, %s117
    %p128 = scmp.eq.s32.totalorder %s14, 0
    %p129 = por %p127, %p128
    %p130 = scmp.ne.s32.totalorder %s116, %s117
    %p131 = scmp.eq.s32.totalorder %s15, 1
    %p132 = por %p130, %p131
    %p134 = scmp.ne.s32.totalorder %s117, %s133
    %p135 = scmp.eq.s32.totalorder %s15, 0
    %p136 = por %p134, %p135
    %p137 = scmp.le.s32.totalorder 1, %s9
    %p138 = scmp.lt.s32.totalorder %s9, 3
    %p139 = pnand %p137, %p138
    %p140 = pneg %p139
    // Predicated region
    $region9: #{bert_adapter_decoder_layer.10} parent=5 // pred_check
      _
    $region10: #{bert_adapter_decoder_layer.10} parent=5 // pred_check_branch
      %142 = sbr.rel (%p139) target = $region12
    $region11: #{bert_adapter_decoder_layer.10} parent=5 // pred_region
      %s143 = ssub.s32 %s9, 1
    $region12: #{bert_adapter_decoder_layer.10} parent=5 // pred_fallthru
      _
    %p144 = scmp.lt.s32.totalorder %s9, 2
    // Predicated region
    $region13: #{bert_adapter_decoder_layer.10} parent=5 // pred_check
      %p145 = pneg %p144
    $region14: #{bert_adapter_decoder_layer.10} parent=5 // pred_check_branch
      %147 = sbr.rel (%p145) target = $region16
    $region15: #{bert_adapter_decoder_layer.10} parent=5 // pred_region
      // Predicated region
      $region17: #{bert_adapter_decoder_layer.10} parent=15 // pred_check
        %p148 = pneg %p43
      $region18: #{bert_adapter_decoder_layer.10} parent=15 // pred_check_branch
        %150 = sbr.rel (%p148) target = $region20
      $region19: #{bert_adapter_decoder_layer.10} parent=15 // pred_region
        %p151 = scmp.lt.s32.totalorder %s16, 1
        %s152 = scalar_select %p151, %s16, 1
        %p153 = scmp.lt.s32.totalorder %s17, 0
        %s154 = scalar_select %p153, %s17, 0
        %s155 = sadd.s32 %s154, %s152
        %s156 = smul.addr %s155, 4
        %s157 = scalar_lea.vmem %s0, %s156
      $region20: #{bert_adapter_decoder_layer.10} parent=15 // pred_fallthru
        _
      // Predicated region
      $region21: #{bert_adapter_decoder_layer.10} parent=15 // pred_check
        %p158 = pneg %p69
      $region22: #{bert_adapter_decoder_layer.10} parent=15 // pred_check_branch
        %160 = sbr.rel (%p158) target = $region24
      $region23: #{bert_adapter_decoder_layer.10} parent=15 // pred_region
        %p161 = scmp.lt.s32.totalorder %s16, 1
        %s162 = scalar_select %p161, %s16, 1
        %s163 = smul.addr %s162, 4
        %s164 = scalar_lea.vmem %s1, %s163
      $region24: #{bert_adapter_decoder_layer.10} parent=15 // pred_fallthru
        _
      // Predicated region
      $region25: #{bert_adapter_decoder_layer.10} parent=15 // pred_check
        %p165 = pneg %p95
      $region26: #{bert_adapter_decoder_layer.10} parent=15 // pred_check_branch
        %167 = sbr.rel (%p165) target = $region28
      $region27: #{bert_adapter_decoder_layer.10} parent=15 // pred_region
        %p168 = scmp.lt.s32.totalorder %s16, 1
        %s169 = scalar_select %p168, %s16, 1
        %s170 = scalar_lea.vmem %s2, %s169
      $region28: #{bert_adapter_decoder_layer.10} parent=15 // pred_fallthru
        _
    $region16: #{bert_adapter_decoder_layer.10} parent=5 // pred_fallthru
      _
    %p171 = scmp.le.s32.totalorder 1, %s9
    %p172 = scmp.lt.s32.totalorder %s9, 3
    %p173 = pnand %p171, %p172
    %p174 = pneg %p173
    // Predicated region
    $region29: #{bert_adapter_decoder_layer.10} parent=5 // pred_check
      _
    $region30: #{bert_adapter_decoder_layer.10} parent=5 // pred_check_branch
      %176 = sbr.rel (%p173) target = $region32
    $region31: #{bert_adapter_decoder_layer.10} parent=5 // pred_region
      %s177 = ssub.s32 %s9, 1
      %p178 = scmp.lt.s32.totalorder %s18, 1
      %s179 = scalar_select %p178, %s18, 1
      %p180 = scmp.lt.s32.totalorder %s19, 0
      %s181 = scalar_select %p180, %s19, 0
      %s182 = sadd.s32 %s181, %s179
      %s183 = smul.addr %s182, 4
      %s184 = scalar_lea.vmem %s0, %s183
      %p185 = pneg %p49
      %p186 = pneg %p46
      %p187 = scmp.lt.s32.totalorder %s18, 1
      %s188 = scalar_select %p187, %s18, 1
      %s189 = smul.addr %s188, 4
      %s190 = scalar_lea.vmem %s1, %s189
      %p191 = pneg %p75
      %p192 = pneg %p72
      %p193 = scmp.lt.s32.totalorder %s18, 1
      %s194 = scalar_select %p193, %s18, 1
      %s195 = scalar_lea.vmem %s2, %s194
      %p196 = pneg %p101
      %p197 = pneg %p98
      %p198 = pneg %p129
      %p199 = pneg %p126
      %p200 = scmp.lt.s32.totalorder %s18, 1
      %s201 = scalar_select %p200, %s18, 1
      %p202 = scmp.lt.s32.totalorder %s19, 0
      %s203 = scalar_select %p202, %s19, 0
      %s204 = sadd.s32 %s203, %s201
      %s205 = smul.addr %s204, 4
      %s206 = scalar_lea.vmem %s3, %s205
      %p207 = scmp.lt.s32.totalorder %s18, 1
      %s208 = scalar_select %p207, %s18, 1
      %p209 = scmp.lt.s32.totalorder %s19, 0
      %s210 = scalar_select %p209, %s19, 0
      %s211 = sadd.s32 %s210, %s208
      %s212 = smul.addr %s211, 4
      %s213 = scalar_lea.vmem %s0, %s212
      %p214 = scmp.lt.s32.totalorder %s18, 1
      %s215 = scalar_select %p214, %s18, 1
      %s216 = smul.addr %s215, 4
      %s217 = scalar_lea.vmem %s1, %s216
      %p218 = scmp.lt.s32.totalorder %s18, 1
      %s219 = scalar_select %p218, %s18, 1
      %s220 = scalar_lea.vmem %s2, %s219
      %p221 = scmp.lt.s32.totalorder %s18, 1
      %s222 = scalar_select %p221, %s18, 1
      %p223 = scmp.lt.s32.totalorder %s19, 0
      %s224 = scalar_select %p223, %s19, 0
      %s225 = sadd.s32 %s224, %s222
      %s226 = smul.addr %s225, 4
      %s227 = scalar_lea.vmem %s3, %s226
      %v229 = vld [vmem:[%s213] sm:$0xf]
      %v230 = vunpack.c.l.bf16 %v229
      %v231 = vmul.f32 %v230, 0.35355338
      %v232 = vld [vmem:[%s217] sm:$0xf]
      %v233 = vld [vmem:[%s220] sm:$0x1]
      %v234 = vpack.c.bf16 %v231, %v231
      %v236 = vperm.slane %v233, 0
      %vm238 = vcmask 64512
      %v240 = vsel %vm238, %v234, 0
      %v243 = vsel %vm238, %v232, 0
      %245 = vmatpush.bf16.xpose.msra.mxu0 0
      %246 = vmatpush.bf16.xpose.msra.mxu0 0
      %247 = vmatpush.bf16.xpose.msra.mxu0 0
      %248 = vmatpush.bf16.xpose.msra.mxu0 0
      %249 = vmatpush.bf16.xpose.msra.mxu0 0
      %250 = vmatpush.bf16.xpose.msra.mxu0 0
      %251 = vmatpush.bf16.xpose.msra.mxu0 0
      %252 = vmatpush.bf16.xpose.msra.mxu0 %v243
      %253 = vmatmul.bf16.gmra.mxu0 %v240
      %v254 = vpop.f32.mrf.mxu0
      %v255 = vadd.f32 %v236, %v254
      %v256 = vpop.f32.mrf.mxu0
      %257 = vdwg.mxu0
      %v258 = vsel %vm238, %v255, -inf
      %259 = vmax.xlane.f32.xlu0 %v258
      %v260 = vpop.xlane.xlu0 %259
      %v261 = vsub.f32 %v255, %v260
      %v262 = vmul.f32 %v261, 1.442695
      %v263 = vpow.pop %v262
      %v264 = vsel %vm238, %v263, 0.0
      %265 = vadd.xlane.f32.xlu0 %v264
      %v266 = vpop.xlane.xlu0 %265
      %v267 = vrcp.pop %v266
      %v268 = vmul.f32 %v263, %v267
      %v269 = vpack.c.bf16 %v268, %v268
      %v271 = vunpack.c.l.b16 %v232
      %v272 = vpack.c.b16 %v271, %v271
      %273 = vrot.lane.b32.xlu0 %v272, 96
      %v274 = vpop.permute.xlu0 %273
      %v276 = vsel %vm238, %v269, 0
      %vm278 = vcmask 1043456
      %v280 = vsel %vm278, %v274, 0
      %282 = vmatpush.bf16.msra.mxu0 0
      %283 = vmatpush.bf16.msra.mxu0 0
      %284 = vmatpush.bf16.msra.mxu0 0
      %285 = vmatpush.bf16.msra.mxu0 0
      %286 = vmatpush.bf16.msra.mxu0 0
      %287 = vmatpush.bf16.msra.mxu0 0
      %288 = vmatpush.bf16.msra.mxu0 0
      %289 = vmatpush.bf16.msra.mxu0 %v280
      %290 = vmatmul.bf16.gmra.mxu0 %v276
      %v291 = vpop.f32.mrf.mxu0
      %v292 = vadd.f32 0.0, %v291
      %v293 = vpop.f32.mrf.mxu0
      %294 = vdwg.mxu0
      %296 = vrot.lane.b32.xlu0 %v234, 120
      %v297 = vpop.permute.xlu0 %296
      %298 = vrot.lane.b32.xlu0 %v272, 120
      %v299 = vpop.permute.xlu0 %298
      %v301 = vsel %vm238, %v297, 0
      %v304 = vsel %vm238, %v299, 0
      %306 = vmatpush.bf16.xpose.msra.mxu0 0
      %307 = vmatpush.bf16.xpose.msra.mxu0 0
      %308 = vmatpush.bf16.xpose.msra.mxu0 0
      %309 = vmatpush.bf16.xpose.msra.mxu0 0
      %310 = vmatpush.bf16.xpose.msra.mxu0 0
      %311 = vmatpush.bf16.xpose.msra.mxu0 0
      %312 = vmatpush.bf16.xpose.msra.mxu0 0
      %313 = vmatpush.bf16.xpose.msra.mxu0 %v304
      %314 = vmatmul.bf16.gmra.mxu0 %v301
      %v315 = vpop.f32.mrf.mxu0
      %v316 = vadd.f32 %v236, %v315
      %v317 = vpop.f32.mrf.mxu0
      %318 = vdwg.mxu0
      %v319 = vsel %vm238, %v316, -inf
      %320 = vmax.xlane.f32.xlu0 %v319
      %v321 = vpop.xlane.xlu0 %320
      %v322 = vsub.f32 %v316, %v321
      %v323 = vmul.f32 %v322, 1.442695
      %v324 = vpow.pop %v323
      %v325 = vsel %vm238, %v324, 0.0
      %326 = vadd.xlane.f32.xlu0 %v325
      %v327 = vpop.xlane.xlu0 %326
      %v328 = vrcp.pop %v327
      %v329 = vmul.f32 %v324, %v328
      %v330 = vpack.c.bf16 %v329, %v329
      %331 = vrot.lane.b32.xlu0 %v272, 88
      %v332 = vpop.permute.xlu0 %331
      %v334 = vsel %vm238, %v330, 0
      %v337 = vsel %vm278, %v332, 0
      %339 = vmatpush.bf16.msra.mxu0 0
      %340 = vmatpush.bf16.msra.mxu0 0
      %341 = vmatpush.bf16.msra.mxu0 0
      %342 = vmatpush.bf16.msra.mxu0 0
      %343 = vmatpush.bf16.msra.mxu0 0
      %344 = vmatpush.bf16.msra.mxu0 0
      %345 = vmatpush.bf16.msra.mxu0 0
      %346 = vmatpush.bf16.msra.mxu0 %v337
      %347 = vmatmul.bf16.gmra.mxu0 %v334
      %v348 = vpop.f32.mrf.mxu0
      %v349 = vadd.f32 0.0, %v348
      %v350 = vpop.f32.mrf.mxu0
      %351 = vdwg.mxu0
      %352 = vrot.lane.b32.xlu0 %v234, 112
      %v353 = vpop.permute.xlu0 %352
      %354 = vrot.lane.b32.xlu0 %v272, 112
      %v355 = vpop.permute.xlu0 %354
      %v357 = vsel %vm238, %v353, 0
      %v360 = vsel %vm238, %v355, 0
      %362 = vmatpush.bf16.xpose.msra.mxu0 0
      %363 = vmatpush.bf16.xpose.msra.mxu0 0
      %364 = vmatpush.bf16.xpose.msra.mxu0 0
      %365 = vmatpush.bf16.xpose.msra.mxu0 0
      %366 = vmatpush.bf16.xpose.msra.mxu0 0
      %367 = vmatpush.bf16.xpose.msra.mxu0 0
      %368 = vmatpush.bf16.xpose.msra.mxu0 0
      %369 = vmatpush.bf16.xpose.msra.mxu0 %v360
      %370 = vmatmul.bf16.gmra.mxu0 %v357
      %v371 = vpop.f32.mrf.mxu0
      %v372 = vadd.f32 %v236, %v371
      %v373 = vpop.f32.mrf.mxu0
      %374 = vdwg.mxu0
      %v375 = vsel %vm238, %v372, -inf
      %376 = vmax.xlane.f32.xlu0 %v375
      %v377 = vpop.xlane.xlu0 %376
      %v378 = vsub.f32 %v372, %v377
      %v379 = vmul.f32 %v378, 1.442695
      %v380 = vpow.pop %v379
      %v381 = vsel %vm238, %v380, 0.0
      %382 = vadd.xlane.f32.xlu0 %v381
      %v383 = vpop.xlane.xlu0 %382
      %v384 = vrcp.pop %v383
      %v385 = vmul.f32 %v380, %v384
      %v386 = vpack.c.bf16 %v385, %v385
      %387 = vrot.lane.b32.xlu0 %v272, 80
      %v388 = vpop.permute.xlu0 %387
      %v390 = vsel %vm238, %v386, 0
      %v393 = vsel %vm278, %v388, 0
      %395 = vmatpush.bf16.msra.mxu0 0
      %396 = vmatpush.bf16.msra.mxu0 0
      %397 = vmatpush.bf16.msra.mxu0 0
      %398 = vmatpush.bf16.msra.mxu0 0
      %399 = vmatpush.bf16.msra.mxu0 0
      %400 = vmatpush.bf16.msra.mxu0 0
      %401 = vmatpush.bf16.msra.mxu0 0
      %402 = vmatpush.bf16.msra.mxu0 %v393
      %403 = vmatmul.bf16.gmra.mxu0 %v390
      %v404 = vpop.f32.mrf.mxu0
      %v405 = vadd.f32 0.0, %v404
      %v406 = vpop.f32.mrf.mxu0
      %407 = vdwg.mxu0
      %408 = vrot.lane.b32.xlu0 %v234, 104
      %v409 = vpop.permute.xlu0 %408
      %410 = vrot.lane.b32.xlu0 %v272, 104
      %v411 = vpop.permute.xlu0 %410
      %v413 = vsel %vm238, %v409, 0
      %v416 = vsel %vm238, %v411, 0
      %418 = vmatpush.bf16.xpose.msra.mxu0 0
      %419 = vmatpush.bf16.xpose.msra.mxu0 0
      %420 = vmatpush.bf16.xpose.msra.mxu0 0
      %421 = vmatpush.bf16.xpose.msra.mxu0 0
      %422 = vmatpush.bf16.xpose.msra.mxu0 0
      %423 = vmatpush.bf16.xpose.msra.mxu0 0
      %424 = vmatpush.bf16.xpose.msra.mxu0 0
      %425 = vmatpush.bf16.xpose.msra.mxu0 %v416
      %426 = vmatmul.bf16.gmra.mxu0 %v413
      %v427 = vpop.f32.mrf.mxu0
      %v428 = vadd.f32 %v236, %v427
      %v429 = vpop.f32.mrf.mxu0
      %430 = vdwg.mxu0
      %v431 = vsel %vm238, %v428, -inf
      %432 = vmax.xlane.f32.xlu0 %v431
      %v433 = vpop.xlane.xlu0 %432
      %v434 = vsub.f32 %v428, %v433
      %v435 = vmul.f32 %v434, 1.442695
      %v436 = vpow.pop %v435
      %v437 = vsel %vm238, %v436, 0.0
      %438 = vadd.xlane.f32.xlu0 %v437
      %v439 = vpop.xlane.xlu0 %438
      %v440 = vrcp.pop %v439
      %v441 = vmul.f32 %v436, %v440
      %v442 = vpack.c.bf16 %v441, %v441
      %443 = vrot.lane.b32.xlu0 %v272, 72
      %v444 = vpop.permute.xlu0 %443
      %v446 = vsel %vm238, %v442, 0
      %v449 = vsel %vm278, %v444, 0
      %451 = vmatpush.bf16.msra.mxu0 0
      %452 = vmatpush.bf16.msra.mxu0 0
      %453 = vmatpush.bf16.msra.mxu0 0
      %454 = vmatpush.bf16.msra.mxu0 0
      %455 = vmatpush.bf16.msra.mxu0 0
      %456 = vmatpush.bf16.msra.mxu0 0
      %457 = vmatpush.bf16.msra.mxu0 0
      %458 = vmatpush.bf16.msra.mxu0 %v449
      %459 = vmatmul.bf16.gmra.mxu0 %v446
      %v460 = vpop.f32.mrf.mxu0
      %v461 = vadd.f32 0.0, %v460
      %v462 = vpop.f32.mrf.mxu0
      %463 = vdwg.mxu0
      %465 = vrot.lane.b32.xlu0 %v349, 8
      %v466 = vpop.permute.xlu0 %465
      %469 = vrot.lane.b32.xlu0 %v405, 16
      %v470 = vpop.permute.xlu0 %469
      %473 = vrot.lane.b32.xlu0 %v461, 24
      %v474 = vpop.permute.xlu0 %473
      %v476 = vsel %vm238, %v292, %v466
      %vm477 = vcmask 130048
      %v478 = vsel %vm477, %v476, %v470
      %vm479 = vcmask 195584
      %v480 = vsel %vm479, %v478, %v474
      %v481 = vpack.c.bf16 %v480, %v480
      %vm482 = vcmask 257024
      %483 = vst.msk [vmem:[%s227] sm:$0xf] %vm482, %v481
      %p484 = scmp.lt.s32.totalorder %s18, 1
      %s485 = scalar_select %p484, %s18, 1
      %p486 = scmp.lt.s32.totalorder %s19, 0
      %s487 = scalar_select %p486, %s19, 0
      %s488 = sadd.s32 %s487, %s485
      %s489 = smul.addr %s488, 4
      %s490 = scalar_lea.vmem %s3, %s489
      // Predicated region
      $region33: #{bert_adapter_decoder_layer.10} parent=31 // pred_check
        %p491 = pneg %p126
      $region34: #{bert_adapter_decoder_layer.10} parent=31 // pred_check_branch
        %493 = sbr.rel (%p491) target = $region36
      $region35: #{bert_adapter_decoder_layer.10} parent=31 // pred_region
        _
      $region36: #{bert_adapter_decoder_layer.10} parent=31 // pred_fallthru
        _
    $region32: #{bert_adapter_decoder_layer.10} parent=5 // pred_fallthru
      _
    %p494 = scmp.le.s32.totalorder 2, %s9
    // Predicated region
    $region37: #{bert_adapter_decoder_layer.10} parent=5 // pred_check
      %p495 = pneg %p494
    $region38: #{bert_adapter_decoder_layer.10} parent=5 // pred_check_branch
      %497 = sbr.rel (%p495) target = $region40
    $region39: #{bert_adapter_decoder_layer.10} parent=5 // pred_region
      %s498 = ssub.s32 %s9, 2
      // Predicated region
      $region41: #{bert_adapter_decoder_layer.10} parent=39 // pred_check
        %p499 = pneg %p132
      $region42: #{bert_adapter_decoder_layer.10} parent=39 // pred_check_branch
        %501 = sbr.rel (%p499) target = $region44
      $region43: #{bert_adapter_decoder_layer.10} parent=39 // pred_region
        %p502 = scmp.lt.s32.totalorder %s20, 1
        %s503 = scalar_select %p502, %s20, 1
        %p504 = scmp.lt.s32.totalorder %s21, 0
        %s505 = scalar_select %p504, %s21, 0
        %s506 = sadd.s32 %s505, %s503
        %s507 = smul.addr %s506, 4
        %s508 = scalar_lea.vmem %s3, %s507
      $region44: #{bert_adapter_decoder_layer.10} parent=39 // pred_fallthru
        _
    $region40: #{bert_adapter_decoder_layer.10} parent=5 // pred_fallthru
      _
  $region6: #{bert_adapter_decoder_layer.10} parent=0 // loop_footer
    %s13 = sadd.s32 1, %s9
  $region7: #{bert_adapter_decoder_layer.10} parent=0 // loop_footer_branch
    %8 = sbr.rel target = $region3
  $region8: #{bert_adapter_decoder_layer.10} parent=0 // loop_exit
    _

// kernel: bert_adapter_decoder_layer.13
$region0: #{bert_adapter_decoder_layer.13}
  #allocation0 [shape = 'u32[]', space=smem, size = 0x4, offset = 0x4, fixed_abs, tag = 'smem constant byte address 0x4 - core index']
  #allocation1 [shape = 'u32[72,128]{1,0:T(1,128)}', space=vmem, size = 0x9000, scoped, tag = 'internal scratch']
  %s0 = inlined_call_operand.vmem [shape: bf16[16,32], index: 0, kind: input, shape index: {}]
  %s1 = inlined_call_operand.vmem [shape: bf16[32,32], index: 1, kind: input, shape index: {}]
  %s2 = inlined_call_operand.vmem [shape: f32[1,32], index: 2, kind: input, shape index: {}]
  %s3 = inlined_call_operand.vmem [shape: bf16[16,32], index: 3, kind: output, shape index: {}]
  %s4 = sld [smem:[#allocation0]]
  $region22: #{bert_adapter_decoder_layer.13} parent=0
    _
  %s6 = ssub.s32 1, %s4
  %s7 = scalar_select 0, %s6, %s4
  // Predicated region
  $region2: #{bert_adapter_decoder_layer.13} parent=0 // pred_check
    _
  $region3: #{bert_adapter_decoder_layer.13} parent=0 // pred_check_branch
    %9 = sbr.rel (0) target = $region5
  $region4: #{bert_adapter_decoder_layer.13} parent=0 // pred_region
    _
  $region5: #{bert_adapter_decoder_layer.13} parent=0 // pred_fallthru
    _
  // Predicated region
  $region6: #{bert_adapter_decoder_layer.13} parent=0 // pred_check
    _
  $region7: #{bert_adapter_decoder_layer.13} parent=0 // pred_check_branch
    %11 = sbr.rel (0) target = $region9
  $region8: #{bert_adapter_decoder_layer.13} parent=0 // pred_region
    _
  $region9: #{bert_adapter_decoder_layer.13} parent=0 // pred_fallthru
    _
  // Predicated region
  $region10: #{bert_adapter_decoder_layer.13} parent=0 // pred_check
    _
  $region11: #{bert_adapter_decoder_layer.13} parent=0 // pred_check_branch
    %13 = sbr.rel (0) target = $region13
  $region12: #{bert_adapter_decoder_layer.13} parent=0 // pred_region
    _
  $region13: #{bert_adapter_decoder_layer.13} parent=0 // pred_fallthru
    _
  %v15 = vld [vmem:[%s0] sm:$0xf]
  %v16 = vld [vmem:[%s0 + $0x4] sm:$0xf]
  %v17 = vld [vmem:[%s1] sm:$0xf]
  %v18 = vld [vmem:[%s1 + $0x4] sm:$0xf]
  %v19 = vld [vmem:[%s1 + $0x8] sm:$0xf]
  %v20 = vld [vmem:[%s1 + $0xc] sm:$0xf]
  %v21 = vld [vmem:[%s2] sm:$0x1]
  %v23 = vperm.slane %v21, 0
  %v27 = vunpack.c.l.b16 %v15
  %v28 = vunpack.c.l.b16 %v16
  %v29 = vpack.c.b16 %v28, %v27
  %v34 = vunpack.c.l.b16 %v17
  %v35 = vunpack.c.l.b16 %v18
  %v36 = vunpack.c.l.b16 %v19
  %v37 = vunpack.c.l.b16 %v20
  %v38 = vpack.c.b16 %v35, %v34
  %v39 = vpack.c.b16 %v37, %v36
  %vm42 = vcmask 261120
  %v44 = vsel %vm42, %v29, 0
  %46 = vmatpush.bf16.msra.mxu0 0
  %47 = vmatpush.bf16.msra.mxu0 0
  %48 = vmatpush.bf16.msra.mxu0 0
  %49 = vmatpush.bf16.msra.mxu0 0
  %50 = vmatpush.bf16.msra.mxu0 0
  %51 = vmatpush.bf16.msra.mxu0 0
  %52 = vmatpush.bf16.msra.mxu0 %v39
  %53 = vmatpush.bf16.msra.mxu0 %v38
  %54 = vmatmul.bf16.gmra.mxu0 %v44
  %v55 = vpop.f32.mrf.mxu0
  %v56 = vadd.f32 %v23, %v55
  %v57 = vpop.f32.mrf.mxu0
  %v58 = vadd.f32 %v23, %v57
  %59 = vdwg.mxu0
  %v60 = vpack.c.bf16 %v56, %v56
  %v61 = vpack.c.bf16 %v58, %v58
  %vm62 = vcmask 257024
  %63 = vst.msk [vmem:[%s3] sm:$0xf] %vm62, %v60
  %64 = vst.msk [vmem:[%s3 + $0x4] sm:$0xf] %vm62, %v61
  // Predicated region
  $region14: #{bert_adapter_decoder_layer.13} parent=0 // pred_check
    _
  $region15: #{bert_adapter_decoder_layer.13} parent=0 // pred_check_branch
    %66 = sbr.rel (0) target = $region17
  $region16: #{bert_adapter_decoder_layer.13} parent=0 // pred_region
    _
  $region17: #{bert_adapter_decoder_layer.13} parent=0 // pred_fallthru
    _
  // Predicated region
  $region18: #{bert_adapter_decoder_layer.13} parent=0 // pred_check
    _
  $region19: #{bert_adapter_decoder_layer.13} parent=0 // pred_check_branch
    %68 = sbr.rel (0) target = $region21
  $region20: #{bert_adapter_decoder_layer.13} parent=0 // pred_region
    _
  $region21: #{bert_adapter_decoder_layer.13} parent=0 // pred_fallthru
    _

// kernel: bert_adapter_decoder_layer.12
$region0: #{bert_adapter_decoder_layer.12}
  #allocation0 [shape = 'u32[]', space=smem, size = 0x4, offset = 0x4, fixed_abs, tag = 'smem constant byte address 0x4 - core index']
  #allocation1 [shape = 'u32[72,128]{1,0:T(1,128)}', space=vmem, size = 0x9000, scoped, tag = 'internal scratch']
  #allocation2 [shape = 'f32[16,32]{1,0:T(8,128)}', space=vmem, size = 0x2000, scoped, tag = 'scratch operand']
  %s0 = inlined_call_operand.vmem [shape: bf16[16,32], index: 0, kind: input, shape index: {}]
  %s1 = inlined_call_operand.vmem [shape: bf16[32,64], index: 1, kind: input, shape index: {}]
  %s2 = inlined_call_operand.vmem [shape: f32[1,64], index: 2, kind: input, shape index: {}]
  %s3 = inlined_call_operand.vmem [shape: bf16[64,32], index: 3, kind: input, shape index: {}]
  %s4 = inlined_call_operand.vmem [shape: f32[1,32], index: 4, kind: input, shape index: {}]
  %s5 = inlined_call_operand.vmem [shape: f32[1,32], index: 5, kind: input, shape index: {}]
  %s6 = inlined_call_operand.vmem [shape: f32[1,32], index: 6, kind: input, shape index: {}]
  %s7 = inlined_call_operand.vmem [shape: bf16[16,32], index: 7, kind: output, shape index: {}]
  %s8 = sld [smem:[#allocation0]]
  $region46: #{bert_adapter_decoder_layer.12} parent=0
    _
  %s10 = ssub.s32 1, %s8
  %s11 = scalar_select 0, %s10, %s8
  // Predicated region
  $region2: #{bert_adapter_decoder_layer.12} parent=0 // pred_check
    _
  $region3: #{bert_adapter_decoder_layer.12} parent=0 // pred_check_branch
    %13 = sbr.rel (0) target = $region5
  $region4: #{bert_adapter_decoder_layer.12} parent=0 // pred_region
    _
  $region5: #{bert_adapter_decoder_layer.12} parent=0 // pred_fallthru
    _
  // Predicated region
  $region6: #{bert_adapter_decoder_layer.12} parent=0 // pred_check
    _
  $region7: #{bert_adapter_decoder_layer.12} parent=0 // pred_check_branch
    %15 = sbr.rel (0) target = $region9
  $region8: #{bert_adapter_decoder_layer.12} parent=0 // pred_region
    _
  $region9: #{bert_adapter_decoder_layer.12} parent=0 // pred_fallthru
    _
  // Predicated region
  $region10: #{bert_adapter_decoder_layer.12} parent=0 // pred_check
    _
  $region11: #{bert_adapter_decoder_layer.12} parent=0 // pred_check_branch
    %17 = sbr.rel (0) target = $region13
  $region12: #{bert_adapter_decoder_layer.12} parent=0 // pred_region
    _
  $region13: #{bert_adapter_decoder_layer.12} parent=0 // pred_fallthru
    _
  // Predicated region
  $region14: #{bert_adapter_decoder_layer.12} parent=0 // pred_check
    _
  $region15: #{bert_adapter_decoder_layer.12} parent=0 // pred_check_branch
    %19 = sbr.rel (0) target = $region17
  $region16: #{bert_adapter_decoder_layer.12} parent=0 // pred_region
    _
  $region17: #{bert_adapter_decoder_layer.12} parent=0 // pred_fallthru
    _
  // Predicated region
  $region18: #{bert_adapter_decoder_layer.12} parent=0 // pred_check
    _
  $region19: #{bert_adapter_decoder_layer.12} parent=0 // pred_check_branch
    %21 = sbr.rel (0) target = $region21
  $region20: #{bert_adapter_decoder_layer.12} parent=0 // pred_region
    _
  $region21: #{bert_adapter_decoder_layer.12} parent=0 // pred_fallthru
    _
  // Predicated region
  $region22: #{bert_adapter_decoder_layer.12} parent=0 // pred_check
    _
  $region23: #{bert_adapter_decoder_layer.12} parent=0 // pred_check_branch
    %23 = sbr.rel (0) target = $region25
  $region24: #{bert_adapter_decoder_layer.12} parent=0 // pred_region
    _
  $region25: #{bert_adapter_decoder_layer.12} parent=0 // pred_fallthru
    _
  // Predicated region
  $region26: #{bert_adapter_decoder_layer.12} parent=0 // pred_check
    _
  $region27: #{bert_adapter_decoder_layer.12} parent=0 // pred_check_branch
    %25 = sbr.rel (0) target = $region29
  $region28: #{bert_adapter_decoder_layer.12} parent=0 // pred_region
    _
  $region29: #{bert_adapter_decoder_layer.12} parent=0 // pred_fallthru
    _
  %p27 = scmp.eq.s32.totalorder 0, 0
  // Predicated region
  $region30: #{bert_adapter_decoder_layer.12} parent=0 // pred_check
    %p28 = pneg %p27
  $region31: #{bert_adapter_decoder_layer.12} parent=0 // pred_check_branch
    %30 = sbr.rel (%p28) target = $region33
  $region32: #{bert_adapter_decoder_layer.12} parent=0 // pred_region
    %vm31 = vcmask 261120
    %32 = vst.msk [vmem:[#allocation2] sm:$0xff] %vm31, 0.0
    %33 = vst.msk [vmem:[#allocation2 + $0x8] sm:$0xff] %vm31, 0.0
  $region33: #{bert_adapter_decoder_layer.12} parent=0 // pred_fallthru
    _
  %v34 = vld [vmem:[%s0] sm:$0xf]
  %v35 = vld [vmem:[%s0 + $0x4] sm:$0xf]
  %v36 = vld [vmem:[%s1] sm:$0xf]
  %v37 = vld [vmem:[%s1 + $0x4] sm:$0xf]
  %v38 = vld [vmem:[%s1 + $0x8] sm:$0xf]
  %v39 = vld [vmem:[%s1 + $0xc] sm:$0xf]
  %v40 = vld [vmem:[%s2] sm:$0x1]
  %v42 = vperm.slane %v40, 0
  %v46 = vunpack.c.l.b16 %v34
  %v47 = vunpack.c.l.b16 %v35
  %v48 = vpack.c.b16 %v47, %v46
  %v53 = vunpack.c.l.b16 %v36
  %v54 = vunpack.c.l.b16 %v37
  %v55 = vunpack.c.l.b16 %v38
  %v56 = vunpack.c.l.b16 %v39
  %v57 = vpack.c.b16 %v54, %v53
  %v58 = vpack.c.b16 %v56, %v55
  %vm61 = vcmask 261120
  %v63 = vsel %vm61, %v48, 0
  %65 = vmatpush.bf16.msra.mxu0 0
  %66 = vmatpush.bf16.msra.mxu0 0
  %67 = vmatpush.bf16.msra.mxu0 0
  %68 = vmatpush.bf16.msra.mxu0 0
  %69 = vmatpush.bf16.msra.mxu0 0
  %70 = vmatpush.bf16.msra.mxu0 0
  %71 = vmatpush.bf16.msra.mxu0 %v58
  %72 = vmatpush.bf16.msra.mxu0 %v57
  %73 = vmatmul.bf16.gmra.mxu0 %v63
  %v74 = vpop.f32.mrf.mxu0
  %v75 = vadd.f32 %v42, %v74
  %v76 = vpop.f32.mrf.mxu0
  %v77 = vadd.f32 %v42, %v76
  %78 = vdwg.mxu0
  %v79 = vmul.f32 %v75, 0.5
  %v80 = vmul.f32 %v77, 0.5
  %v81 = vmul.f32 %v75, 0.70710677
  %v82 = vmul.f32 %v77, 0.70710677
  %v83 = vmul.f32 %v81, %v81
  %v84 = vmin.f32 16.0, %v83
  %v85 = vmul.f32 %v84, 2.1237322e-06
  %v86 = vadd.f32 %v85, 0.00028619796
  %v87 = vmul.f32 %v84, %v86
  %v88 = vadd.f32 %v87, 0.0036580483
  %v89 = vmul.f32 %v84, %v88
  %v90 = vadd.f32 %v89, 0.05243302
  %v91 = vmul.f32 %v84, %v90
  %v92 = vadd.f32 %v91, 0.18741608
  %v93 = vmul.f32 %v84, %v92
  %v94 = vadd.f32 %v93, 1.1283791
  %v95 = vmul.f32 %v81, %v94
  %v96 = vmul.f32 %v84, 3.8918573e-05
  %v97 = vadd.f32 %v96, 0.001143296
  %v98 = vmul.f32 %v84, %v97
  %v99 = vadd.f32 %v98, 0.014752088
  %v100 = vmul.f32 %v84, %v99
  %v101 = vadd.f32 %v100, 0.112945676
  %v102 = vmul.f32 %v84, %v101
  %v103 = vadd.f32 %v102, 0.4994258
  %v104 = vmul.f32 %v84, %v103
  %v105 = vadd.f32 %v104, 1.0
  %v106 = vrcp.pop %v105
  %v107 = vmul.f32 %v105, %v106
  %v108 = vsub.f32 1.0, %v107
  %v109 = vmul.f32 %v106, %v108
  %v110 = vadd.f32 %v106, %v109
  %vm111 = vweird.f32 %v105
  %vm112 = vweird.f32 %v106
  %vm113 = vmor %vm111, %vm112
  %v114 = vsel %vm113, %v106, %v110
  %v115 = vand.u32 2147483647, %v105
  %vm116 = vcmp.eq.f32.partialorder %v115, 8.507059e+37
  %v117 = vand.u32 %v105, 2147483648
  %v118 = vor.u32 1.1754944e-38, %v117
  %v119 = vsel %vm116, %v118, %v114
  %v120 = vmul.f32 %v95, %v119
  %v121 = vmin.f32 %v120, 1.0
  %v122 = vmax.f32 %v121, -1.0
  %v123 = vmul.f32 %v82, %v82
  %v124 = vmin.f32 16.0, %v123
  %v125 = vmul.f32 %v124, 2.1237322e-06
  %v126 = vadd.f32 %v125, 0.00028619796
  %v127 = vmul.f32 %v124, %v126
  %v128 = vadd.f32 %v127, 0.0036580483
  %v129 = vmul.f32 %v124, %v128
  %v130 = vadd.f32 %v129, 0.05243302
  %v131 = vmul.f32 %v124, %v130
  %v132 = vadd.f32 %v131, 0.18741608
  %v133 = vmul.f32 %v124, %v132
  %v134 = vadd.f32 %v133, 1.1283791
  %v135 = vmul.f32 %v82, %v134
  %v136 = vmul.f32 %v124, 3.8918573e-05
  %v137 = vadd.f32 %v136, 0.001143296
  %v138 = vmul.f32 %v124, %v137
  %v139 = vadd.f32 %v138, 0.014752088
  %v140 = vmul.f32 %v124, %v139
  %v141 = vadd.f32 %v140, 0.112945676
  %v142 = vmul.f32 %v124, %v141
  %v143 = vadd.f32 %v142, 0.4994258
  %v144 = vmul.f32 %v124, %v143
  %v145 = vadd.f32 %v144, 1.0
  %v146 = vrcp.pop %v145
  %v147 = vmul.f32 %v145, %v146
  %v148 = vsub.f32 1.0, %v147
  %v149 = vmul.f32 %v146, %v148
  %v150 = vadd.f32 %v146, %v149
  %vm151 = vweird.f32 %v145
  %vm152 = vweird.f32 %v146
  %vm153 = vmor %vm151, %vm152
  %v154 = vsel %vm153, %v146, %v150
  %v155 = vand.u32 2147483647, %v145
  %vm156 = vcmp.eq.f32.partialorder %v155, 8.507059e+37
  %v157 = vand.u32 %v145, 2147483648
  %v158 = vor.u32 1.1754944e-38, %v157
  %v159 = vsel %vm156, %v158, %v154
  %v160 = vmul.f32 %v135, %v159
  %v161 = vmin.f32 %v160, 1.0
  %v162 = vmax.f32 %v161, -1.0
  %v163 = vadd.f32 %v122, 1.0
  %v164 = vadd.f32 %v162, 1.0
  %v165 = vmul.f32 %v79, %v163
  %v166 = vmul.f32 %v80, %v164
  %v167 = vld [vmem:[#allocation2] sm:$0xff]
  %v168 = vld [vmem:[#allocation2 + $0x8] sm:$0xff]
  %v169 = vpack.c.bf16 %v166, %v165
  %v170 = vld [vmem:[%s3] sm:$0xf]
  %v171 = vld [vmem:[%s3 + $0x4] sm:$0xf]
  %v172 = vld [vmem:[%s3 + $0x8] sm:$0xf]
  %v173 = vld [vmem:[%s3 + $0xc] sm:$0xf]
  %v174 = vld [vmem:[%s3 + $0x10] sm:$0xf]
  %v175 = vld [vmem:[%s3 + $0x14] sm:$0xf]
  %v176 = vld [vmem:[%s3 + $0x18] sm:$0xf]
  %v177 = vld [vmem:[%s3 + $0x1c] sm:$0xf]
  %v186 = vunpack.c.l.b16 %v170
  %v187 = vunpack.c.l.b16 %v171
  %v188 = vunpack.c.l.b16 %v172
  %v189 = vunpack.c.l.b16 %v173
  %v190 = vunpack.c.l.b16 %v174
  %v191 = vunpack.c.l.b16 %v175
  %v192 = vunpack.c.l.b16 %v176
  %v193 = vunpack.c.l.b16 %v177
  %v194 = vpack.c.b16 %v187, %v186
  %v195 = vpack.c.b16 %v189, %v188
  %v196 = vpack.c.b16 %v191, %v190
  %v197 = vpack.c.b16 %v193, %v192
  %vm202 = vcmask 523264
  %v204 = vsel %vm202, %v169, 0
  %206 = vmatpush.bf16.msra.mxu0 0
  %207 = vmatpush.bf16.msra.mxu0 0
  %208 = vmatpush.bf16.msra.mxu0 0
  %209 = vmatpush.bf16.msra.mxu0 0
  %210 = vmatpush.bf16.msra.mxu0 %v197
  %211 = vmatpush.bf16.msra.mxu0 %v196
  %212 = vmatpush.bf16.msra.mxu0 %v195
  %213 = vmatpush.bf16.msra.mxu0 %v194
  %214 = vmatmul.bf16.gmra.mxu0 %v204
  %v215 = vpop.f32.mrf.mxu0
  %v216 = vadd.f32 0.0, %v215
  %v217 = vpop.f32.mrf.mxu0
  %v218 = vadd.f32 0.0, %v217
  %219 = vdwg.mxu0
  %v220 = vadd.f32 %v167, %v216
  %v221 = vadd.f32 %v168, %v218
  %222 = vst.msk [vmem:[#allocation2] sm:$0xff] %vm61, %v220
  %223 = vst.msk [vmem:[#allocation2 + $0x8] sm:$0xff] %vm61, %v221
  // Predicated region
  $region34: #{bert_adapter_decoder_layer.12} parent=0 // pred_check
    %p224 = pneg %p27
  $region35: #{bert_adapter_decoder_layer.12} parent=0 // pred_check_branch
    %226 = sbr.rel (%p224) target = $region37
  $region36: #{bert_adapter_decoder_layer.12} parent=0 // pred_region
    %v227 = vld [vmem:[#allocation2] sm:$0xff]
    %v228 = vld [vmem:[#allocation2 + $0x8] sm:$0xff]
    %v229 = vld [vmem:[%s4] sm:$0x1]
    %v231 = vperm.slane %v229, 0
    %v233 = vadd.f32 %v227, %v231
    %v234 = vadd.f32 %v228, %v231
    %v235 = vld [vmem:[%s0] sm:$0xf]
    %v236 = vld [vmem:[%s0 + $0x4] sm:$0xf]
    %v237 = vunpack.c.l.bf16 %v235
    %v238 = vunpack.c.l.bf16 %v236
    %v239 = vadd.f32 %v233, %v237
    %v240 = vadd.f32 %v234, %v238
    %v241 = vsel %vm61, %v239, 0.0
    %242 = vadd.xlane.f32.xlu0 %v241
    %v243 = vpop.xlane.xlu0 %242
    %v244 = vsel %vm61, %v240, 0.0
    %245 = vadd.xlane.f32.xlu0 %v244
    %v246 = vpop.xlane.xlu0 %245
    %v247 = vrcp.pop 32.0
    %v248 = vmul.f32 32.0, %v247
    %v249 = vsub.f32 1.0, %v248
    %v250 = vmul.f32 %v247, %v249
    %v251 = vadd.f32 %v247, %v250
    %vm252 = vweird.f32 %v247
    %v253 = vsel %vm252, %v247, %v251
    %v254 = vmul.f32 %v243, %v253
    %v255 = vmul.f32 %v246, %v253
    %v256 = vsub.f32 %v239, %v254
    %v257 = vsub.f32 %v240, %v255
    %v258 = vmul.f32 %v256, %v256
    %v259 = vmul.f32 %v257, %v257
    %v260 = vsel %vm61, %v258, 0.0
    %261 = vadd.xlane.f32.xlu0 %v260
    %v262 = vpop.xlane.xlu0 %261
    %v263 = vsel %vm61, %v259, 0.0
    %264 = vadd.xlane.f32.xlu0 %v263
    %v265 = vpop.xlane.xlu0 %264
    %v266 = vmul.f32 %v262, %v253
    %v267 = vmul.f32 %v265, %v253
    %v268 = vadd.f32 %v266, 1e-12
    %v269 = vadd.f32 %v267, 1e-12
    %v270 = vrsqrt.pop %v268
    %v271 = vmul.f32 %v270, %v268
    %v272 = vmul.f32 %v271, %v270
    %v273 = vmul.f32 0.5, %v272
    %v274 = vsub.f32 1.5, %v273
    %v275 = vmul.f32 %v270, %v274
    %vm276 = vweird.f32 %v268
    %vm277 = vweird.f32 %v270
    %vm278 = vmor %vm276, %vm277
    %v279 = vsel %vm278, %v270, %v275
    %v280 = vrsqrt.pop %v269
    %v281 = vmul.f32 %v280, %v269
    %v282 = vmul.f32 %v281, %v280
    %v283 = vmul.f32 0.5, %v282
    %v284 = vsub.f32 1.5, %v283
    %v285 = vmul.f32 %v280, %v284
    %vm286 = vweird.f32 %v269
    %vm287 = vweird.f32 %v280
    %vm288 = vmor %vm286, %vm287
    %v289 = vsel %vm288, %v280, %v285
    %v290 = vmul.f32 %v256, %v279
    %v291 = vmul.f32 %v257, %v289
    %v292 = vld [vmem:[%s5] sm:$0x1]
    %v294 = vperm.slane %v292, 0
    %v296 = vmul.f32 %v290, %v294
    %v297 = vmul.f32 %v291, %v294
    %v298 = vld [vmem:[%s6] sm:$0x1]
    %v300 = vperm.slane %v298, 0
    %v302 = vadd.f32 %v296, %v300
    %v303 = vadd.f32 %v297, %v300
    %v304 = vpack.c.bf16 %v302, %v302
    %v305 = vpack.c.bf16 %v303, %v303
    %vm306 = vcmask 257024
    %307 = vst.msk [vmem:[%s7] sm:$0xf] %vm306, %v304
    %308 = vst.msk [vmem:[%s7 + $0x4] sm:$0xf] %vm306, %v305
  $region37: #{bert_adapter_decoder_layer.12} parent=0 // pred_fallthru
    _
  // Predicated region
  $region38: #{bert_adapter_decoder_layer.12} parent=0 // pred_check
    _
  $region39: #{bert_adapter_decoder_layer.12} parent=0 // pred_check_branch
    %310 = sbr.rel (0) target = $region41
  $region40: #{bert_adapter_decoder_layer.12} parent=0 // pred_region
    _
  $region41: #{bert_adapter_decoder_layer.12} parent=0 // pred_fallthru
    _
  // Predicated region
  $region42: #{bert_adapter_decoder_layer.12} parent=0 // pred_check
    _
  $region43: #{bert_adapter_decoder_layer.12} parent=0 // pred_check_branch
    %312 = sbr.rel (0) target = $region45
  $region44: #{bert_adapter_decoder_layer.12} parent=0 // pred_region
    _
  $region45: #{bert_adapter_decoder_layer.12} parent=0 // pred_fallthru
    _

// kernel: bert_adapter_decoder_layer.14
$region0: #{bert_adapter_decoder_layer.14}
  #allocation0 [shape = 'u32[]', space=smem, size = 0x4, offset = 0x4, fixed_abs, tag = 'smem constant byte address 0x4 - core index']
  #allocation1 [shape = 'u32[72,128]{1,0:T(1,128)}', space=vmem, size = 0x9000, scoped, tag = 'internal scratch']
  %s0 = inlined_call_operand.vmem [shape: f32[16,32], index: 0, kind: input, shape index: {}]
  %s1 = inlined_call_operand.vmem [shape: bf16[32,64], index: 1, kind: input, shape index: {}]
  %s2 = inlined_call_operand.vmem [shape: f32[1,64], index: 2, kind: input, shape index: {}]
  %s3 = inlined_call_operand.vmem [shape: bf16[16,64], index: 3, kind: output, shape index: {}]
  %s4 = sld [smem:[#allocation0]]
  $region22: #{bert_adapter_decoder_layer.14} parent=0
    _
  %s6 = ssub.s32 1, %s4
  %s7 = scalar_select 0, %s6, %s4
  // Predicated region
  $region2: #{bert_adapter_decoder_layer.14} parent=0 // pred_check
    _
  $region3: #{bert_adapter_decoder_layer.14} parent=0 // pred_check_branch
    %9 = sbr.rel (0) target = $region5
  $region4: #{bert_adapter_decoder_layer.14} parent=0 // pred_region
    _
  $region5: #{bert_adapter_decoder_layer.14} parent=0 // pred_fallthru
    _
  // Predicated region
  $region6: #{bert_adapter_decoder_layer.14} parent=0 // pred_check
    _
  $region7: #{bert_adapter_decoder_layer.14} parent=0 // pred_check_branch
    %11 = sbr.rel (0) target = $region9
  $region8: #{bert_adapter_decoder_layer.14} parent=0 // pred_region
    _
  $region9: #{bert_adapter_decoder_layer.14} parent=0 // pred_fallthru
    _
  // Predicated region
  $region10: #{bert_adapter_decoder_layer.14} parent=0 // pred_check
    _
  $region11: #{bert_adapter_decoder_layer.14} parent=0 // pred_check_branch
    %13 = sbr.rel (0) target = $region13
  $region12: #{bert_adapter_decoder_layer.14} parent=0 // pred_region
    _
  $region13: #{bert_adapter_decoder_layer.14} parent=0 // pred_fallthru
    _
  %v15 = vld [vmem:[%s0] sm:$0xff]
  %v16 = vld [vmem:[%s0 + $0x8] sm:$0xff]
  %v17 = vpack.c.bf16 %v16, %v15
  %v18 = vld [vmem:[%s1] sm:$0xf]
  %v19 = vld [vmem:[%s1 + $0x4] sm:$0xf]
  %v20 = vld [vmem:[%s1 + $0x8] sm:$0xf]
  %v21 = vld [vmem:[%s1 + $0xc] sm:$0xf]
  %v22 = vld [vmem:[%s2] sm:$0x1]
  %v24 = vperm.slane %v22, 0
  %v30 = vunpack.c.l.b16 %v18
  %v31 = vunpack.c.l.b16 %v19
  %v32 = vunpack.c.l.b16 %v20
  %v33 = vunpack.c.l.b16 %v21
  %v34 = vpack.c.b16 %v31, %v30
  %v35 = vpack.c.b16 %v33, %v32
  %vm38 = vcmask 261120
  %v40 = vsel %vm38, %v17, 0
  %42 = vmatpush.bf16.msra.mxu0 0
  %43 = vmatpush.bf16.msra.mxu0 0
  %44 = vmatpush.bf16.msra.mxu0 0
  %45 = vmatpush.bf16.msra.mxu0 0
  %46 = vmatpush.bf16.msra.mxu0 0
  %47 = vmatpush.bf16.msra.mxu0 0
  %48 = vmatpush.bf16.msra.mxu0 %v35
  %49 = vmatpush.bf16.msra.mxu0 %v34
  %50 = vmatmul.bf16.gmra.mxu0 %v40
  %v51 = vpop.f32.mrf.mxu0
  %v52 = vadd.f32 %v24, %v51
  %v53 = vpop.f32.mrf.mxu0
  %v54 = vadd.f32 %v24, %v53
  %55 = vdwg.mxu0
  %v56 = vpack.c.bf16 %v52, %v52
  %v57 = vpack.c.bf16 %v54, %v54
  %vm58 = vcmask 519168
  %59 = vst.msk [vmem:[%s3] sm:$0xf] %vm58, %v56
  %60 = vst.msk [vmem:[%s3 + $0x4] sm:$0xf] %vm58, %v57
  // Predicated region
  $region14: #{bert_adapter_decoder_layer.14} parent=0 // pred_check
    _
  $region15: #{bert_adapter_decoder_layer.14} parent=0 // pred_check_branch
    %62 = sbr.rel (0) target = $region17
  $region16: #{bert_adapter_decoder_layer.14} parent=0 // pred_region
    _
  $region17: #{bert_adapter_decoder_layer.14} parent=0 // pred_fallthru
    _
  // Predicated region
  $region18: #{bert_adapter_decoder_layer.14} parent=0 // pred_check
    _
  $region19: #{bert_adapter_decoder_layer.14} parent=0 // pred_check_branch
    %64 = sbr.rel (0) target = $region21
  $region20: #{bert_adapter_decoder_layer.14} parent=0 // pred_region
    _
  $region21: #{bert_adapter_decoder_layer.14} parent=0 // pred_fallthru
    _

// kernel: bert_adapter_decoder_layer.16
$region0: #{bert_adapter_decoder_layer.16}
  #allocation0 [shape = 'u32[]', space=smem, size = 0x4, offset = 0x4, fixed_abs, tag = 'smem constant byte address 0x4 - core index']
  #allocation1 [shape = 'u32[72,128]{1,0:T(1,128)}', space=vmem, size = 0x9000, scoped, tag = 'internal scratch']
  %s0 = inlined_call_operand.vmem [shape: bf16[16,32], index: 0, kind: input, shape index: {}]
  %s1 = inlined_call_operand.vmem [shape: bf16[16,32], index: 1, kind: input, shape index: {}]
  %s2 = inlined_call_operand.vmem [shape: bf16[32,32], index: 2, kind: input, shape index: {}]
  %s3 = inlined_call_operand.vmem [shape: f32[1,32], index: 3, kind: input, shape index: {}]
  %s4 = inlined_call_operand.vmem [shape: f32[1,32], index: 4, kind: input, shape index: {}]
  %s5 = inlined_call_operand.vmem [shape: f32[1,32], index: 5, kind: input, shape index: {}]
  %s6 = inlined_call_operand.vmem [shape: bf16[16,32], index: 6, kind: output, shape index: {}]
  %s7 = sld [smem:[#allocation0]]
  $region34: #{bert_adapter_decoder_layer.16} parent=0
    _
  %s9 = ssub.s32 1, %s7
  %s10 = scalar_select 0, %s9, %s7
  // Predicated region
  $region2: #{bert_adapter_decoder_layer.16} parent=0 // pred_check
    _
  $region3: #{bert_adapter_decoder_layer.16} parent=0 // pred_check_branch
    %12 = sbr.rel (0) target = $region5
  $region4: #{bert_adapter_decoder_layer.16} parent=0 // pred_region
    _
  $region5: #{bert_adapter_decoder_layer.16} parent=0 // pred_fallthru
    _
  // Predicated region
  $region6: #{bert_adapter_decoder_layer.16} parent=0 // pred_check
    _
  $region7: #{bert_adapter_decoder_layer.16} parent=0 // pred_check_branch
    %14 = sbr.rel (0) target = $region9
  $region8: #{bert_adapter_decoder_layer.16} parent=0 // pred_region
    _
  $region9: #{bert_adapter_decoder_layer.16} parent=0 // pred_fallthru
    _
  // Predicated region
  $region10: #{bert_adapter_decoder_layer.16} parent=0 // pred_check
    _
  $region11: #{bert_adapter_decoder_layer.16} parent=0 // pred_check_branch
    %16 = sbr.rel (0) target = $region13
  $region12: #{bert_adapter_decoder_layer.16} parent=0 // pred_region
    _
  $region13: #{bert_adapter_decoder_layer.16} parent=0 // pred_fallthru
    _
  // Predicated region
  $region14: #{bert_adapter_decoder_layer.16} parent=0 // pred_check
    _
  $region15: #{bert_adapter_decoder_layer.16} parent=0 // pred_check_branch
    %18 = sbr.rel (0) target = $region17
  $region16: #{bert_adapter_decoder_layer.16} parent=0 // pred_region
    _
  $region17: #{bert_adapter_decoder_layer.16} parent=0 // pred_fallthru
    _
  // Predicated region
  $region18: #{bert_adapter_decoder_layer.16} parent=0 // pred_check
    _
  $region19: #{bert_adapter_decoder_layer.16} parent=0 // pred_check_branch
    %20 = sbr.rel (0) target = $region21
  $region20: #{bert_adapter_decoder_layer.16} parent=0 // pred_region
    _
  $region21: #{bert_adapter_decoder_layer.16} parent=0 // pred_fallthru
    _
  // Predicated region
  $region22: #{bert_adapter_decoder_layer.16} parent=0 // pred_check
    _
  $region23: #{bert_adapter_decoder_layer.16} parent=0 // pred_check_branch
    %22 = sbr.rel (0) target = $region25
  $region24: #{bert_adapter_decoder_layer.16} parent=0 // pred_region
    _
  $region25: #{bert_adapter_decoder_layer.16} parent=0 // pred_fallthru
    _
  %v24 = vld [vmem:[%s0] sm:$0xf]
  %v25 = vld [vmem:[%s0 + $0x4] sm:$0xf]
  %v26 = vld [vmem:[%s2] sm:$0xf]
  %v27 = vld [vmem:[%s2 + $0x4] sm:$0xf]
  %v28 = vld [vmem:[%s2 + $0x8] sm:$0xf]
  %v29 = vld [vmem:[%s2 + $0xc] sm:$0xf]
  %v30 = vld [vmem:[%s3] sm:$0x1]
  %v32 = vperm.slane %v30, 0
  %v36 = vunpack.c.l.b16 %v24
  %v37 = vunpack.c.l.b16 %v25
  %v38 = vpack.c.b16 %v37, %v36
  %v43 = vunpack.c.l.b16 %v26
  %v44 = vunpack.c.l.b16 %v27
  %v45 = vunpack.c.l.b16 %v28
  %v46 = vunpack.c.l.b16 %v29
  %v47 = vpack.c.b16 %v44, %v43
  %v48 = vpack.c.b16 %v46, %v45
  %vm51 = vcmask 261120
  %v53 = vsel %vm51, %v38, 0
  %55 = vmatpush.bf16.msra.mxu0 0
  %56 = vmatpush.bf16.msra.mxu0 0
  %57 = vmatpush.bf16.msra.mxu0 0
  %58 = vmatpush.bf16.msra.mxu0 0
  %59 = vmatpush.bf16.msra.mxu0 0
  %60 = vmatpush.bf16.msra.mxu0 0
  %61 = vmatpush.bf16.msra.mxu0 %v48
  %62 = vmatpush.bf16.msra.mxu0 %v47
  %63 = vmatmul.bf16.gmra.mxu0 %v53
  %v64 = vpop.f32.mrf.mxu0
  %v65 = vadd.f32 %v32, %v64
  %v66 = vpop.f32.mrf.mxu0
  %v67 = vadd.f32 %v32, %v66
  %68 = vdwg.mxu0
  %v69 = vld [vmem:[%s1] sm:$0xf]
  %v70 = vld [vmem:[%s1 + $0x4] sm:$0xf]
  %v71 = vunpack.c.l.bf16 %v69
  %v72 = vunpack.c.l.bf16 %v70
  %v73 = vadd.f32 %v65, %v71
  %v74 = vadd.f32 %v67, %v72
  %v75 = vsel %vm51, %v73, 0.0
  %76 = vadd.xlane.f32.xlu0 %v75
  %v77 = vpop.xlane.xlu0 %76
  %v78 = vsel %vm51, %v74, 0.0
  %79 = vadd.xlane.f32.xlu0 %v78
  %v80 = vpop.xlane.xlu0 %79
  %v81 = vrcp.pop 32.0
  %v82 = vmul.f32 32.0, %v81
  %v83 = vsub.f32 1.0, %v82
  %v84 = vmul.f32 %v81, %v83
  %v85 = vadd.f32 %v81, %v84
  %vm86 = vweird.f32 %v81
  %v87 = vsel %vm86, %v81, %v85
  %v88 = vmul.f32 %v77, %v87
  %v89 = vmul.f32 %v80, %v87
  %v90 = vsub.f32 %v73, %v88
  %v91 = vsub.f32 %v74, %v89
  %v92 = vmul.f32 %v90, %v90
  %v93 = vmul.f32 %v91, %v91
  %v94 = vsel %vm51, %v92, 0.0
  %95 = vadd.xlane.f32.xlu0 %v94
  %v96 = vpop.xlane.xlu0 %95
  %v97 = vsel %vm51, %v93, 0.0
  %98 = vadd.xlane.f32.xlu0 %v97
  %v99 = vpop.xlane.xlu0 %98
  %v100 = vmul.f32 %v96, %v87
  %v101 = vmul.f32 %v99, %v87
  %v102 = vadd.f32 %v100, 1e-05
  %v103 = vadd.f32 %v101, 1e-05
  %v104 = vrsqrt.pop %v102
  %v105 = vmul.f32 %v104, %v102
  %v106 = vmul.f32 %v105, %v104
  %v107 = vmul.f32 0.5, %v106
  %v108 = vsub.f32 1.5, %v107
  %v109 = vmul.f32 %v104, %v108
  %vm110 = vweird.f32 %v102
  %vm111 = vweird.f32 %v104
  %vm112 = vmor %vm110, %vm111
  %v113 = vsel %vm112, %v104, %v109
  %v114 = vrsqrt.pop %v103
  %v115 = vmul.f32 %v114, %v103
  %v116 = vmul.f32 %v115, %v114
  %v117 = vmul.f32 0.5, %v116
  %v118 = vsub.f32 1.5, %v117
  %v119 = vmul.f32 %v114, %v118
  %vm120 = vweird.f32 %v103
  %vm121 = vweird.f32 %v114
  %vm122 = vmor %vm120, %vm121
  %v123 = vsel %vm122, %v114, %v119
  %v124 = vmul.f32 %v90, %v113
  %v125 = vmul.f32 %v91, %v123
  %v126 = vld [vmem:[%s4] sm:$0x1]
  %v128 = vperm.slane %v126, 0
  %v130 = vmul.f32 %v124, %v128
  %v131 = vmul.f32 %v125, %v128
  %v132 = vld [vmem:[%s5] sm:$0x1]
  %v134 = vperm.slane %v132, 0
  %v136 = vadd.f32 %v130, %v134
  %v137 = vadd.f32 %v131, %v134
  %v138 = vpack.c.bf16 %v136, %v136
  %v139 = vpack.c.bf16 %v137, %v137
  %vm140 = vcmask 257024
  %141 = vst.msk [vmem:[%s6] sm:$0xf] %vm140, %v138
  %142 = vst.msk [vmem:[%s6 + $0x4] sm:$0xf] %vm140, %v139
  // Predicated region
  $region26: #{bert_adapter_decoder_layer.16} parent=0 // pred_check
    _
  $region27: #{bert_adapter_decoder_layer.16} parent=0 // pred_check_branch
    %144 = sbr.rel (0) target = $region29
  $region28: #{bert_adapter_decoder_layer.16} parent=0 // pred_region
    _
  $region29: #{bert_adapter_decoder_layer.16} parent=0 // pred_fallthru
    _
  // Predicated region
  $region30: #{bert_adapter_decoder_layer.16} parent=0 // pred_check
    _
  $region31: #{bert_adapter_decoder_layer.16} parent=0 // pred_check_branch
    %146 = sbr.rel (0) target = $region33
  $region32: #{bert_adapter_decoder_layer.16} parent=0 // pred_region
    _
  $region33: #{bert_adapter_decoder_layer.16} parent=0 // pred_fallthru
    _

// kernel: bert_adapter_decoder_layer.17
$region0: #{bert_adapter_decoder_layer.17}
  #allocation0 [shape = 'u32[]', space=smem, size = 0x4, offset = 0x4, fixed_abs, tag = 'smem constant byte address 0x4 - core index']
  #allocation1 [shape = 'u32[72,128]{1,0:T(1,128)}', space=vmem, size = 0x9000, scoped, tag = 'internal scratch']
  #allocation2 [shape = 'f32[16,32]{1,0:T(8,128)}', space=vmem, size = 0x2000, scoped, tag = 'scratch operand']
  %s0 = inlined_call_operand.vmem [shape: bf16[16,32], index: 0, kind: input, shape index: {}]
  %s1 = inlined_call_operand.vmem [shape: bf16[32,16], index: 1, kind: input, shape index: {}]
  %s2 = inlined_call_operand.vmem [shape: f32[1,16], index: 2, kind: input, shape index: {}]
  %s3 = inlined_call_operand.vmem [shape: bf16[16,32], index: 3, kind: input, shape index: {}]
  %s4 = inlined_call_operand.vmem [shape: f32[1,32], index: 4, kind: input, shape index: {}]
  %s5 = inlined_call_operand.vmem [shape: f32[1,32], index: 5, kind: input, shape index: {}]
  %s6 = inlined_call_operand.vmem [shape: f32[1,32], index: 6, kind: input, shape index: {}]
  %s7 = inlined_call_operand.hbm [shape: f32[16,32], index: 7, kind: output, shape index: {}]
  %s8 = sld [smem:[#allocation0]]
  $region46: #{bert_adapter_decoder_layer.17} parent=0
    _
  %s10 = ssub.s32 1, %s8
  %s11 = scalar_select 0, %s10, %s8
  $region1: #{bert_adapter_decoder_layer.17} parent=0
    #allocation3 [shape = 'u8[8192]{0}', space=vmem, size = 0x2000, scoped, tag = 'output window, operand 0, single buffered']
    #allocation4 [shape = 's32[1]{0}', space=sflag, size = 0x4, scoped, tag = 'scoped memory for bert_adapter_decoder_layer.17']
    %12 = vsyncpa [#allocation4], 0
    // Predicated region
    $region2: #{bert_adapter_decoder_layer.17} parent=1 // pred_check
      _
    $region3: #{bert_adapter_decoder_layer.17} parent=1 // pred_check_branch
      %14 = sbr.rel (0) target = $region5
    $region4: #{bert_adapter_decoder_layer.17} parent=1 // pred_region
      _
    $region5: #{bert_adapter_decoder_layer.17} parent=1 // pred_fallthru
      _
    // Predicated region
    $region6: #{bert_adapter_decoder_layer.17} parent=1 // pred_check
      _
    $region7: #{bert_adapter_decoder_layer.17} parent=1 // pred_check_branch
      %16 = sbr.rel (0) target = $region9
    $region8: #{bert_adapter_decoder_layer.17} parent=1 // pred_region
      _
    $region9: #{bert_adapter_decoder_layer.17} parent=1 // pred_fallthru
      _
    // Predicated region
    $region10: #{bert_adapter_decoder_layer.17} parent=1 // pred_check
      _
    $region11: #{bert_adapter_decoder_layer.17} parent=1 // pred_check_branch
      %18 = sbr.rel (0) target = $region13
    $region12: #{bert_adapter_decoder_layer.17} parent=1 // pred_region
      _
    $region13: #{bert_adapter_decoder_layer.17} parent=1 // pred_fallthru
      _
    // Predicated region
    $region14: #{bert_adapter_decoder_layer.17} parent=1 // pred_check
      _
    $region15: #{bert_adapter_decoder_layer.17} parent=1 // pred_check_branch
      %20 = sbr.rel (0) target = $region17
    $region16: #{bert_adapter_decoder_layer.17} parent=1 // pred_region
      _
    $region17: #{bert_adapter_decoder_layer.17} parent=1 // pred_fallthru
      _
    // Predicated region
    $region18: #{bert_adapter_decoder_layer.17} parent=1 // pred_check
      _
    $region19: #{bert_adapter_decoder_layer.17} parent=1 // pred_check_branch
      %22 = sbr.rel (0) target = $region21
    $region20: #{bert_adapter_decoder_layer.17} parent=1 // pred_region
      _
    $region21: #{bert_adapter_decoder_layer.17} parent=1 // pred_fallthru
      _
    // Predicated region
    $region22: #{bert_adapter_decoder_layer.17} parent=1 // pred_check
      _
    $region23: #{bert_adapter_decoder_layer.17} parent=1 // pred_check_branch
      %24 = sbr.rel (0) target = $region25
    $region24: #{bert_adapter_decoder_layer.17} parent=1 // pred_region
      _
    $region25: #{bert_adapter_decoder_layer.17} parent=1 // pred_fallthru
      _
    // Predicated region
    $region26: #{bert_adapter_decoder_layer.17} parent=1 // pred_check
      _
    $region27: #{bert_adapter_decoder_layer.17} parent=1 // pred_check_branch
      %26 = sbr.rel (0) target = $region29
    $region28: #{bert_adapter_decoder_layer.17} parent=1 // pred_region
      _
    $region29: #{bert_adapter_decoder_layer.17} parent=1 // pred_fallthru
      _
    %p28 = scmp.eq.s32.totalorder 0, 0
    // Predicated region
    $region30: #{bert_adapter_decoder_layer.17} parent=1 // pred_check
      %p29 = pneg %p28
    $region31: #{bert_adapter_decoder_layer.17} parent=1 // pred_check_branch
      %31 = sbr.rel (%p29) target = $region33
    $region32: #{bert_adapter_decoder_layer.17} parent=1 // pred_region
      %vm32 = vcmask 261120
      %33 = vst.msk [vmem:[#allocation2] sm:$0xff] %vm32, 0.0
      %34 = vst.msk [vmem:[#allocation2 + $0x8] sm:$0xff] %vm32, 0.0
    $region33: #{bert_adapter_decoder_layer.17} parent=1 // pred_fallthru
      _
    %v35 = vld [vmem:[%s0] sm:$0xf]
    %v36 = vld [vmem:[%s0 + $0x4] sm:$0xf]
    %v37 = vld [vmem:[%s1] sm:$0xf]
    %v38 = vld [vmem:[%s1 + $0x4] sm:$0xf]
    %v39 = vld [vmem:[%s1 + $0x8] sm:$0xf]
    %v40 = vld [vmem:[%s1 + $0xc] sm:$0xf]
    %v41 = vld [vmem:[%s2] sm:$0x1]
    %v43 = vperm.slane %v41, 0
    %v47 = vunpack.c.l.b16 %v35
    %v48 = vunpack.c.l.b16 %v36
    %v49 = vpack.c.b16 %v48, %v47
    %v54 = vunpack.c.l.b16 %v37
    %v55 = vunpack.c.l.b16 %v38
    %v56 = vunpack.c.l.b16 %v39
    %v57 = vunpack.c.l.b16 %v40
    %v58 = vpack.c.b16 %v55, %v54
    %v59 = vpack.c.b16 %v57, %v56
    %vm62 = vcmask 261120
    %v64 = vsel %vm62, %v49, 0
    %66 = vmatpush.bf16.msra.mxu0 0
    %67 = vmatpush.bf16.msra.mxu0 0
    %68 = vmatpush.bf16.msra.mxu0 0
    %69 = vmatpush.bf16.msra.mxu0 0
    %70 = vmatpush.bf16.msra.mxu0 0
    %71 = vmatpush.bf16.msra.mxu0 0
    %72 = vmatpush.bf16.msra.mxu0 %v59
    %73 = vmatpush.bf16.msra.mxu0 %v58
    %74 = vmatmul.bf16.gmra.mxu0 %v64
    %v75 = vpop.f32.mrf.mxu0
    %v76 = vadd.f32 %v43, %v75
    %v77 = vpop.f32.mrf.mxu0
    %v78 = vadd.f32 %v43, %v77
    %79 = vdwg.mxu0
    %v80 = vmax.f32 %v76, 0.0
    %v81 = vmax.f32 %v78, 0.0
    %v82 = vld [vmem:[#allocation2] sm:$0xff]
    %v83 = vld [vmem:[#allocation2 + $0x8] sm:$0xff]
    %v84 = vpack.c.bf16 %v81, %v80
    %v85 = vld [vmem:[%s3] sm:$0xf]
    %v86 = vld [vmem:[%s3 + $0x4] sm:$0xf]
    %v89 = vunpack.c.l.b16 %v85
    %v90 = vunpack.c.l.b16 %v86
    %v91 = vpack.c.b16 %v90, %v89
    %vm93 = vcmask 130048
    %v95 = vsel %vm93, %v84, 0
    %97 = vmatpush.bf16.msra.mxu0 0
    %98 = vmatpush.bf16.msra.mxu0 0
    %99 = vmatpush.bf16.msra.mxu0 0
    %100 = vmatpush.bf16.msra.mxu0 0
    %101 = vmatpush.bf16.msra.mxu0 0
    %102 = vmatpush.bf16.msra.mxu0 0
    %103 = vmatpush.bf16.msra.mxu0 0
    %104 = vmatpush.bf16.msra.mxu0 %v91
    %105 = vmatmul.bf16.gmra.mxu0 %v95
    %v106 = vpop.f32.mrf.mxu0
    %v107 = vadd.f32 0.0, %v106
    %v108 = vpop.f32.mrf.mxu0
    %v109 = vadd.f32 0.0, %v108
    %110 = vdwg.mxu0
    %v111 = vadd.f32 %v82, %v107
    %v112 = vadd.f32 %v83, %v109
    %113 = vst.msk [vmem:[#allocation2] sm:$0xff] %vm62, %v111
    %114 = vst.msk [vmem:[#allocation2 + $0x8] sm:$0xff] %vm62, %v112
    // Predicated region
    $region34: #{bert_adapter_decoder_layer.17} parent=1 // pred_check
      %p115 = pneg %p28
    $region35: #{bert_adapter_decoder_layer.17} parent=1 // pred_check_branch
      %117 = sbr.rel (%p115) target = $region37
    $region36: #{bert_adapter_decoder_layer.17} parent=1 // pred_region
      %v118 = vld [vmem:[#allocation2] sm:$0xff]
      %v119 = vld [vmem:[#allocation2 + $0x8] sm:$0xff]
      %v120 = vld [vmem:[%s4] sm:$0x1]
      %v122 = vperm.slane %v120, 0
      %v124 = vadd.f32 %v118, %v122
      %v125 = vadd.f32 %v119, %v122
      %v126 = vld [vmem:[%s0] sm:$0xf]
      %v127 = vld [vmem:[%s0 + $0x4] sm:$0xf]
      %v128 = vunpack.c.l.bf16 %v126
      %v129 = vunpack.c.l.bf16 %v127
      %v130 = vadd.f32 %v124, %v128
      %v131 = vadd.f32 %v125, %v129
      %v132 = vsel %vm62, %v130, 0.0
      %133 = vadd.xlane.f32.xlu0 %v132
      %v134 = vpop.xlane.xlu0 %133
      %v135 = vsel %vm62, %v131, 0.0
      %136 = vadd.xlane.f32.xlu0 %v135
      %v137 = vpop.xlane.xlu0 %136
      %v138 = vrcp.pop 32.0
      %v139 = vmul.f32 32.0, %v138
      %v140 = vsub.f32 1.0, %v139
      %v141 = vmul.f32 %v138, %v140
      %v142 = vadd.f32 %v138, %v141
      %vm143 = vweird.f32 %v138
      %v144 = vsel %vm143, %v138, %v142
      %v145 = vmul.f32 %v134, %v144
      %v146 = vmul.f32 %v137, %v144
      %v147 = vsub.f32 %v130, %v145
      %v148 = vsub.f32 %v131, %v146
      %v149 = vmul.f32 %v147, %v147
      %v150 = vmul.f32 %v148, %v148
      %v151 = vsel %vm62, %v149, 0.0
      %152 = vadd.xlane.f32.xlu0 %v151
      %v153 = vpop.xlane.xlu0 %152
      %v154 = vsel %vm62, %v150, 0.0
      %155 = vadd.xlane.f32.xlu0 %v154
      %v156 = vpop.xlane.xlu0 %155
      %v157 = vmul.f32 %v153, %v144
      %v158 = vmul.f32 %v156, %v144
      %v159 = vadd.f32 %v157, 1e-05
      %v160 = vadd.f32 %v158, 1e-05
      %v161 = vrsqrt.pop %v159
      %v162 = vmul.f32 %v161, %v159
      %v163 = vmul.f32 %v162, %v161
      %v164 = vmul.f32 0.5, %v163
      %v165 = vsub.f32 1.5, %v164
      %v166 = vmul.f32 %v161, %v165
      %vm167 = vweird.f32 %v159
      %vm168 = vweird.f32 %v161
      %vm169 = vmor %vm167, %vm168
      %v170 = vsel %vm169, %v161, %v166
      %v171 = vrsqrt.pop %v160
      %v172 = vmul.f32 %v171, %v160
      %v173 = vmul.f32 %v172, %v171
      %v174 = vmul.f32 0.5, %v173
      %v175 = vsub.f32 1.5, %v174
      %v176 = vmul.f32 %v171, %v175
      %vm177 = vweird.f32 %v160
      %vm178 = vweird.f32 %v171
      %vm179 = vmor %vm177, %vm178
      %v180 = vsel %vm179, %v171, %v176
      %v181 = vmul.f32 %v147, %v170
      %v182 = vmul.f32 %v148, %v180
      %v183 = vld [vmem:[%s5] sm:$0x1]
      %v185 = vperm.slane %v183, 0
      %v187 = vmul.f32 %v181, %v185
      %v188 = vmul.f32 %v182, %v185
      %v189 = vld [vmem:[%s6] sm:$0x1]
      %v191 = vperm.slane %v189, 0
      %v193 = vadd.f32 %v187, %v191
      %v194 = vadd.f32 %v188, %v191
      %195 = vst.msk [vmem:[#allocation3] sm:$0xff] %vm62, %v193
      %196 = vst.msk [vmem:[#allocation3 + $0x8] sm:$0xff] %vm62, %v194
    $region37: #{bert_adapter_decoder_layer.17} parent=1 // pred_fallthru
      _
    // Predicated region
    $region38: #{bert_adapter_decoder_layer.17} parent=1 // pred_check
      _
    $region39: #{bert_adapter_decoder_layer.17} parent=1 // pred_check_branch
      %198 = sbr.rel (0) target = $region41
    $region40: #{bert_adapter_decoder_layer.17} parent=1 // pred_region
      %200 = vsyncadd [#allocation4], 0
      %s201 = sshll.u32 [#allocation3], 4
      %s202 = int_to_ptr.vmem [resolvable:$true] %s201
      %s203 = sshll.u32 %s7, 4
      %s204 = int_to_ptr.hbm [resolvable:$true] %s203
      %209 = dma.vmem_to_hbm [thread:$0]  %s202, 256, %s204, [#allocation4], 128, 128, 8
    $region41: #{bert_adapter_decoder_layer.17} parent=1 // pred_fallthru
      _
    // Predicated region
    $region42: #{bert_adapter_decoder_layer.17} parent=1 // pred_check
      _
    $region43: #{bert_adapter_decoder_layer.17} parent=1 // pred_check_branch
      %211 = sbr.rel (0) target = $region45
    $region44: #{bert_adapter_decoder_layer.17} parent=1 // pred_region
      %213 = dma.done [#allocation4], 256
    $region45: #{bert_adapter_decoder_layer.17} parent=1 // pred_fallthru
      _
    %214 = vsyncpa [#allocation4], 1

</llo_original>
